<compile_context>
chip_gen: v5e
topology: v5e:2x2
jax: 0.10.0
libtpu: 0.0.40
codegen_flags: <defaults>
</compile_context>

<pallas_src>
import math

import jax
import jax.numpy as jnp
from jax.experimental import pallas as pl
from jax.experimental.pallas import tpu as pltpu


_PARALLEL = pltpu.CompilerParams(dimension_semantics=("parallel",))


# ----------------------------------------------------------------------------
# Shared in-kernel GroupNorm math (no reshapes: per-group stats via a constant
# group-averaging matrix A, A[i, j] = 1/(Cg*L) iff channels i, j share a group)
# ----------------------------------------------------------------------------

def _group_avg_matrix(C, groups, L):
    Cg = C // groups
    gid = jnp.arange(C) // Cg
    return (gid[:, None] == gid[None, :]).astype(jnp.float32) / float(Cg * L)


def _group_norm(v, A, g, b, eps):
    """GroupNorm in fp32 on a (C, L) tile."""
    mean = jnp.sum(jnp.dot(A, v, preferred_element_type=jnp.float32),
                   axis=-1, keepdims=True)
    ex2 = jnp.sum(jnp.dot(A, v * v, preferred_element_type=jnp.float32),
                  axis=-1, keepdims=True)
    var = jnp.maximum(ex2 - mean * mean, 0.0)
    y = (v - mean) * jax.lax.rsqrt(var + eps)
    return y * g + b


def norm_groups(channels):
    groups = 32
    if channels <= 16:
        groups = 8
    elif channels <= 64:
        groups = 16
    while channels % groups != 0:
        groups = groups // 2
    assert groups > 2
    return groups


# ----------------------------------------------------------------------------
# Standalone Conv1d: single lane-dense matmul, batch folded into lanes
# ----------------------------------------------------------------------------

def pallas_conv1d(x, w, b, stride=1, padding=0):
    """Conv1d: x (B, Cin, L), w (Cout, Cin, K), b (Cout,) -> (B, Cout, Lout)."""
    B, Cin, L = x.shape
    Cout, _, K = w.shape
    xp = jnp.pad(x, ((0, 0), (0, 0), (padding, padding)))
    Lp = L + 2 * padding
    Lout = (Lp - K) // stride + 1

    # TODO(synk): at realistic audio lengths, drop this K-fold im2col and
    # accumulate the taps inside the kernel from the padded input instead.
    cols = [xp[:, :, k:k + (Lout - 1) * stride + 1:stride] for k in range(K)]
    xcol = jnp.stack(cols, axis=2)                              # (B, Cin, K, Lout)
    xcol = jnp.transpose(xcol, (1, 2, 0, 3)).reshape(Cin * K, B * Lout)
    xcol = xcol.astype(jnp.bfloat16)                            # lane = B*Lout
    w2 = w.reshape(Cout, Cin * K).astype(jnp.bfloat16)
    b2 = b.reshape(Cout, 1)

    def kernel(w_ref, x_ref, b_ref, o_ref):
        acc = jnp.dot(w_ref[...], x_ref[...], preferred_element_type=jnp.float32)
        o_ref[...] = (acc + b_ref[...]).astype(o_ref.dtype)

    out = pl.pallas_call(
        kernel,
        out_shape=jax.ShapeDtypeStruct((Cout, B * Lout), x.dtype),
        grid=(1,),
        in_specs=[
            pl.BlockSpec((Cout, Cin * K), lambda i: (0, 0)),
            pl.BlockSpec((Cin * K, B * Lout), lambda i: (0, 0)),
            pl.BlockSpec((Cout, 1), lambda i: (0, 0)),
        ],
        out_specs=pl.BlockSpec((Cout, B * Lout), lambda i: (0, 0)),
        compiler_params=_PARALLEL,
    )(w2, xcol, b2)
    return jnp.transpose(out.reshape(Cout, B, Lout), (1, 0, 2))


# ----------------------------------------------------------------------------
# Standalone GroupNorm32 (+optional fused SiLU), grid over batch only
# ----------------------------------------------------------------------------

def pallas_group_norm(x, gamma, beta, groups, silu=False, eps=1e-5):
    B, C, L = x.shape
    A = _group_avg_matrix(C, groups, L)
    g = gamma.reshape(C, 1)
    be = beta.reshape(C, 1)

    def kernel(x_ref, a_ref, g_ref, b_ref, o_ref):
        xv = x_ref[0].astype(jnp.float32)                       # (C, L)
        y = _group_norm(xv, a_ref[...], g_ref[...], b_ref[...], eps)
        if silu:
            y = y * jax.nn.sigmoid(y)
        o_ref[0] = y.astype(o_ref.dtype)

    return pl.pallas_call(
        kernel,
        out_shape=jax.ShapeDtypeStruct((B, C, L), x.dtype),
        grid=(B,),
        in_specs=[
            pl.BlockSpec((1, C, L), lambda i: (i, 0, 0)),
            pl.BlockSpec((C, C), lambda i: (0, 0)),
            pl.BlockSpec((C, 1), lambda i: (0, 0)),
            pl.BlockSpec((C, 1), lambda i: (0, 0)),
        ],
        out_specs=pl.BlockSpec((1, C, L), lambda i: (i, 0, 0)),
        compiler_params=_PARALLEL,
    )(x, A, g, be)


# ----------------------------------------------------------------------------
# Fused ResBlock: GN+SiLU -> conv -> GN+SiLU -> conv -> residual, one call
# ----------------------------------------------------------------------------

def pallas_res_block(x, p, groups, kernel_size=3, eps=1e-5):
    B, C, L = x.shape
    K = kernel_size
    P = 1 if K == 3 else 2
    Lp = L + 2 * P
    A = _group_avg_matrix(C, groups, L)
    g1 = p['in_norm']['g'].reshape(C, 1)
    be1 = p['in_norm']['b'].reshape(C, 1)
    g2 = p['out_norm']['g'].reshape(C, 1)
    be2 = p['out_norm']['b'].reshape(C, 1)
    w1 = jnp.transpose(p['in_conv']['w'], (2, 0, 1)).astype(jnp.bfloat16)   # (K,C,C)
    bb1 = p['in_conv']['b'].reshape(C, 1)
    w2 = jnp.transpose(p['out_conv']['w'], (2, 0, 1)).astype(jnp.bfloat16)  # (K,C,C)
    bb2 = p['out_conv']['b'].reshape(C, 1)

    def kernel(x_ref, a_ref, g1_ref, be1_ref, w1_ref, bb1_ref,
               g2_ref, be2_ref, w2_ref, bb2_ref, o_ref, pad_ref):
        xv = x_ref[0].astype(jnp.float32)                       # (C, L)

        def gn_silu(v, g_r, b_r):
            y = _group_norm(v, a_ref[...], g_r[...], b_r[...], eps)
            return y * jax.nn.sigmoid(y)

        def conv(v, w_r, b_r):
            # zero-pad along the length (lane) axis via a VMEM scratch buffer,
            # then accumulate the K taps as bf16 (C,C)x(C,L) MXU matmuls.
            pad_ref[...] = jnp.zeros_like(pad_ref)
            pad_ref[:, P:P + L] = v
            acc = jnp.dot(w_r[0], pad_ref[:, 0:L].astype(jnp.bfloat16),
                          preferred_element_type=jnp.float32)
            for k in range(1, K):
                acc = acc + jnp.dot(w_r[k],
                                    pad_ref[:, k:k + L].astype(jnp.bfloat16),
                                    preferred_element_type=jnp.float32)
            return acc + b_r[...]

        h = gn_silu(xv, g1_ref, be1_ref)
        h = conv(h, w1_ref, bb1_ref)
        h = gn_silu(h, g2_ref, be2_ref)
        # Dropout(p=0) is identity -> skipped.
        h = conv(h, w2_ref, bb2_ref)
        o_ref[0] = (xv + h).astype(o_ref.dtype)   # skip_connection == Identity

    return pl.pallas_call(
        kernel,
        out_shape=jax.ShapeDtypeStruct((B, C, L), x.dtype),
        grid=(B,),
        in_specs=[
            pl.BlockSpec((1, C, L), lambda i: (i, 0, 0)),
            pl.BlockSpec((C, C), lambda i: (0, 0)),
            pl.BlockSpec((C, 1), lambda i: (0, 0)),
            pl.BlockSpec((C, 1), lambda i: (0, 0)),
            pl.BlockSpec((K, C, C), lambda i: (0, 0, 0)),
            pl.BlockSpec((C, 1), lambda i: (0, 0)),
            pl.BlockSpec((C, 1), lambda i: (0, 0)),
            pl.BlockSpec((C, 1), lambda i: (0, 0)),
            pl.BlockSpec((K, C, C), lambda i: (0, 0, 0)),
            pl.BlockSpec((C, 1), lambda i: (0, 0)),
        ],
        out_specs=pl.BlockSpec((1, C, L), lambda i: (i, 0, 0)),
        scratch_shapes=[pltpu.VMEM((C, Lp), jnp.float32)],
        compiler_params=_PARALLEL,
    )(x, A, g1, be1, w1, bb1, g2, be2, w2, bb2)


# ----------------------------------------------------------------------------
# Fused AttentionBlock: GN -> 1x1 qkv conv -> attention -> 1x1 proj -> residual
# ----------------------------------------------------------------------------

def pallas_attention_block(x, p, n_heads, eps=1e-5):
    B, C, T = x.shape
    H = n_heads
    ch = C // H
    scale = 1.0 / math.sqrt(math.sqrt(ch))      # legacy double-sqrt scaling
    groups = norm_groups(C)
    A = _group_avg_matrix(C, groups, T)
    g = p['norm']['g'].reshape(C, 1)
    be = p['norm']['b'].reshape(C, 1)
    wqkv = p['qkv']['w'].reshape(3 * C, C).astype(jnp.bfloat16)
    bqkv = p['qkv']['b'].reshape(3 * C, 1)
    wp = p['proj']['w'].reshape(C, C).astype(jnp.bfloat16)
    bp = p['proj']['b'].reshape(C, 1)

    def kernel(x_ref, a_ref, g_ref, be_ref, wqkv_ref, bqkv_ref, wp_ref, bp_ref,
               o_ref, att_ref):
        xv = x_ref[0].astype(jnp.float32)                       # (C, T)
        xn = _group_norm(xv, a_ref[...], g_ref[...], be_ref[...], eps)
        qkv = jnp.dot(wqkv_ref[...], xn.astype(jnp.bfloat16),
                      preferred_element_type=jnp.float32) + bqkv_ref[...]  # (3C,T)
        # per-head attention (qkv channel layout: [q_h, k_h, v_h] per head)
        for h in range(H):
            base = h * 3 * ch
            q = qkv[base:base + ch] * scale
            k = qkv[base + ch:base + 2 * ch] * scale
            v = qkv[base + 2 * ch:base + 3 * ch]
            # weight[t, s] = sum_c q[c, t] * k[c, s]
            wts = jax.lax.dot_general(
                q.astype(jnp.bfloat16), k.astype(jnp.bfloat16),
                (((0,), (0,)), ((), ())),
                preferred_element_type=jnp.float32)             # (T, T)
            wts = jnp.exp(wts - jnp.max(wts, axis=-1, keepdims=True))
            wts = wts * pl.reciprocal(jnp.sum(wts, axis=-1, keepdims=True),
                                      approx=True)
            # a[c, t] = sum_s v[c, s] * weight[t, s]
            a = jax.lax.dot_general(
                v.astype(jnp.bfloat16), wts.astype(jnp.bfloat16),
                (((1,), (1,)), ((), ())),
                preferred_element_type=jnp.float32)             # (ch, T)
            att_ref[h * ch:(h + 1) * ch, :] = a
        hp = jnp.dot(wp_ref[...], att_ref[...].astype(jnp.bfloat16),
                     preferred_element_type=jnp.float32) + bp_ref[...]
        o_ref[0] = (xv + hp).astype(o_ref.dtype)

    return pl.pallas_call(
        kernel,
        out_shape=jax.ShapeDtypeStruct((B, C, T), x.dtype),
        grid=(B,),
        in_specs=[
            pl.BlockSpec((1, C, T), lambda i: (i, 0, 0)),
            pl.BlockSpec((C, C), lambda i: (0, 0)),
            pl.BlockSpec((C, 1), lambda i: (0, 0)),
            pl.BlockSpec((C, 1), lambda i: (0, 0)),
            pl.BlockSpec((3 * C, C), lambda i: (0, 0)),
            pl.BlockSpec((3 * C, 1), lambda i: (0, 0)),
            pl.BlockSpec((C, C), lambda i: (0, 0)),
            pl.BlockSpec((C, 1), lambda i: (0, 0)),
        ],
        out_specs=pl.BlockSpec((1, C, T), lambda i: (i, 0, 0)),
        scratch_shapes=[pltpu.VMEM((C, T), jnp.float32)],
        compiler_params=_PARALLEL,
    )(x, A, g, be, wqkv, bqkv, wp, bp)


# ----------------------------------------------------------------------------
# Module-level forward (glue around the fused kernels)
# ----------------------------------------------------------------------------

def audio_mini_encoder_forward(x, params, cfg):
    h = pallas_conv1d(x, params['init']['w'], params['init']['b'], padding=1)
    ch = cfg['base_channels']
    idx = 0
    for _ in range(cfg['depth']):
        g = norm_groups(ch)
        for _ in range(cfg['resnet_blocks']):
            h = pallas_res_block(h, params['res'][idx], g, cfg['kernel_size'])
            idx += 1
        # Downsample(use_conv=True): Conv1d(ch, 2ch, k=5, stride=factor, pad=2)
        h = pallas_conv1d(h, params['res'][idx]['w'], params['res'][idx]['b'],
                          stride=cfg['downsample_factor'], padding=2)
        idx += 1
        ch *= 2
    h = pallas_group_norm(h, params['final_norm']['g'], params['final_norm']['b'],
                          norm_groups(ch), silu=True)
    h = pallas_conv1d(h, params['final_conv']['w'], params['final_conv']['b'])
    for a in range(cfg['attn_blocks']):
        h = pallas_attention_block(h, params['attn'][a], cfg['num_attn_heads'])
    return h[:, :, 0]


# ----------------------------------------------------------------------------
# Deterministic parameter construction (shapes follow AudioMiniEncoder.__init__)
# ----------------------------------------------------------------------------

def conv_params(key, cout, cin, k, scale=0.05):
    kw, kb = jax.random.split(key)
    return {'w': jax.random.normal(kw, (cout, cin, k), jnp.float32) * scale,
            'b': jax.random.normal(kb, (cout,), jnp.float32) * scale}


def gn_params(c):
    return {'g': jnp.ones((c,), jnp.float32), 'b': jnp.zeros((c,), jnp.float32)}


def build_params(key, cfg):
    keys = iter(jax.random.split(key, 256))
    params = {'init': conv_params(next(keys), cfg['base_channels'], cfg['spec_dim'], 3)}
    ch = cfg['base_channels']
    res = []
    for _ in range(cfg['depth']):
        for _ in range(cfg['resnet_blocks']):
            res.append({
                'in_norm': gn_params(ch),
                'in_conv': conv_params(next(keys), ch, ch, cfg['kernel_size']),
                'out_norm': gn_params(ch),
                # NOTE: torch zero_module()-inits this conv; random here so the
                # compute path is exercised (forward semantics are weight-agnostic).
                'out_conv': conv_params(next(keys), ch, ch, cfg['kernel_size']),
            })
        res.append(conv_params(next(keys), ch * 2, ch, 5))   # Downsample conv
        ch *= 2
    params['res'] = res
    params['final_norm'] = gn_params(ch)
    params['final_conv'] = conv_params(next(keys), cfg['embedding_dim'], ch, 1)
    attn = []
    for _ in range(cfg['attn_blocks']):
        attn.append({
            'norm': gn_params(cfg['embedding_dim']),
            'qkv': conv_params(next(keys), cfg['embedding_dim'] * 3, cfg['embedding_dim'], 1),
            'proj': conv_params(next(keys), cfg['embedding_dim'], cfg['embedding_dim'], 1),
        })
    params['attn'] = attn
    return params


# ----------------------------------------------------------------------------

if __name__ == "__main__":
    cfg = dict(spec_dim=16, embedding_dim=32, base_channels=16, depth=2,
               resnet_blocks=2, attn_blocks=4, num_attn_heads=4,
               downsample_factor=2, kernel_size=3)

    key = jax.random.PRNGKey(0)
    kp, kx = jax.random.split(key)
    params = build_params(kp, cfg)

    # x: (batch=2, spec_dim=16, seq=16), NCL layout (matches torch Conv1d input)
    x = jax.random.normal(kx, (2, cfg['spec_dim'], 16), jnp.float32)

    fwd = jax.jit(lambda xx, pp: audio_mini_encoder_forward(xx, pp, cfg))
    out = fwd(x, params)
    out = jax.block_until_ready(out)

    assert out.shape == (2, cfg['embedding_dim']), out.shape
    assert bool(jnp.all(jnp.isfinite(out)))
    print("KERNEL_OK")
</pallas_src>

<mosaic_0001>
module attributes {stable_mosaic.version = 11 : i64} {
  func.func @kernel(%arg0: i32, %arg1: memref<16x48xbf16, #tpu.memory_space<vmem>>, %arg2: memref<48x32xbf16, #tpu.memory_space<vmem>>, %arg3: memref<16x1xf32, #tpu.memory_space<vmem>>, %arg4: memref<16x32xf32, #tpu.memory_space<vmem>>) attributes {dimension_semantics = [#tpu.dimension_semantics<parallel>], iteration_bounds = array<i64: 1>, scalar_prefetch = 0 : i64, scratch_operands = 0 : i64, tpu.core_type = #tpu.core_type<tc>, window_params = [{pipeline_mode = #tpu.pipeline_mode<synchronous>, transform_indices = @transform_0, window_bounds = array<i64: 16, 48>}, {pipeline_mode = #tpu.pipeline_mode<synchronous>, transform_indices = @transform_1, window_bounds = array<i64: 48, 32>}, {pipeline_mode = #tpu.pipeline_mode<synchronous>, transform_indices = @transform_2, window_bounds = array<i64: 16, 1>}, {pipeline_mode = #tpu.pipeline_mode<synchronous>, transform_indices = @transform_3, window_bounds = array<i64: 16, 32>}]} {
    %c0 = arith.constant 0 : index
    %c0_0 = arith.constant 0 : index
    %0 = vector.load %arg1[%c0, %c0_0] : memref<16x48xbf16, #tpu.memory_space<vmem>>, vector<16x48xbf16>
    %c0_1 = arith.constant 0 : index
    %c0_2 = arith.constant 0 : index
    %1 = vector.load %arg2[%c0_1, %c0_2] : memref<48x32xbf16, #tpu.memory_space<vmem>>, vector<48x32xbf16>
    %cst = arith.constant dense<0.000000e+00> : vector<16x32xf32>
    %2 = tpu.matmul %0, %1, %cst {dimension_numbers = #tpu.dot_dimension_numbers<[1], [0], [0], [1], [0, 0, 1, 1], [], []>} : vector<16x48xbf16>, vector<48x32xbf16>, vector<16x32xf32> -> vector<16x32xf32>
    %c0_3 = arith.constant 0 : index
    %c0_4 = arith.constant 0 : index
    %3 = vector.load %arg3[%c0_3, %c0_4] : memref<16x1xf32, #tpu.memory_space<vmem>>, vector<16x1xf32>
    %4 = vector.broadcast %3 : vector<16x1xf32> to vector<16x32xf32>
    %5 = arith.addf %2, %4 : vector<16x32xf32>
    %c0_5 = arith.constant 0 : index
    %c0_6 = arith.constant 0 : index
    %6 = vector.load %arg4[%c0_5, %c0_6] : memref<16x32xf32, #tpu.memory_space<vmem>>, vector<16x32xf32>
    tpu.vector_store %arg4[%c0_5, %c0_6], %5 {strides = array<i32>} : memref<16x32xf32, #tpu.memory_space<vmem>>, vector<16x32xf32>,
    return
  }
  func.func @transform_0(%arg0: i32) -> (i32, i32) {
    %c0_i32 = arith.constant 0 : i32
    %c0_i32_0 = arith.constant 0 : i32
    %c0_i32_1 = arith.constant 0 : i32
    return %c0_i32, %c0_i32_0 : i32, i32
  }
  func.func @transform_1(%arg0: i32) -> (i32, i32) {
    %c0_i32 = arith.constant 0 : i32
    %c0_i32_0 = arith.constant 0 : i32
    %c0_i32_1 = arith.constant 0 : i32
    return %c0_i32, %c0_i32_0 : i32, i32
  }
  func.func @transform_2(%arg0: i32) -> (i32, i32) {
    %c0_i32 = arith.constant 0 : i32
    %c0_i32_0 = arith.constant 0 : i32
    %c0_i32_1 = arith.constant 0 : i32
    return %c0_i32, %c0_i32_0 : i32, i32
  }
  func.func @transform_3(%arg0: i32) -> (i32, i32) {
    %c0_i32 = arith.constant 0 : i32
    %c0_i32_0 = arith.constant 0 : i32
    %c0_i32_1 = arith.constant 0 : i32
    return %c0_i32, %c0_i32_0 : i32, i32
  }
}

module attributes {stable_mosaic.version = 11 : i64} {
  func.func @kernel(%arg0: i32, %arg1: memref<1x16x16xf32, #tpu.memory_space<vmem>>, %arg2: memref<16x16xf32, #tpu.memory_space<vmem>>, %arg3: memref<16x1xf32, #tpu.memory_space<vmem>>, %arg4: memref<16x1xf32, #tpu.memory_space<vmem>>, %arg5: memref<3x16x16xbf16, #tpu.memory_space<vmem>>, %arg6: memref<16x1xf32, #tpu.memory_space<vmem>>, %arg7: memref<16x1xf32, #tpu.memory_space<vmem>>, %arg8: memref<16x1xf32, #tpu.memory_space<vmem>>, %arg9: memref<3x16x16xbf16, #tpu.memory_space<vmem>>, %arg10: memref<16x1xf32, #tpu.memory_space<vmem>>, %arg11: memref<1x16x16xf32, #tpu.memory_space<vmem>>, %arg12: memref<16x18xf32, #tpu.memory_space<vmem>>) attributes {dimension_semantics = [#tpu.dimension_semantics<parallel>], iteration_bounds = array<i64: 2>, scalar_prefetch = 0 : i64, scratch_operands = 1 : i64, tpu.core_type = #tpu.core_type<tc>, window_params = [{transform_indices = @transform_0, window_bounds = array<i64: 1, 16, 16>}, {pipeline_mode = #tpu.pipeline_mode<synchronous>, transform_indices = @transform_1, window_bounds = array<i64: 16, 16>}, {pipeline_mode = #tpu.pipeline_mode<synchronous>, transform_indices = @transform_2, window_bounds = array<i64: 16, 1>}, {pipeline_mode = #tpu.pipeline_mode<synchronous>, transform_indices = @transform_3, window_bounds = array<i64: 16, 1>}, {pipeline_mode = #tpu.pipeline_mode<synchronous>, transform_indices = @transform_4, window_bounds = array<i64: 3, 16, 16>}, {pipeline_mode = #tpu.pipeline_mode<synchronous>, transform_indices = @transform_5, window_bounds = array<i64: 16, 1>}, {pipeline_mode = #tpu.pipeline_mode<synchronous>, transform_indices = @transform_6, window_bounds = array<i64: 16, 1>}, {pipeline_mode = #tpu.pipeline_mode<synchronous>, transform_indices = @transform_7, window_bounds = array<i64: 16, 1>}, {pipeline_mode = #tpu.pipeline_mode<synchronous>, transform_indices = @transform_8, window_bounds = array<i64: 3, 16, 16>}, {pipeline_mode = #tpu.pipeline_mode<synchronous>, transform_indices = @transform_9, window_bounds = array<i64: 16, 1>}, {transform_indices = @transform_10, window_bounds = array<i64: 1, 16, 16>}]} {
    %c0 = arith.constant 0 : index
    %c0_0 = arith.constant 0 : index
    %c0_1 = arith.constant 0 : index
    %0 = vector.load %arg1[%c0, %c0_0, %c0_1] : memref<1x16x16xf32, #tpu.memory_space<vmem>>, vector<1x16x16xf32>
    %1 = vector.shape_cast %0 : vector<1x16x16xf32> to vector<16x16xf32>
    %c0_2 = arith.constant 0 : index
    %c0_3 = arith.constant 0 : index
    %2 = vector.load %arg2[%c0_2, %c0_3] : memref<16x16xf32, #tpu.memory_space<vmem>>, vector<16x16xf32>
    %c0_4 = arith.constant 0 : index
    %c0_5 = arith.constant 0 : index
    %3 = vector.load %arg3[%c0_4, %c0_5] : memref<16x1xf32, #tpu.memory_space<vmem>>, vector<16x1xf32>
    %c0_6 = arith.constant 0 : index
    %c0_7 = arith.constant 0 : index
    %4 = vector.load %arg4[%c0_6, %c0_7] : memref<16x1xf32, #tpu.memory_space<vmem>>, vector<16x1xf32>
    %cst = arith.constant dense<0.000000e+00> : vector<16x16xf32>
    %5 = tpu.matmul %2, %1, %cst {dimension_numbers = #tpu.dot_dimension_numbers<[1], [0], [0], [1], [0, 0, 1, 1], [], []>} : vector<16x16xf32>, vector<16x16xf32>, vector<16x16xf32> -> vector<16x16xf32>
    %cst_8 = arith.constant dense<0.000000e+00> : vector<16xf32>
    %6 = vector.multi_reduction <add>, %5, %cst_8 [1] : vector<16x16xf32> to vector<16xf32>
    %7 = vector.shape_cast %6 : vector<16xf32> to vector<16x1xf32>
    %8 = arith.mulf %1, %1 : vector<16x16xf32>
    %cst_9 = arith.constant dense<0.000000e+00> : vector<16x16xf32>
    %9 = tpu.matmul %2, %8, %cst_9 {dimension_numbers = #tpu.dot_dimension_numbers<[1], [0], [0], [1], [0, 0, 1, 1], [], []>} : vector<16x16xf32>, vector<16x16xf32>, vector<16x16xf32> -> vector<16x16xf32>
    %cst_10 = arith.constant dense<0.000000e+00> : vector<16xf32>
    %10 = vector.multi_reduction <add>, %9, %cst_10 [1] : vector<16x16xf32> to vector<16xf32>
    %11 = vector.shape_cast %10 : vector<16xf32> to vector<16x1xf32>
    %12 = arith.mulf %7, %7 : vector<16x1xf32>
    %13 = arith.subf %11, %12 : vector<16x1xf32>
    %cst_11 = arith.constant 0.000000e+00 : f32
    %14 = vector.broadcast %cst_11 : f32 to vector<16x1xf32>
    %15 = arith.maximumf %13, %14 : vector<16x1xf32>
    %16 = vector.broadcast %7 : vector<16x1xf32> to vector<16x16xf32>
    %17 = arith.subf %1, %16 : vector<16x16xf32>
    %cst_12 = arith.constant 9.99999974E-6 : f32
    %18 = vector.broadcast %cst_12 : f32 to vector<16x1xf32>
    %19 = arith.addf %15, %18 : vector<16x1xf32>
    %20 = math.rsqrt %19 : vector<16x1xf32>
    %21 = vector.broadcast %20 : vector<16x1xf32> to vector<16x16xf32>
    %22 = arith.mulf %17, %21 : vector<16x16xf32>
    %23 = vector.broadcast %3 : vector<16x1xf32> to vector<16x16xf32>
    %24 = arith.mulf %22, %23 : vector<16x16xf32>
    %25 = vector.broadcast %4 : vector<16x1xf32> to vector<16x16xf32>
    %26 = arith.addf %24, %25 : vector<16x16xf32>
    %27 = arith.negf %26 : vector<16x16xf32>
    %28 = math.exp %27 : vector<16x16xf32>
    %cst_13 = arith.constant 1.000000e+00 : f32
    %29 = vector.broadcast %cst_13 : f32 to vector<16x16xf32>
    %30 = arith.addf %29, %28 : vector<16x16xf32>
    %31 = arith.divf %29, %30 : vector<16x16xf32>
    %32 = arith.mulf %26, %31 : vector<16x16xf32>
    %cst_14 = arith.constant 0.000000e+00 : f32
    %33 = vector.broadcast %cst_14 : f32 to vector<16x18xf32>
    %c0_15 = arith.constant 0 : index
    %c0_16 = arith.constant 0 : index
    %34 = vector.load %arg12[%c0_15, %c0_16] : memref<16x18xf32, #tpu.memory_space<vmem>>, vector<16x18xf32>
    tpu.vector_store %arg12[%c0_15, %c0_16], %33 {strides = array<i32>} : memref<16x18xf32, #tpu.memory_space<vmem>>, vector<16x18xf32>,
    %c0_17 = arith.constant 0 : index
    %c1 = arith.constant 1 : index
    %35 = vector.load %arg12[%c0_17, %c1] : memref<16x18xf32, #tpu.memory_space<vmem>>, vector<16x16xf32>
    tpu.vector_store %arg12[%c0_17, %c1], %32 {strides = array<i32>} : memref<16x18xf32, #tpu.memory_space<vmem>>, vector<16x16xf32>,
    %c0_18 = arith.constant 0 : index
    %c0_19 = arith.constant 0 : index
    %c0_20 = arith.constant 0 : index
    %36 = vector.load %arg5[%c0_18, %c0_19, %c0_20] : memref<3x16x16xbf16, #tpu.memory_space<vmem>>, vector<1x16x16xbf16>
    %37 = vector.shape_cast %36 : vector<1x16x16xbf16> to vector<16x16xbf16>
    %c0_21 = arith.constant 0 : index
    %c0_22 = arith.constant 0 : index
    %38 = vector.load %arg12[%c0_21, %c0_22] : memref<16x18xf32, #tpu.memory_space<vmem>>, vector<16x16xf32>
    %39 = arith.truncf %38 : vector<16x16xf32> to vector<16x16xbf16>
    %cst_23 = arith.constant dense<0.000000e+00> : vector<16x16xf32>
    %40 = tpu.matmul %37, %39, %cst_23 {dimension_numbers = #tpu.dot_dimension_numbers<[1], [0], [0], [1], [0, 0, 1, 1], [], []>} : vector<16x16xbf16>, vector<16x16xbf16>, vector<16x16xf32> -> vector<16x16xf32>
    %c1_24 = arith.constant 1 : index
    %c0_25 = arith.constant 0 : index
    %c0_26 = arith.constant 0 : index
    %41 = vector.load %arg5[%c1_24, %c0_25, %c0_26] : memref<3x16x16xbf16, #tpu.memory_space<vmem>>, vector<1x16x16xbf16>
    %42 = vector.shape_cast %41 : vector<1x16x16xbf16> to vector<16x16xbf16>
    %c0_27 = arith.constant 0 : index
    %c1_28 = arith.constant 1 : index
    %43 = vector.load %arg12[%c0_27, %c1_28] : memref<16x18xf32, #tpu.memory_space<vmem>>, vector<16x16xf32>
    %44 = arith.truncf %43 : vector<16x16xf32> to vector<16x16xbf16>
    %cst_29 = arith.constant dense<0.000000e+00> : vector<16x16xf32>
    %45 = tpu.matmul %42, %44, %cst_29 {dimension_numbers = #tpu.dot_dimension_numbers<[1], [0], [0], [1], [0, 0, 1, 1], [], []>} : vector<16x16xbf16>, vector<16x16xbf16>, vector<16x16xf32> -> vector<16x16xf32>
    %46 = arith.addf %40, %45 : vector<16x16xf32>
    %c2 = arith.constant 2 : index
    %c0_30 = arith.constant 0 : index
    %c0_31 = arith.constant 0 : index
    %47 = vector.load %arg5[%c2, %c0_30, %c0_31] : memref<3x16x16xbf16, #tpu.memory_space<vmem>>, vector<1x16x16xbf16>
    %48 = vector.shape_cast %47 : vector<1x16x16xbf16> to vector<16x16xbf16>
    %c0_32 = arith.constant 0 : index
    %c2_33 = arith.constant 2 : index
    %49 = vector.load %arg12[%c0_32, %c2_33] : memref<16x18xf32, #tpu.memory_space<vmem>>, vector<16x16xf32>
    %50 = arith.truncf %49 : vector<16x16xf32> to vector<16x16xbf16>
    %cst_34 = arith.constant dense<0.000000e+00> : vector<16x16xf32>
    %51 = tpu.matmul %48, %50, %cst_34 {dimension_numbers = #tpu.dot_dimension_numbers<[1], [0], [0], [1], [0, 0, 1, 1], [], []>} : vector<16x16xbf16>, vector<16x16xbf16>, vector<16x16xf32> -> vector<16x16xf32>
    %52 = arith.addf %46, %51 : vector<16x16xf32>
    %c0_35 = arith.constant 0 : index
    %c0_36 = arith.constant 0 : index
    %53 = vector.load %arg6[%c0_35, %c0_36] : memref<16x1xf32, #tpu.memory_space<vmem>>, vector<16x1xf32>
    %54 = vector.broadcast %53 : vector<16x1xf32> to vector<16x16xf32>
    %55 = arith.addf %52, %54 : vector<16x16xf32>
    %c0_37 = arith.constant 0 : index
    %c0_38 = arith.constant 0 : index
    %56 = vector.load %arg2[%c0_37, %c0_38] : memref<16x16xf32, #tpu.memory_space<vmem>>, vector<16x16xf32>
    %c0_39 = arith.constant 0 : index
    %c0_40 = arith.constant 0 : index
    %57 = vector.load %arg7[%c0_39, %c0_40] : memref<16x1xf32, #tpu.memory_space<vmem>>, vector<16x1xf32>
    %c0_41 = arith.constant 0 : index
    %c0_42 = arith.constant 0 : index
    %58 = vector.load %arg8[%c0_41, %c0_42] : memref<16x1xf32, #tpu.memory_space<vmem>>, vector<16x1xf32>
    %cst_43 = arith.constant dense<0.000000e+00> : vector<16x16xf32>
    %59 = tpu.matmul %56, %55, %cst_43 {dimension_numbers = #tpu.dot_dimension_numbers<[1], [0], [0], [1], [0, 0, 1, 1], [], []>} : vector<16x16xf32>, vector<16x16xf32>, vector<16x16xf32> -> vector<16x16xf32>
    %cst_44 = arith.constant dense<0.000000e+00> : vector<16xf32>
    %60 = vector.multi_reduction <add>, %59, %cst_44 [1] : vector<16x16xf32> to vector<16xf32>
    %61 = vector.shape_cast %60 : vector<16xf32> to vector<16x1xf32>
    %62 = arith.mulf %55, %55 : vector<16x16xf32>
    %cst_45 = arith.constant dense<0.000000e+00> : vector<16x16xf32>
    %63 = tpu.matmul %56, %62, %cst_45 {dimension_numbers = #tpu.dot_dimension_numbers<[1], [0], [0], [1], [0, 0, 1, 1], [], []>} : vector<16x16xf32>, vector<16x16xf32>, vector<16x16xf32> -> vector<16x16xf32>
    %cst_46 = arith.constant dense<0.000000e+00> : vector<16xf32>
    %64 = vector.multi_reduction <add>, %63, %cst_46 [1] : vector<16x16xf32> to vector<16xf32>
    %65 = vector.shape_cast %64 : vector<16xf32> to vector<16x1xf32>
    %66 = arith.mulf %61, %61 : vector<16x1xf32>
    %67 = arith.subf %65, %66 : vector<16x1xf32>
    %cst_47 = arith.constant 0.000000e+00 : f32
    %68 = vector.broadcast %cst_47 : f32 to vector<16x1xf32>
    %69 = arith.maximumf %67, %68 : vector<16x1xf32>
    %70 = vector.broadcast %61 : vector<16x1xf32> to vector<16x16xf32>
    %71 = arith.subf %55, %70 : vector<16x16xf32>
    %cst_48 = arith.constant 9.99999974E-6 : f32
    %72 = vector.broadcast %cst_48 : f32 to vector<16x1xf32>
    %73 = arith.addf %69, %72 : vector<16x1xf32>
    %74 = math.rsqrt %73 : vector<16x1xf32>
    %75 = vector.broadcast %74 : vector<16x1xf32> to vector<16x16xf32>
    %76 = arith.mulf %71, %75 : vector<16x16xf32>
    %77 = vector.broadcast %57 : vector<16x1xf32> to vector<16x16xf32>
    %78 = arith.mulf %76, %77 : vector<16x16xf32>
    %79 = vector.broadcast %58 : vector<16x1xf32> to vector<16x16xf32>
    %80 = arith.addf %78, %79 : vector<16x16xf32>
    %81 = arith.negf %80 : vector<16x16xf32>
    %82 = math.exp %81 : vector<16x16xf32>
    %cst_49 = arith.constant 1.000000e+00 : f32
    %83 = vector.broadcast %cst_49 : f32 to vector<16x16xf32>
    %84 = arith.addf %83, %82 : vector<16x16xf32>
    %85 = arith.divf %83, %84 : vector<16x16xf32>
    %86 = arith.mulf %80, %85 : vector<16x16xf32>
    %cst_50 = arith.constant 0.000000e+00 : f32
    %87 = vector.broadcast %cst_50 : f32 to vector<16x18xf32>
    %c0_51 = arith.constant 0 : index
    %c0_52 = arith.constant 0 : index
    %88 = vector.load %arg12[%c0_51, %c0_52] : memref<16x18xf32, #tpu.memory_space<vmem>>, vector<16x18xf32>
    tpu.vector_store %arg12[%c0_51, %c0_52], %87 {strides = array<i32>} : memref<16x18xf32, #tpu.memory_space<vmem>>, vector<16x18xf32>,
    %c0_53 = arith.constant 0 : index
    %c1_54 = arith.constant 1 : index
    %89 = vector.load %arg12[%c0_53, %c1_54] : memref<16x18xf32, #tpu.memory_space<vmem>>, vector<16x16xf32>
    tpu.vector_store %arg12[%c0_53, %c1_54], %86 {strides = array<i32>} : memref<16x18xf32, #tpu.memory_space<vmem>>, vector<16x16xf32>,
    %c0_55 = arith.constant 0 : index
    %c0_56 = arith.constant 0 : index
    %c0_57 = arith.constant 0 : index
    %90 = vector.load %arg9[%c0_55, %c0_56, %c0_57] : memref<3x16x16xbf16, #tpu.memory_space<vmem>>, vector<1x16x16xbf16>
    %91 = vector.shape_cast %90 : vector<1x16x16xbf16> to vector<16x16xbf16>
    %c0_58 = arith.constant 0 : index
    %c0_59 = arith.constant 0 : index
    %92 = vector.load %arg12[%c0_58, %c0_59] : memref<16x18xf32, #tpu.memory_space<vmem>>, vector<16x16xf32>
    %93 = arith.truncf %92 : vector<16x16xf32> to vector<16x16xbf16>
    %cst_60 = arith.constant dense<0.000000e+00> : vector<16x16xf32>
    %94 = tpu.matmul %91, %93, %cst_60 {dimension_numbers = #tpu.dot_dimension_numbers<[1], [0], [0], [1], [0, 0, 1, 1], [], []>} : vector<16x16xbf16>, vector<16x16xbf16>, vector<16x16xf32> -> vector<16x16xf32>
    %c1_61 = arith.constant 1 : index
    %c0_62 = arith.constant 0 : index
    %c0_63 = arith.constant 0 : index
    %95 = vector.load %arg9[%c1_61, %c0_62, %c0_63] : memref<3x16x16xbf16, #tpu.memory_space<vmem>>, vector<1x16x16xbf16>
    %96 = vector.shape_cast %95 : vector<1x16x16xbf16> to vector<16x16xbf16>
    %c0_64 = arith.constant 0 : index
    %c1_65 = arith.constant 1 : index
    %97 = vector.load %arg12[%c0_64, %c1_65] : memref<16x18xf32, #tpu.memory_space<vmem>>, vector<16x16xf32>
    %98 = arith.truncf %97 : vector<16x16xf32> to vector<16x16xbf16>
    %cst_66 = arith.constant dense<0.000000e+00> : vector<16x16xf32>
    %99 = tpu.matmul %96, %98, %cst_66 {dimension_numbers = #tpu.dot_dimension_numbers<[1], [0], [0], [1], [0, 0, 1, 1], [], []>} : vector<16x16xbf16>, vector<16x16xbf16>, vector<16x16xf32> -> vector<16x16xf32>
    %100 = arith.addf %94, %99 : vector<16x16xf32>
    %c2_67 = arith.constant 2 : index
    %c0_68 = arith.constant 0 : index
    %c0_69 = arith.constant 0 : index
    %101 = vector.load %arg9[%c2_67, %c0_68, %c0_69] : memref<3x16x16xbf16, #tpu.memory_space<vmem>>, vector<1x16x16xbf16>
    %102 = vector.shape_cast %101 : vector<1x16x16xbf16> to vector<16x16xbf16>
    %c0_70 = arith.constant 0 : index
    %c2_71 = arith.constant 2 : index
    %103 = vector.load %arg12[%c0_70, %c2_71] : memref<16x18xf32, #tpu.memory_space<vmem>>, vector<16x16xf32>
    %104 = arith.truncf %103 : vector<16x16xf32> to vector<16x16xbf16>
    %cst_72 = arith.constant dense<0.000000e+00> : vector<16x16xf32>
    %105 = tpu.matmul %102, %104, %cst_72 {dimension_numbers = #tpu.dot_dimension_numbers<[1], [0], [0], [1], [0, 0, 1, 1], [], []>} : vector<16x16xbf16>, vector<16x16xbf16>, vector<16x16xf32> -> vector<16x16xf32>
    %106 = arith.addf %100, %105 : vector<16x16xf32>
    %c0_73 = arith.constant 0 : index
    %c0_74 = arith.constant 0 : index
    %107 = vector.load %arg10[%c0_73, %c0_74] : memref<16x1xf32, #tpu.memory_space<vmem>>, vector<16x1xf32>
    %108 = vector.broadcast %107 : vector<16x1xf32> to vector<16x16xf32>
    %109 = arith.addf %106, %108 : vector<16x16xf32>
    %110 = arith.addf %1, %109 : vector<16x16xf32>
    %c0_75 = arith.constant 0 : index
    %c0_76 = arith.constant 0 : index
    %c0_77 = arith.constant 0 : index
    %111 = vector.load %arg11[%c0_75, %c0_76, %c0_77] : memref<1x16x16xf32, #tpu.memory_space<vmem>>, vector<1x16x16xf32>
    %112 = vector.shape_cast %111 : vector<1x16x16xf32> to vector<16x16xf32>
    %113 = vector.shape_cast %110 : vector<16x16xf32> to vector<1x16x16xf32>
    tpu.vector_store %arg11[%c0_75, %c0_76, %c0_77], %113 {strides = array<i32>} : memref<1x16x16xf32, #tpu.memory_space<vmem>>, vector<1x16x16xf32>,
    return
  }
  func.func @transform_0(%arg0: i32) -> (i32, i32, i32) {
    %c0_i32 = arith.constant 0 : i32
    %c0_i32_0 = arith.constant 0 : i32
    %c0_i32_1 = arith.constant 0 : i32
    return %arg0, %c0_i32, %c0_i32_0 : i32, i32, i32
  }
  func.func @transform_1(%arg0: i32) -> (i32, i32) {
    %c0_i32 = arith.constant 0 : i32
    %c0_i32_0 = arith.constant 0 : i32
    %c0_i32_1 = arith.constant 0 : i32
    return %c0_i32, %c0_i32_0 : i32, i32
  }
  func.func @transform_2(%arg0: i32) -> (i32, i32) {
    %c0_i32 = arith.constant 0 : i32
    %c0_i32_0 = arith.constant 0 : i32
    %c0_i32_1 = arith.constant 0 : i32
    return %c0_i32, %c0_i32_0 : i32, i32
  }
  func.func @transform_3(%arg0: i32) -> (i32, i32) {
    %c0_i32 = arith.constant 0 : i32
    %c0_i32_0 = arith.constant 0 : i32
    %c0_i32_1 = arith.constant 0 : i32
    return %c0_i32, %c0_i32_0 : i32, i32
  }
  func.func @transform_4(%arg0: i32) -> (i32, i32, i32) {
    %c0_i32 = arith.constant 0 : i32
    %c0_i32_0 = arith.constant 0 : i32
    %c0_i32_1 = arith.constant 0 : i32
    %c0_i32_2 = arith.constant 0 : i32
    return %c0_i32, %c0_i32_0, %c0_i32_1 : i32, i32, i32
  }
  func.func @transform_5(%arg0: i32) -> (i32, i32) {
    %c0_i32 = arith.constant 0 : i32
    %c0_i32_0 = arith.constant 0 : i32
    %c0_i32_1 = arith.constant 0 : i32
    return %c0_i32, %c0_i32_0 : i32, i32
  }
  func.func @transform_6(%arg0: i32) -> (i32, i32) {
    %c0_i32 = arith.constant 0 : i32
    %c0_i32_0 = arith.constant 0 : i32
    %c0_i32_1 = arith.constant 0 : i32
    return %c0_i32, %c0_i32_0 : i32, i32
  }
  func.func @transform_7(%arg0: i32) -> (i32, i32) {
    %c0_i32 = arith.constant 0 : i32
    %c0_i32_0 = arith.constant 0 : i32
    %c0_i32_1 = arith.constant 0 : i32
    return %c0_i32, %c0_i32_0 : i32, i32
  }
  func.func @transform_8(%arg0: i32) -> (i32, i32, i32) {
    %c0_i32 = arith.constant 0 : i32
    %c0_i32_0 = arith.constant 0 : i32
    %c0_i32_1 = arith.constant 0 : i32
    %c0_i32_2 = arith.constant 0 : i32
    return %c0_i32, %c0_i32_0, %c0_i32_1 : i32, i32, i32
  }
  func.func @transform_9(%arg0: i32) -> (i32, i32) {
    %c0_i32 = arith.constant 0 : i32
    %c0_i32_0 = arith.constant 0 : i32
    %c0_i32_1 = arith.constant 0 : i32
    return %c0_i32, %c0_i32_0 : i32, i32
  }
  func.func @transform_10(%arg0: i32) -> (i32, i32, i32) {
    %c0_i32 = arith.constant 0 : i32
    %c0_i32_0 = arith.constant 0 : i32
    %c0_i32_1 = arith.constant 0 : i32
    return %arg0, %c0_i32, %c0_i32_0 : i32, i32, i32
  }
}

module attributes {stable_mosaic.version = 11 : i64} {
  func.func @kernel(%arg0: i32, %arg1: memref<32x80xbf16, #tpu.memory_space<vmem>>, %arg2: memref<80x16xbf16, #tpu.memory_space<vmem>>, %arg3: memref<32x1xf32, #tpu.memory_space<vmem>>, %arg4: memref<32x16xf32, #tpu.memory_space<vmem>>) attributes {dimension_semantics = [#tpu.dimension_semantics<parallel>], iteration_bounds = array<i64: 1>, scalar_prefetch = 0 : i64, scratch_operands = 0 : i64, tpu.core_type = #tpu.core_type<tc>, window_params = [{pipeline_mode = #tpu.pipeline_mode<synchronous>, transform_indices = @transform_0, window_bounds = array<i64: 32, 80>}, {pipeline_mode = #tpu.pipeline_mode<synchronous>, transform_indices = @transform_1, window_bounds = array<i64: 80, 16>}, {pipeline_mode = #tpu.pipeline_mode<synchronous>, transform_indices = @transform_2, window_bounds = array<i64: 32, 1>}, {pipeline_mode = #tpu.pipeline_mode<synchronous>, transform_indices = @transform_3, window_bounds = array<i64: 32, 16>}]} {
    %c0 = arith.constant 0 : index
    %c0_0 = arith.constant 0 : index
    %0 = vector.load %arg1[%c0, %c0_0] : memref<32x80xbf16, #tpu.memory_space<vmem>>, vector<32x80xbf16>
    %c0_1 = arith.constant 0 : index
    %c0_2 = arith.constant 0 : index
    %1 = vector.load %arg2[%c0_1, %c0_2] : memref<80x16xbf16, #tpu.memory_space<vmem>>, vector<80x16xbf16>
    %cst = arith.constant dense<0.000000e+00> : vector<32x16xf32>
    %2 = tpu.matmul %0, %1, %cst {dimension_numbers = #tpu.dot_dimension_numbers<[1], [0], [0], [1], [0, 0, 1, 1], [], []>} : vector<32x80xbf16>, vector<80x16xbf16>, vector<32x16xf32> -> vector<32x16xf32>
    %c0_3 = arith.constant 0 : index
    %c0_4 = arith.constant 0 : index
    %3 = vector.load %arg3[%c0_3, %c0_4] : memref<32x1xf32, #tpu.memory_space<vmem>>, vector<32x1xf32>
    %4 = vector.broadcast %3 : vector<32x1xf32> to vector<32x16xf32>
    %5 = arith.addf %2, %4 : vector<32x16xf32>
    %c0_5 = arith.constant 0 : index
    %c0_6 = arith.constant 0 : index
    %6 = vector.load %arg4[%c0_5, %c0_6] : memref<32x16xf32, #tpu.memory_space<vmem>>, vector<32x16xf32>
    tpu.vector_store %arg4[%c0_5, %c0_6], %5 {strides = array<i32>} : memref<32x16xf32, #tpu.memory_space<vmem>>, vector<32x16xf32>,
    return
  }
  func.func @transform_0(%arg0: i32) -> (i32, i32) {
    %c0_i32 = arith.constant 0 : i32
    %c0_i32_0 = arith.constant 0 : i32
    %c0_i32_1 = arith.constant 0 : i32
    return %c0_i32, %c0_i32_0 : i32, i32
  }
  func.func @transform_1(%arg0: i32) -> (i32, i32) {
    %c0_i32 = arith.constant 0 : i32
    %c0_i32_0 = arith.constant 0 : i32
    %c0_i32_1 = arith.constant 0 : i32
    return %c0_i32, %c0_i32_0 : i32, i32
  }
  func.func @transform_2(%arg0: i32) -> (i32, i32) {
    %c0_i32 = arith.constant 0 : i32
    %c0_i32_0 = arith.constant 0 : i32
    %c0_i32_1 = arith.constant 0 : i32
    return %c0_i32, %c0_i32_0 : i32, i32
  }
  func.func @transform_3(%arg0: i32) -> (i32, i32) {
    %c0_i32 = arith.constant 0 : i32
    %c0_i32_0 = arith.constant 0 : i32
    %c0_i32_1 = arith.constant 0 : i32
    return %c0_i32, %c0_i32_0 : i32, i32
  }
}

module attributes {stable_mosaic.version = 11 : i64} {
  func.func @kernel(%arg0: i32, %arg1: memref<1x32x8xf32, #tpu.memory_space<vmem>>, %arg2: memref<32x32xf32, #tpu.memory_space<vmem>>, %arg3: memref<32x1xf32, #tpu.memory_space<vmem>>, %arg4: memref<32x1xf32, #tpu.memory_space<vmem>>, %arg5: memref<3x32x32xbf16, #tpu.memory_space<vmem>>, %arg6: memref<32x1xf32, #tpu.memory_space<vmem>>, %arg7: memref<32x1xf32, #tpu.memory_space<vmem>>, %arg8: memref<32x1xf32, #tpu.memory_space<vmem>>, %arg9: memref<3x32x32xbf16, #tpu.memory_space<vmem>>, %arg10: memref<32x1xf32, #tpu.memory_space<vmem>>, %arg11: memref<1x32x8xf32, #tpu.memory_space<vmem>>, %arg12: memref<32x10xf32, #tpu.memory_space<vmem>>) attributes {dimension_semantics = [#tpu.dimension_semantics<parallel>], iteration_bounds = array<i64: 2>, scalar_prefetch = 0 : i64, scratch_operands = 1 : i64, tpu.core_type = #tpu.core_type<tc>, window_params = [{transform_indices = @transform_0, window_bounds = array<i64: 1, 32, 8>}, {pipeline_mode = #tpu.pipeline_mode<synchronous>, transform_indices = @transform_1, window_bounds = array<i64: 32, 32>}, {pipeline_mode = #tpu.pipeline_mode<synchronous>, transform_indices = @transform_2, window_bounds = array<i64: 32, 1>}, {pipeline_mode = #tpu.pipeline_mode<synchronous>, transform_indices = @transform_3, window_bounds = array<i64: 32, 1>}, {pipeline_mode = #tpu.pipeline_mode<synchronous>, transform_indices = @transform_4, window_bounds = array<i64: 3, 32, 32>}, {pipeline_mode = #tpu.pipeline_mode<synchronous>, transform_indices = @transform_5, window_bounds = array<i64: 32, 1>}, {pipeline_mode = #tpu.pipeline_mode<synchronous>, transform_indices = @transform_6, window_bounds = array<i64: 32, 1>}, {pipeline_mode = #tpu.pipeline_mode<synchronous>, transform_indices = @transform_7, window_bounds = array<i64: 32, 1>}, {pipeline_mode = #tpu.pipeline_mode<synchronous>, transform_indices = @transform_8, window_bounds = array<i64: 3, 32, 32>}, {pipeline_mode = #tpu.pipeline_mode<synchronous>, transform_indices = @transform_9, window_bounds = array<i64: 32, 1>}, {transform_indices = @transform_10, window_bounds = array<i64: 1, 32, 8>}]} {
    %c0 = arith.constant 0 : index
    %c0_0 = arith.constant 0 : index
    %c0_1 = arith.constant 0 : index
    %0 = vector.load %arg1[%c0, %c0_0, %c0_1] : memref<1x32x8xf32, #tpu.memory_space<vmem>>, vector<1x32x8xf32>
    %1 = vector.shape_cast %0 : vector<1x32x8xf32> to vector<32x8xf32>
    %c0_2 = arith.constant 0 : index
    %c0_3 = arith.constant 0 : index
    %2 = vector.load %arg2[%c0_2, %c0_3] : memref<32x32xf32, #tpu.memory_space<vmem>>, vector<32x32xf32>
    %c0_4 = arith.constant 0 : index
    %c0_5 = arith.constant 0 : index
    %3 = vector.load %arg3[%c0_4, %c0_5] : memref<32x1xf32, #tpu.memory_space<vmem>>, vector<32x1xf32>
    %c0_6 = arith.constant 0 : index
    %c0_7 = arith.constant 0 : index
    %4 = vector.load %arg4[%c0_6, %c0_7] : memref<32x1xf32, #tpu.memory_space<vmem>>, vector<32x1xf32>
    %cst = arith.constant dense<0.000000e+00> : vector<32x8xf32>
    %5 = tpu.matmul %2, %1, %cst {dimension_numbers = #tpu.dot_dimension_numbers<[1], [0], [0], [1], [0, 0, 1, 1], [], []>} : vector<32x32xf32>, vector<32x8xf32>, vector<32x8xf32> -> vector<32x8xf32>
    %cst_8 = arith.constant dense<0.000000e+00> : vector<32xf32>
    %6 = vector.multi_reduction <add>, %5, %cst_8 [1] : vector<32x8xf32> to vector<32xf32>
    %7 = vector.shape_cast %6 : vector<32xf32> to vector<32x1xf32>
    %8 = arith.mulf %1, %1 : vector<32x8xf32>
    %cst_9 = arith.constant dense<0.000000e+00> : vector<32x8xf32>
    %9 = tpu.matmul %2, %8, %cst_9 {dimension_numbers = #tpu.dot_dimension_numbers<[1], [0], [0], [1], [0, 0, 1, 1], [], []>} : vector<32x32xf32>, vector<32x8xf32>, vector<32x8xf32> -> vector<32x8xf32>
    %cst_10 = arith.constant dense<0.000000e+00> : vector<32xf32>
    %10 = vector.multi_reduction <add>, %9, %cst_10 [1] : vector<32x8xf32> to vector<32xf32>
    %11 = vector.shape_cast %10 : vector<32xf32> to vector<32x1xf32>
    %12 = arith.mulf %7, %7 : vector<32x1xf32>
    %13 = arith.subf %11, %12 : vector<32x1xf32>
    %cst_11 = arith.constant 0.000000e+00 : f32
    %14 = vector.broadcast %cst_11 : f32 to vector<32x1xf32>
    %15 = arith.maximumf %13, %14 : vector<32x1xf32>
    %16 = vector.broadcast %7 : vector<32x1xf32> to vector<32x8xf32>
    %17 = arith.subf %1, %16 : vector<32x8xf32>
    %cst_12 = arith.constant 9.99999974E-6 : f32
    %18 = vector.broadcast %cst_12 : f32 to vector<32x1xf32>
    %19 = arith.addf %15, %18 : vector<32x1xf32>
    %20 = math.rsqrt %19 : vector<32x1xf32>
    %21 = vector.broadcast %20 : vector<32x1xf32> to vector<32x8xf32>
    %22 = arith.mulf %17, %21 : vector<32x8xf32>
    %23 = vector.broadcast %3 : vector<32x1xf32> to vector<32x8xf32>
    %24 = arith.mulf %22, %23 : vector<32x8xf32>
    %25 = vector.broadcast %4 : vector<32x1xf32> to vector<32x8xf32>
    %26 = arith.addf %24, %25 : vector<32x8xf32>
    %27 = arith.negf %26 : vector<32x8xf32>
    %28 = math.exp %27 : vector<32x8xf32>
    %cst_13 = arith.constant 1.000000e+00 : f32
    %29 = vector.broadcast %cst_13 : f32 to vector<32x8xf32>
    %30 = arith.addf %29, %28 : vector<32x8xf32>
    %31 = arith.divf %29, %30 : vector<32x8xf32>
    %32 = arith.mulf %26, %31 : vector<32x8xf32>
    %cst_14 = arith.constant 0.000000e+00 : f32
    %33 = vector.broadcast %cst_14 : f32 to vector<32x10xf32>
    %c0_15 = arith.constant 0 : index
    %c0_16 = arith.constant 0 : index
    %34 = vector.load %arg12[%c0_15, %c0_16] : memref<32x10xf32, #tpu.memory_space<vmem>>, vector<32x10xf32>
    tpu.vector_store %arg12[%c0_15, %c0_16], %33 {strides = array<i32>} : memref<32x10xf32, #tpu.memory_space<vmem>>, vector<32x10xf32>,
    %c0_17 = arith.constant 0 : index
    %c1 = arith.constant 1 : index
    %35 = vector.load %arg12[%c0_17, %c1] : memref<32x10xf32, #tpu.memory_space<vmem>>, vector<32x8xf32>
    tpu.vector_store %arg12[%c0_17, %c1], %32 {strides = array<i32>} : memref<32x10xf32, #tpu.memory_space<vmem>>, vector<32x8xf32>,
    %c0_18 = arith.constant 0 : index
    %c0_19 = arith.constant 0 : index
    %c0_20 = arith.constant 0 : index
    %36 = vector.load %arg5[%c0_18, %c0_19, %c0_20] : memref<3x32x32xbf16, #tpu.memory_space<vmem>>, vector<1x32x32xbf16>
    %37 = vector.shape_cast %36 : vector<1x32x32xbf16> to vector<32x32xbf16>
    %c0_21 = arith.constant 0 : index
    %c0_22 = arith.constant 0 : index
    %38 = vector.load %arg12[%c0_21, %c0_22] : memref<32x10xf32, #tpu.memory_space<vmem>>, vector<32x8xf32>
    %39 = arith.truncf %38 : vector<32x8xf32> to vector<32x8xbf16>
    %cst_23 = arith.constant dense<0.000000e+00> : vector<32x8xf32>
    %40 = tpu.matmul %37, %39, %cst_23 {dimension_numbers = #tpu.dot_dimension_numbers<[1], [0], [0], [1], [0, 0, 1, 1], [], []>} : vector<32x32xbf16>, vector<32x8xbf16>, vector<32x8xf32> -> vector<32x8xf32>
    %c1_24 = arith.constant 1 : index
    %c0_25 = arith.constant 0 : index
    %c0_26 = arith.constant 0 : index
    %41 = vector.load %arg5[%c1_24, %c0_25, %c0_26] : memref<3x32x32xbf16, #tpu.memory_space<vmem>>, vector<1x32x32xbf16>
    %42 = vector.shape_cast %41 : vector<1x32x32xbf16> to vector<32x32xbf16>
    %c0_27 = arith.constant 0 : index
    %c1_28 = arith.constant 1 : index
    %43 = vector.load %arg12[%c0_27, %c1_28] : memref<32x10xf32, #tpu.memory_space<vmem>>, vector<32x8xf32>
    %44 = arith.truncf %43 : vector<32x8xf32> to vector<32x8xbf16>
    %cst_29 = arith.constant dense<0.000000e+00> : vector<32x8xf32>
    %45 = tpu.matmul %42, %44, %cst_29 {dimension_numbers = #tpu.dot_dimension_numbers<[1], [0], [0], [1], [0, 0, 1, 1], [], []>} : vector<32x32xbf16>, vector<32x8xbf16>, vector<32x8xf32> -> vector<32x8xf32>
    %46 = arith.addf %40, %45 : vector<32x8xf32>
    %c2 = arith.constant 2 : index
    %c0_30 = arith.constant 0 : index
    %c0_31 = arith.constant 0 : index
    %47 = vector.load %arg5[%c2, %c0_30, %c0_31] : memref<3x32x32xbf16, #tpu.memory_space<vmem>>, vector<1x32x32xbf16>
    %48 = vector.shape_cast %47 : vector<1x32x32xbf16> to vector<32x32xbf16>
    %c0_32 = arith.constant 0 : index
    %c2_33 = arith.constant 2 : index
    %49 = vector.load %arg12[%c0_32, %c2_33] : memref<32x10xf32, #tpu.memory_space<vmem>>, vector<32x8xf32>
    %50 = arith.truncf %49 : vector<32x8xf32> to vector<32x8xbf16>
    %cst_34 = arith.constant dense<0.000000e+00> : vector<32x8xf32>
    %51 = tpu.matmul %48, %50, %cst_34 {dimension_numbers = #tpu.dot_dimension_numbers<[1], [0], [0], [1], [0, 0, 1, 1], [], []>} : vector<32x32xbf16>, vector<32x8xbf16>, vector<32x8xf32> -> vector<32x8xf32>
    %52 = arith.addf %46, %51 : vector<32x8xf32>
    %c0_35 = arith.constant 0 : index
    %c0_36 = arith.constant 0 : index
    %53 = vector.load %arg6[%c0_35, %c0_36] : memref<32x1xf32, #tpu.memory_space<vmem>>, vector<32x1xf32>
    %54 = vector.broadcast %53 : vector<32x1xf32> to vector<32x8xf32>
    %55 = arith.addf %52, %54 : vector<32x8xf32>
    %c0_37 = arith.constant 0 : index
    %c0_38 = arith.constant 0 : index
    %56 = vector.load %arg2[%c0_37, %c0_38] : memref<32x32xf32, #tpu.memory_space<vmem>>, vector<32x32xf32>
    %c0_39 = arith.constant 0 : index
    %c0_40 = arith.constant 0 : index
    %57 = vector.load %arg7[%c0_39, %c0_40] : memref<32x1xf32, #tpu.memory_space<vmem>>, vector<32x1xf32>
    %c0_41 = arith.constant 0 : index
    %c0_42 = arith.constant 0 : index
    %58 = vector.load %arg8[%c0_41, %c0_42] : memref<32x1xf32, #tpu.memory_space<vmem>>, vector<32x1xf32>
    %cst_43 = arith.constant dense<0.000000e+00> : vector<32x8xf32>
    %59 = tpu.matmul %56, %55, %cst_43 {dimension_numbers = #tpu.dot_dimension_numbers<[1], [0], [0], [1], [0, 0, 1, 1], [], []>} : vector<32x32xf32>, vector<32x8xf32>, vector<32x8xf32> -> vector<32x8xf32>
    %cst_44 = arith.constant dense<0.000000e+00> : vector<32xf32>
    %60 = vector.multi_reduction <add>, %59, %cst_44 [1] : vector<32x8xf32> to vector<32xf32>
    %61 = vector.shape_cast %60 : vector<32xf32> to vector<32x1xf32>
    %62 = arith.mulf %55, %55 : vector<32x8xf32>
    %cst_45 = arith.constant dense<0.000000e+00> : vector<32x8xf32>
    %63 = tpu.matmul %56, %62, %cst_45 {dimension_numbers = #tpu.dot_dimension_numbers<[1], [0], [0], [1], [0, 0, 1, 1], [], []>} : vector<32x32xf32>, vector<32x8xf32>, vector<32x8xf32> -> vector<32x8xf32>
    %cst_46 = arith.constant dense<0.000000e+00> : vector<32xf32>
    %64 = vector.multi_reduction <add>, %63, %cst_46 [1] : vector<32x8xf32> to vector<32xf32>
    %65 = vector.shape_cast %64 : vector<32xf32> to vector<32x1xf32>
    %66 = arith.mulf %61, %61 : vector<32x1xf32>
    %67 = arith.subf %65, %66 : vector<32x1xf32>
    %cst_47 = arith.constant 0.000000e+00 : f32
    %68 = vector.broadcast %cst_47 : f32 to vector<32x1xf32>
    %69 = arith.maximumf %67, %68 : vector<32x1xf32>
    %70 = vector.broadcast %61 : vector<32x1xf32> to vector<32x8xf32>
    %71 = arith.subf %55, %70 : vector<32x8xf32>
    %cst_48 = arith.constant 9.99999974E-6 : f32
    %72 = vector.broadcast %cst_48 : f32 to vector<32x1xf32>
    %73 = arith.addf %69, %72 : vector<32x1xf32>
    %74 = math.rsqrt %73 : vector<32x1xf32>
    %75 = vector.broadcast %74 : vector<32x1xf32> to vector<32x8xf32>
    %76 = arith.mulf %71, %75 : vector<32x8xf32>
    %77 = vector.broadcast %57 : vector<32x1xf32> to vector<32x8xf32>
    %78 = arith.mulf %76, %77 : vector<32x8xf32>
    %79 = vector.broadcast %58 : vector<32x1xf32> to vector<32x8xf32>
    %80 = arith.addf %78, %79 : vector<32x8xf32>
    %81 = arith.negf %80 : vector<32x8xf32>
    %82 = math.exp %81 : vector<32x8xf32>
    %cst_49 = arith.constant 1.000000e+00 : f32
    %83 = vector.broadcast %cst_49 : f32 to vector<32x8xf32>
    %84 = arith.addf %83, %82 : vector<32x8xf32>
    %85 = arith.divf %83, %84 : vector<32x8xf32>
    %86 = arith.mulf %80, %85 : vector<32x8xf32>
    %cst_50 = arith.constant 0.000000e+00 : f32
    %87 = vector.broadcast %cst_50 : f32 to vector<32x10xf32>
    %c0_51 = arith.constant 0 : index
    %c0_52 = arith.constant 0 : index
    %88 = vector.load %arg12[%c0_51, %c0_52] : memref<32x10xf32, #tpu.memory_space<vmem>>, vector<32x10xf32>
    tpu.vector_store %arg12[%c0_51, %c0_52], %87 {strides = array<i32>} : memref<32x10xf32, #tpu.memory_space<vmem>>, vector<32x10xf32>,
    %c0_53 = arith.constant 0 : index
    %c1_54 = arith.constant 1 : index
    %89 = vector.load %arg12[%c0_53, %c1_54] : memref<32x10xf32, #tpu.memory_space<vmem>>, vector<32x8xf32>
    tpu.vector_store %arg12[%c0_53, %c1_54], %86 {strides = array<i32>} : memref<32x10xf32, #tpu.memory_space<vmem>>, vector<32x8xf32>,
    %c0_55 = arith.constant 0 : index
    %c0_56 = arith.constant 0 : index
    %c0_57 = arith.constant 0 : index
    %90 = vector.load %arg9[%c0_55, %c0_56, %c0_57] : memref<3x32x32xbf16, #tpu.memory_space<vmem>>, vector<1x32x32xbf16>
    %91 = vector.shape_cast %90 : vector<1x32x32xbf16> to vector<32x32xbf16>
    %c0_58 = arith.constant 0 : index
    %c0_59 = arith.constant 0 : index
    %92 = vector.load %arg12[%c0_58, %c0_59] : memref<32x10xf32, #tpu.memory_space<vmem>>, vector<32x8xf32>
    %93 = arith.truncf %92 : vector<32x8xf32> to vector<32x8xbf16>
    %cst_60 = arith.constant dense<0.000000e+00> : vector<32x8xf32>
    %94 = tpu.matmul %91, %93, %cst_60 {dimension_numbers = #tpu.dot_dimension_numbers<[1], [0], [0], [1], [0, 0, 1, 1], [], []>} : vector<32x32xbf16>, vector<32x8xbf16>, vector<32x8xf32> -> vector<32x8xf32>
    %c1_61 = arith.constant 1 : index
    %c0_62 = arith.constant 0 : index
    %c0_63 = arith.constant 0 : index
    %95 = vector.load %arg9[%c1_61, %c0_62, %c0_63] : memref<3x32x32xbf16, #tpu.memory_space<vmem>>, vector<1x32x32xbf16>
    %96 = vector.shape_cast %95 : vector<1x32x32xbf16> to vector<32x32xbf16>
    %c0_64 = arith.constant 0 : index
    %c1_65 = arith.constant 1 : index
    %97 = vector.load %arg12[%c0_64, %c1_65] : memref<32x10xf32, #tpu.memory_space<vmem>>, vector<32x8xf32>
    %98 = arith.truncf %97 : vector<32x8xf32> to vector<32x8xbf16>
    %cst_66 = arith.constant dense<0.000000e+00> : vector<32x8xf32>
    %99 = tpu.matmul %96, %98, %cst_66 {dimension_numbers = #tpu.dot_dimension_numbers<[1], [0], [0], [1], [0, 0, 1, 1], [], []>} : vector<32x32xbf16>, vector<32x8xbf16>, vector<32x8xf32> -> vector<32x8xf32>
    %100 = arith.addf %94, %99 : vector<32x8xf32>
    %c2_67 = arith.constant 2 : index
    %c0_68 = arith.constant 0 : index
    %c0_69 = arith.constant 0 : index
    %101 = vector.load %arg9[%c2_67, %c0_68, %c0_69] : memref<3x32x32xbf16, #tpu.memory_space<vmem>>, vector<1x32x32xbf16>
    %102 = vector.shape_cast %101 : vector<1x32x32xbf16> to vector<32x32xbf16>
    %c0_70 = arith.constant 0 : index
    %c2_71 = arith.constant 2 : index
    %103 = vector.load %arg12[%c0_70, %c2_71] : memref<32x10xf32, #tpu.memory_space<vmem>>, vector<32x8xf32>
    %104 = arith.truncf %103 : vector<32x8xf32> to vector<32x8xbf16>
    %cst_72 = arith.constant dense<0.000000e+00> : vector<32x8xf32>
    %105 = tpu.matmul %102, %104, %cst_72 {dimension_numbers = #tpu.dot_dimension_numbers<[1], [0], [0], [1], [0, 0, 1, 1], [], []>} : vector<32x32xbf16>, vector<32x8xbf16>, vector<32x8xf32> -> vector<32x8xf32>
    %106 = arith.addf %100, %105 : vector<32x8xf32>
    %c0_73 = arith.constant 0 : index
    %c0_74 = arith.constant 0 : index
    %107 = vector.load %arg10[%c0_73, %c0_74] : memref<32x1xf32, #tpu.memory_space<vmem>>, vector<32x1xf32>
    %108 = vector.broadcast %107 : vector<32x1xf32> to vector<32x8xf32>
    %109 = arith.addf %106, %108 : vector<32x8xf32>
    %110 = arith.addf %1, %109 : vector<32x8xf32>
    %c0_75 = arith.constant 0 : index
    %c0_76 = arith.constant 0 : index
    %c0_77 = arith.constant 0 : index
    %111 = vector.load %arg11[%c0_75, %c0_76, %c0_77] : memref<1x32x8xf32, #tpu.memory_space<vmem>>, vector<1x32x8xf32>
    %112 = vector.shape_cast %111 : vector<1x32x8xf32> to vector<32x8xf32>
    %113 = vector.shape_cast %110 : vector<32x8xf32> to vector<1x32x8xf32>
    tpu.vector_store %arg11[%c0_75, %c0_76, %c0_77], %113 {strides = array<i32>} : memref<1x32x8xf32, #tpu.memory_space<vmem>>, vector<1x32x8xf32>,
    return
  }
  func.func @transform_0(%arg0: i32) -> (i32, i32, i32) {
    %c0_i32 = arith.constant 0 : i32
    %c0_i32_0 = arith.constant 0 : i32
    %c0_i32_1 = arith.constant 0 : i32
    return %arg0, %c0_i32, %c0_i32_0 : i32, i32, i32
  }
  func.func @transform_1(%arg0: i32) -> (i32, i32) {
    %c0_i32 = arith.constant 0 : i32
    %c0_i32_0 = arith.constant 0 : i32
    %c0_i32_1 = arith.constant 0 : i32
    return %c0_i32, %c0_i32_0 : i32, i32
  }
  func.func @transform_2(%arg0: i32) -> (i32, i32) {
    %c0_i32 = arith.constant 0 : i32
    %c0_i32_0 = arith.constant 0 : i32
    %c0_i32_1 = arith.constant 0 : i32
    return %c0_i32, %c0_i32_0 : i32, i32
  }
  func.func @transform_3(%arg0: i32) -> (i32, i32) {
    %c0_i32 = arith.constant 0 : i32
    %c0_i32_0 = arith.constant 0 : i32
    %c0_i32_1 = arith.constant 0 : i32
    return %c0_i32, %c0_i32_0 : i32, i32
  }
  func.func @transform_4(%arg0: i32) -> (i32, i32, i32) {
    %c0_i32 = arith.constant 0 : i32
    %c0_i32_0 = arith.constant 0 : i32
    %c0_i32_1 = arith.constant 0 : i32
    %c0_i32_2 = arith.constant 0 : i32
    return %c0_i32, %c0_i32_0, %c0_i32_1 : i32, i32, i32
  }
  func.func @transform_5(%arg0: i32) -> (i32, i32) {
    %c0_i32 = arith.constant 0 : i32
    %c0_i32_0 = arith.constant 0 : i32
    %c0_i32_1 = arith.constant 0 : i32
    return %c0_i32, %c0_i32_0 : i32, i32
  }
  func.func @transform_6(%arg0: i32) -> (i32, i32) {
    %c0_i32 = arith.constant 0 : i32
    %c0_i32_0 = arith.constant 0 : i32
    %c0_i32_1 = arith.constant 0 : i32
    return %c0_i32, %c0_i32_0 : i32, i32
  }
  func.func @transform_7(%arg0: i32) -> (i32, i32) {
    %c0_i32 = arith.constant 0 : i32
    %c0_i32_0 = arith.constant 0 : i32
    %c0_i32_1 = arith.constant 0 : i32
    return %c0_i32, %c0_i32_0 : i32, i32
  }
  func.func @transform_8(%arg0: i32) -> (i32, i32, i32) {
    %c0_i32 = arith.constant 0 : i32
    %c0_i32_0 = arith.constant 0 : i32
    %c0_i32_1 = arith.constant 0 : i32
    %c0_i32_2 = arith.constant 0 : i32
    return %c0_i32, %c0_i32_0, %c0_i32_1 : i32, i32, i32
  }
  func.func @transform_9(%arg0: i32) -> (i32, i32) {
    %c0_i32 = arith.constant 0 : i32
    %c0_i32_0 = arith.constant 0 : i32
    %c0_i32_1 = arith.constant 0 : i32
    return %c0_i32, %c0_i32_0 : i32, i32
  }
  func.func @transform_10(%arg0: i32) -> (i32, i32, i32) {
    %c0_i32 = arith.constant 0 : i32
    %c0_i32_0 = arith.constant 0 : i32
    %c0_i32_1 = arith.constant 0 : i32
    return %arg0, %c0_i32, %c0_i32_0 : i32, i32, i32
  }
}

module attributes {stable_mosaic.version = 11 : i64} {
  func.func @kernel(%arg0: i32, %arg1: memref<64x160xbf16, #tpu.memory_space<vmem>>, %arg2: memref<160x8xbf16, #tpu.memory_space<vmem>>, %arg3: memref<64x1xf32, #tpu.memory_space<vmem>>, %arg4: memref<64x8xf32, #tpu.memory_space<vmem>>) attributes {dimension_semantics = [#tpu.dimension_semantics<parallel>], iteration_bounds = array<i64: 1>, scalar_prefetch = 0 : i64, scratch_operands = 0 : i64, tpu.core_type = #tpu.core_type<tc>, window_params = [{pipeline_mode = #tpu.pipeline_mode<synchronous>, transform_indices = @transform_0, window_bounds = array<i64: 64, 160>}, {pipeline_mode = #tpu.pipeline_mode<synchronous>, transform_indices = @transform_1, window_bounds = array<i64: 160, 8>}, {pipeline_mode = #tpu.pipeline_mode<synchronous>, transform_indices = @transform_2, window_bounds = array<i64: 64, 1>}, {pipeline_mode = #tpu.pipeline_mode<synchronous>, transform_indices = @transform_3, window_bounds = array<i64: 64, 8>}]} {
    %c0 = arith.constant 0 : index
    %c0_0 = arith.constant 0 : index
    %0 = vector.load %arg1[%c0, %c0_0] : memref<64x160xbf16, #tpu.memory_space<vmem>>, vector<64x160xbf16>
    %c0_1 = arith.constant 0 : index
    %c0_2 = arith.constant 0 : index
    %1 = vector.load %arg2[%c0_1, %c0_2] : memref<160x8xbf16, #tpu.memory_space<vmem>>, vector<160x8xbf16>
    %cst = arith.constant dense<0.000000e+00> : vector<64x8xf32>
    %2 = tpu.matmul %0, %1, %cst {dimension_numbers = #tpu.dot_dimension_numbers<[1], [0], [0], [1], [0, 0, 1, 1], [], []>} : vector<64x160xbf16>, vector<160x8xbf16>, vector<64x8xf32> -> vector<64x8xf32>
    %c0_3 = arith.constant 0 : index
    %c0_4 = arith.constant 0 : index
    %3 = vector.load %arg3[%c0_3, %c0_4] : memref<64x1xf32, #tpu.memory_space<vmem>>, vector<64x1xf32>
    %4 = vector.broadcast %3 : vector<64x1xf32> to vector<64x8xf32>
    %5 = arith.addf %2, %4 : vector<64x8xf32>
    %c0_5 = arith.constant 0 : index
    %c0_6 = arith.constant 0 : index
    %6 = vector.load %arg4[%c0_5, %c0_6] : memref<64x8xf32, #tpu.memory_space<vmem>>, vector<64x8xf32>
    tpu.vector_store %arg4[%c0_5, %c0_6], %5 {strides = array<i32>} : memref<64x8xf32, #tpu.memory_space<vmem>>, vector<64x8xf32>,
    return
  }
  func.func @transform_0(%arg0: i32) -> (i32, i32) {
    %c0_i32 = arith.constant 0 : i32
    %c0_i32_0 = arith.constant 0 : i32
    %c0_i32_1 = arith.constant 0 : i32
    return %c0_i32, %c0_i32_0 : i32, i32
  }
  func.func @transform_1(%arg0: i32) -> (i32, i32) {
    %c0_i32 = arith.constant 0 : i32
    %c0_i32_0 = arith.constant 0 : i32
    %c0_i32_1 = arith.constant 0 : i32
    return %c0_i32, %c0_i32_0 : i32, i32
  }
  func.func @transform_2(%arg0: i32) -> (i32, i32) {
    %c0_i32 = arith.constant 0 : i32
    %c0_i32_0 = arith.constant 0 : i32
    %c0_i32_1 = arith.constant 0 : i32
    return %c0_i32, %c0_i32_0 : i32, i32
  }
  func.func @transform_3(%arg0: i32) -> (i32, i32) {
    %c0_i32 = arith.constant 0 : i32
    %c0_i32_0 = arith.constant 0 : i32
    %c0_i32_1 = arith.constant 0 : i32
    return %c0_i32, %c0_i32_0 : i32, i32
  }
}

module attributes {stable_mosaic.version = 11 : i64} {
  func.func @kernel(%arg0: i32, %arg1: memref<32x64xbf16, #tpu.memory_space<vmem>>, %arg2: memref<64x8xbf16, #tpu.memory_space<vmem>>, %arg3: memref<32x1xf32, #tpu.memory_space<vmem>>, %arg4: memref<32x8xf32, #tpu.memory_space<vmem>>) attributes {dimension_semantics = [#tpu.dimension_semantics<parallel>], iteration_bounds = array<i64: 1>, scalar_prefetch = 0 : i64, scratch_operands = 0 : i64, tpu.core_type = #tpu.core_type<tc>, window_params = [{pipeline_mode = #tpu.pipeline_mode<synchronous>, transform_indices = @transform_0, window_bounds = array<i64: 32, 64>}, {pipeline_mode = #tpu.pipeline_mode<synchronous>, transform_indices = @transform_1, window_bounds = array<i64: 64, 8>}, {pipeline_mode = #tpu.pipeline_mode<synchronous>, transform_indices = @transform_2, window_bounds = array<i64: 32, 1>}, {pipeline_mode = #tpu.pipeline_mode<synchronous>, transform_indices = @transform_3, window_bounds = array<i64: 32, 8>}]} {
    %c0 = arith.constant 0 : index
    %c0_0 = arith.constant 0 : index
    %0 = vector.load %arg1[%c0, %c0_0] : memref<32x64xbf16, #tpu.memory_space<vmem>>, vector<32x64xbf16>
    %c0_1 = arith.constant 0 : index
    %c0_2 = arith.constant 0 : index
    %1 = vector.load %arg2[%c0_1, %c0_2] : memref<64x8xbf16, #tpu.memory_space<vmem>>, vector<64x8xbf16>
    %cst = arith.constant dense<0.000000e+00> : vector<32x8xf32>
    %2 = tpu.matmul %0, %1, %cst {dimension_numbers = #tpu.dot_dimension_numbers<[1], [0], [0], [1], [0, 0, 1, 1], [], []>} : vector<32x64xbf16>, vector<64x8xbf16>, vector<32x8xf32> -> vector<32x8xf32>
    %c0_3 = arith.constant 0 : index
    %c0_4 = arith.constant 0 : index
    %3 = vector.load %arg3[%c0_3, %c0_4] : memref<32x1xf32, #tpu.memory_space<vmem>>, vector<32x1xf32>
    %4 = vector.broadcast %3 : vector<32x1xf32> to vector<32x8xf32>
    %5 = arith.addf %2, %4 : vector<32x8xf32>
    %c0_5 = arith.constant 0 : index
    %c0_6 = arith.constant 0 : index
    %6 = vector.load %arg4[%c0_5, %c0_6] : memref<32x8xf32, #tpu.memory_space<vmem>>, vector<32x8xf32>
    tpu.vector_store %arg4[%c0_5, %c0_6], %5 {strides = array<i32>} : memref<32x8xf32, #tpu.memory_space<vmem>>, vector<32x8xf32>,
    return
  }
  func.func @transform_0(%arg0: i32) -> (i32, i32) {
    %c0_i32 = arith.constant 0 : i32
    %c0_i32_0 = arith.constant 0 : i32
    %c0_i32_1 = arith.constant 0 : i32
    return %c0_i32, %c0_i32_0 : i32, i32
  }
  func.func @transform_1(%arg0: i32) -> (i32, i32) {
    %c0_i32 = arith.constant 0 : i32
    %c0_i32_0 = arith.constant 0 : i32
    %c0_i32_1 = arith.constant 0 : i32
    return %c0_i32, %c0_i32_0 : i32, i32
  }
  func.func @transform_2(%arg0: i32) -> (i32, i32) {
    %c0_i32 = arith.constant 0 : i32
    %c0_i32_0 = arith.constant 0 : i32
    %c0_i32_1 = arith.constant 0 : i32
    return %c0_i32, %c0_i32_0 : i32, i32
  }
  func.func @transform_3(%arg0: i32) -> (i32, i32) {
    %c0_i32 = arith.constant 0 : i32
    %c0_i32_0 = arith.constant 0 : i32
    %c0_i32_1 = arith.constant 0 : i32
    return %c0_i32, %c0_i32_0 : i32, i32
  }
}

module attributes {stable_mosaic.version = 11 : i64} {
  func.func @kernel(%arg0: i32, %arg1: memref<1x64x4xf32, #tpu.memory_space<vmem>>, %arg2: memref<64x64xf32, #tpu.memory_space<vmem>>, %arg3: memref<64x1xf32, #tpu.memory_space<vmem>>, %arg4: memref<64x1xf32, #tpu.memory_space<vmem>>, %arg5: memref<1x64x4xf32, #tpu.memory_space<vmem>>) attributes {dimension_semantics = [#tpu.dimension_semantics<parallel>], iteration_bounds = array<i64: 2>, scalar_prefetch = 0 : i64, scratch_operands = 0 : i64, tpu.core_type = #tpu.core_type<tc>, window_params = [{transform_indices = @transform_0, window_bounds = array<i64: 1, 64, 4>}, {pipeline_mode = #tpu.pipeline_mode<synchronous>, transform_indices = @transform_1, window_bounds = array<i64: 64, 64>}, {pipeline_mode = #tpu.pipeline_mode<synchronous>, transform_indices = @transform_2, window_bounds = array<i64: 64, 1>}, {pipeline_mode = #tpu.pipeline_mode<synchronous>, transform_indices = @transform_3, window_bounds = array<i64: 64, 1>}, {transform_indices = @transform_4, window_bounds = array<i64: 1, 64, 4>}]} {
    %c0 = arith.constant 0 : index
    %c0_0 = arith.constant 0 : index
    %c0_1 = arith.constant 0 : index
    %0 = vector.load %arg1[%c0, %c0_0, %c0_1] : memref<1x64x4xf32, #tpu.memory_space<vmem>>, vector<1x64x4xf32>
    %1 = vector.shape_cast %0 : vector<1x64x4xf32> to vector<64x4xf32>
    %c0_2 = arith.constant 0 : index
    %c0_3 = arith.constant 0 : index
    %2 = vector.load %arg2[%c0_2, %c0_3] : memref<64x64xf32, #tpu.memory_space<vmem>>, vector<64x64xf32>
    %c0_4 = arith.constant 0 : index
    %c0_5 = arith.constant 0 : index
    %3 = vector.load %arg3[%c0_4, %c0_5] : memref<64x1xf32, #tpu.memory_space<vmem>>, vector<64x1xf32>
    %c0_6 = arith.constant 0 : index
    %c0_7 = arith.constant 0 : index
    %4 = vector.load %arg4[%c0_6, %c0_7] : memref<64x1xf32, #tpu.memory_space<vmem>>, vector<64x1xf32>
    %cst = arith.constant dense<0.000000e+00> : vector<64x4xf32>
    %5 = tpu.matmul %2, %1, %cst {dimension_numbers = #tpu.dot_dimension_numbers<[1], [0], [0], [1], [0, 0, 1, 1], [], []>} : vector<64x64xf32>, vector<64x4xf32>, vector<64x4xf32> -> vector<64x4xf32>
    %cst_8 = arith.constant dense<0.000000e+00> : vector<64xf32>
    %6 = vector.multi_reduction <add>, %5, %cst_8 [1] : vector<64x4xf32> to vector<64xf32>
    %7 = vector.shape_cast %6 : vector<64xf32> to vector<64x1xf32>
    %8 = arith.mulf %1, %1 : vector<64x4xf32>
    %cst_9 = arith.constant dense<0.000000e+00> : vector<64x4xf32>
    %9 = tpu.matmul %2, %8, %cst_9 {dimension_numbers = #tpu.dot_dimension_numbers<[1], [0], [0], [1], [0, 0, 1, 1], [], []>} : vector<64x64xf32>, vector<64x4xf32>, vector<64x4xf32> -> vector<64x4xf32>
    %cst_10 = arith.constant dense<0.000000e+00> : vector<64xf32>
    %10 = vector.multi_reduction <add>, %9, %cst_10 [1] : vector<64x4xf32> to vector<64xf32>
    %11 = vector.shape_cast %10 : vector<64xf32> to vector<64x1xf32>
    %12 = arith.mulf %7, %7 : vector<64x1xf32>
    %13 = arith.subf %11, %12 : vector<64x1xf32>
    %cst_11 = arith.constant 0.000000e+00 : f32
    %14 = vector.broadcast %cst_11 : f32 to vector<64x1xf32>
    %15 = arith.maximumf %13, %14 : vector<64x1xf32>
    %16 = vector.broadcast %7 : vector<64x1xf32> to vector<64x4xf32>
    %17 = arith.subf %1, %16 : vector<64x4xf32>
    %cst_12 = arith.constant 9.99999974E-6 : f32
    %18 = vector.broadcast %cst_12 : f32 to vector<64x1xf32>
    %19 = arith.addf %15, %18 : vector<64x1xf32>
    %20 = math.rsqrt %19 : vector<64x1xf32>
    %21 = vector.broadcast %20 : vector<64x1xf32> to vector<64x4xf32>
    %22 = arith.mulf %17, %21 : vector<64x4xf32>
    %23 = vector.broadcast %3 : vector<64x1xf32> to vector<64x4xf32>
    %24 = arith.mulf %22, %23 : vector<64x4xf32>
    %25 = vector.broadcast %4 : vector<64x1xf32> to vector<64x4xf32>
    %26 = arith.addf %24, %25 : vector<64x4xf32>
    %27 = arith.negf %26 : vector<64x4xf32>
    %28 = math.exp %27 : vector<64x4xf32>
    %cst_13 = arith.constant 1.000000e+00 : f32
    %29 = vector.broadcast %cst_13 : f32 to vector<64x4xf32>
    %30 = arith.addf %29, %28 : vector<64x4xf32>
    %31 = arith.divf %29, %30 : vector<64x4xf32>
    %32 = arith.mulf %26, %31 : vector<64x4xf32>
    %c0_14 = arith.constant 0 : index
    %c0_15 = arith.constant 0 : index
    %c0_16 = arith.constant 0 : index
    %33 = vector.load %arg5[%c0_14, %c0_15, %c0_16] : memref<1x64x4xf32, #tpu.memory_space<vmem>>, vector<1x64x4xf32>
    %34 = vector.shape_cast %33 : vector<1x64x4xf32> to vector<64x4xf32>
    %35 = vector.shape_cast %32 : vector<64x4xf32> to vector<1x64x4xf32>
    tpu.vector_store %arg5[%c0_14, %c0_15, %c0_16], %35 {strides = array<i32>} : memref<1x64x4xf32, #tpu.memory_space<vmem>>, vector<1x64x4xf32>,
    return
  }
  func.func @transform_0(%arg0: i32) -> (i32, i32, i32) {
    %c0_i32 = arith.constant 0 : i32
    %c0_i32_0 = arith.constant 0 : i32
    %c0_i32_1 = arith.constant 0 : i32
    return %arg0, %c0_i32, %c0_i32_0 : i32, i32, i32
  }
  func.func @transform_1(%arg0: i32) -> (i32, i32) {
    %c0_i32 = arith.constant 0 : i32
    %c0_i32_0 = arith.constant 0 : i32
    %c0_i32_1 = arith.constant 0 : i32
    return %c0_i32, %c0_i32_0 : i32, i32
  }
  func.func @transform_2(%arg0: i32) -> (i32, i32) {
    %c0_i32 = arith.constant 0 : i32
    %c0_i32_0 = arith.constant 0 : i32
    %c0_i32_1 = arith.constant 0 : i32
    return %c0_i32, %c0_i32_0 : i32, i32
  }
  func.func @transform_3(%arg0: i32) -> (i32, i32) {
    %c0_i32 = arith.constant 0 : i32
    %c0_i32_0 = arith.constant 0 : i32
    %c0_i32_1 = arith.constant 0 : i32
    return %c0_i32, %c0_i32_0 : i32, i32
  }
  func.func @transform_4(%arg0: i32) -> (i32, i32, i32) {
    %c0_i32 = arith.constant 0 : i32
    %c0_i32_0 = arith.constant 0 : i32
    %c0_i32_1 = arith.constant 0 : i32
    return %arg0, %c0_i32, %c0_i32_0 : i32, i32, i32
  }
}

module attributes {stable_mosaic.version = 11 : i64} {
  func.func @kernel(%arg0: i32, %arg1: memref<1x32x4xf32, #tpu.memory_space<vmem>>, %arg2: memref<32x32xf32, #tpu.memory_space<vmem>>, %arg3: memref<32x1xf32, #tpu.memory_space<vmem>>, %arg4: memref<32x1xf32, #tpu.memory_space<vmem>>, %arg5: memref<96x32xbf16, #tpu.memory_space<vmem>>, %arg6: memref<96x1xf32, #tpu.memory_space<vmem>>, %arg7: memref<32x32xbf16, #tpu.memory_space<vmem>>, %arg8: memref<32x1xf32, #tpu.memory_space<vmem>>, %arg9: memref<1x32x4xf32, #tpu.memory_space<vmem>>, %arg10: memref<32x4xf32, #tpu.memory_space<vmem>>) attributes {dimension_semantics = [#tpu.dimension_semantics<parallel>], iteration_bounds = array<i64: 2>, scalar_prefetch = 0 : i64, scratch_operands = 1 : i64, tpu.core_type = #tpu.core_type<tc>, window_params = [{transform_indices = @transform_0, window_bounds = array<i64: 1, 32, 4>}, {pipeline_mode = #tpu.pipeline_mode<synchronous>, transform_indices = @transform_1, window_bounds = array<i64: 32, 32>}, {pipeline_mode = #tpu.pipeline_mode<synchronous>, transform_indices = @transform_2, window_bounds = array<i64: 32, 1>}, {pipeline_mode = #tpu.pipeline_mode<synchronous>, transform_indices = @transform_3, window_bounds = array<i64: 32, 1>}, {pipeline_mode = #tpu.pipeline_mode<synchronous>, transform_indices = @transform_4, window_bounds = array<i64: 96, 32>}, {pipeline_mode = #tpu.pipeline_mode<synchronous>, transform_indices = @transform_5, window_bounds = array<i64: 96, 1>}, {pipeline_mode = #tpu.pipeline_mode<synchronous>, transform_indices = @transform_6, window_bounds = array<i64: 32, 32>}, {pipeline_mode = #tpu.pipeline_mode<synchronous>, transform_indices = @transform_7, window_bounds = array<i64: 32, 1>}, {transform_indices = @transform_8, window_bounds = array<i64: 1, 32, 4>}]} {
    %c0 = arith.constant 0 : index
    %c0_0 = arith.constant 0 : index
    %c0_1 = arith.constant 0 : index
    %0 = vector.load %arg1[%c0, %c0_0, %c0_1] : memref<1x32x4xf32, #tpu.memory_space<vmem>>, vector<1x32x4xf32>
    %1 = vector.shape_cast %0 : vector<1x32x4xf32> to vector<32x4xf32>
    %c0_2 = arith.constant 0 : index
    %c0_3 = arith.constant 0 : index
    %2 = vector.load %arg2[%c0_2, %c0_3] : memref<32x32xf32, #tpu.memory_space<vmem>>, vector<32x32xf32>
    %c0_4 = arith.constant 0 : index
    %c0_5 = arith.constant 0 : index
    %3 = vector.load %arg3[%c0_4, %c0_5] : memref<32x1xf32, #tpu.memory_space<vmem>>, vector<32x1xf32>
    %c0_6 = arith.constant 0 : index
    %c0_7 = arith.constant 0 : index
    %4 = vector.load %arg4[%c0_6, %c0_7] : memref<32x1xf32, #tpu.memory_space<vmem>>, vector<32x1xf32>
    %cst = arith.constant dense<0.000000e+00> : vector<32x4xf32>
    %5 = tpu.matmul %2, %1, %cst {dimension_numbers = #tpu.dot_dimension_numbers<[1], [0], [0], [1], [0, 0, 1, 1], [], []>} : vector<32x32xf32>, vector<32x4xf32>, vector<32x4xf32> -> vector<32x4xf32>
    %cst_8 = arith.constant dense<0.000000e+00> : vector<32xf32>
    %6 = vector.multi_reduction <add>, %5, %cst_8 [1] : vector<32x4xf32> to vector<32xf32>
    %7 = vector.shape_cast %6 : vector<32xf32> to vector<32x1xf32>
    %8 = arith.mulf %1, %1 : vector<32x4xf32>
    %cst_9 = arith.constant dense<0.000000e+00> : vector<32x4xf32>
    %9 = tpu.matmul %2, %8, %cst_9 {dimension_numbers = #tpu.dot_dimension_numbers<[1], [0], [0], [1], [0, 0, 1, 1], [], []>} : vector<32x32xf32>, vector<32x4xf32>, vector<32x4xf32> -> vector<32x4xf32>
    %cst_10 = arith.constant dense<0.000000e+00> : vector<32xf32>
    %10 = vector.multi_reduction <add>, %9, %cst_10 [1] : vector<32x4xf32> to vector<32xf32>
    %11 = vector.shape_cast %10 : vector<32xf32> to vector<32x1xf32>
    %12 = arith.mulf %7, %7 : vector<32x1xf32>
    %13 = arith.subf %11, %12 : vector<32x1xf32>
    %cst_11 = arith.constant 0.000000e+00 : f32
    %14 = vector.broadcast %cst_11 : f32 to vector<32x1xf32>
    %15 = arith.maximumf %13, %14 : vector<32x1xf32>
    %16 = vector.broadcast %7 : vector<32x1xf32> to vector<32x4xf32>
    %17 = arith.subf %1, %16 : vector<32x4xf32>
    %cst_12 = arith.constant 9.99999974E-6 : f32
    %18 = vector.broadcast %cst_12 : f32 to vector<32x1xf32>
    %19 = arith.addf %15, %18 : vector<32x1xf32>
    %20 = math.rsqrt %19 : vector<32x1xf32>
    %21 = vector.broadcast %20 : vector<32x1xf32> to vector<32x4xf32>
    %22 = arith.mulf %17, %21 : vector<32x4xf32>
    %23 = vector.broadcast %3 : vector<32x1xf32> to vector<32x4xf32>
    %24 = arith.mulf %22, %23 : vector<32x4xf32>
    %25 = vector.broadcast %4 : vector<32x1xf32> to vector<32x4xf32>
    %26 = arith.addf %24, %25 : vector<32x4xf32>
    %c0_13 = arith.constant 0 : index
    %c0_14 = arith.constant 0 : index
    %27 = vector.load %arg5[%c0_13, %c0_14] : memref<96x32xbf16, #tpu.memory_space<vmem>>, vector<96x32xbf16>
    %28 = arith.truncf %26 : vector<32x4xf32> to vector<32x4xbf16>
    %cst_15 = arith.constant dense<0.000000e+00> : vector<96x4xf32>
    %29 = tpu.matmul %27, %28, %cst_15 {dimension_numbers = #tpu.dot_dimension_numbers<[1], [0], [0], [1], [0, 0, 1, 1], [], []>} : vector<96x32xbf16>, vector<32x4xbf16>, vector<96x4xf32> -> vector<96x4xf32>
    %c0_16 = arith.constant 0 : index
    %c0_17 = arith.constant 0 : index
    %30 = vector.load %arg6[%c0_16, %c0_17] : memref<96x1xf32, #tpu.memory_space<vmem>>, vector<96x1xf32>
    %31 = vector.broadcast %30 : vector<96x1xf32> to vector<96x4xf32>
    %32 = arith.addf %29, %31 : vector<96x4xf32>
    %33 = vector.extract_strided_slice %32 {offsets = [0, 0], sizes = [8, 4], strides = [1, 1]} : vector<96x4xf32> to vector<8x4xf32>
    %cst_18 = arith.constant 0.594603539 : f32
    %34 = vector.broadcast %cst_18 : f32 to vector<8x4xf32>
    %35 = arith.mulf %33, %34 : vector<8x4xf32>
    %36 = vector.extract_strided_slice %32 {offsets = [8, 0], sizes = [8, 4], strides = [1, 1]} : vector<96x4xf32> to vector<8x4xf32>
    %cst_19 = arith.constant 0.594603539 : f32
    %37 = vector.broadcast %cst_19 : f32 to vector<8x4xf32>
    %38 = arith.mulf %36, %37 : vector<8x4xf32>
    %39 = vector.extract_strided_slice %32 {offsets = [16, 0], sizes = [8, 4], strides = [1, 1]} : vector<96x4xf32> to vector<8x4xf32>
    %40 = arith.truncf %35 : vector<8x4xf32> to vector<8x4xbf16>
    %41 = arith.truncf %38 : vector<8x4xf32> to vector<8x4xbf16>
    %cst_20 = arith.constant dense<0.000000e+00> : vector<4x4xf32>
    %42 = tpu.matmul %40, %41, %cst_20 {dimension_numbers = #tpu.dot_dimension_numbers<[0], [0], [1], [1], [0, 1, 1, 1], [], []>} : vector<8x4xbf16>, vector<8x4xbf16>, vector<4x4xf32> -> vector<4x4xf32>
    %cst_21 = arith.constant dense<0xFF800000> : vector<4xf32>
    %43 = vector.multi_reduction <maximumf>, %42, %cst_21 [1] : vector<4x4xf32> to vector<4xf32>
    %44 = vector.shape_cast %43 : vector<4xf32> to vector<4x1xf32>
    %45 = vector.broadcast %44 : vector<4x1xf32> to vector<4x4xf32>
    %46 = arith.subf %42, %45 : vector<4x4xf32>
    %47 = math.exp %46 : vector<4x4xf32>
    %cst_22 = arith.constant dense<0.000000e+00> : vector<4xf32>
    %48 = vector.multi_reduction <add>, %47, %cst_22 [1] : vector<4x4xf32> to vector<4xf32>
    %49 = vector.shape_cast %48 : vector<4xf32> to vector<4x1xf32>
    %50 = tpu.reciprocal %49 {approx = true} : vector<4x1xf32> -> vector<4x1xf32>
    %51 = vector.broadcast %50 : vector<4x1xf32> to vector<4x4xf32>
    %52 = arith.mulf %47, %51 : vector<4x4xf32>
    %53 = arith.truncf %39 : vector<8x4xf32> to vector<8x4xbf16>
    %54 = arith.truncf %52 : vector<4x4xf32> to vector<4x4xbf16>
    %cst_23 = arith.constant dense<0.000000e+00> : vector<8x4xf32>
    %55 = tpu.matmul %53, %54, %cst_23 {dimension_numbers = #tpu.dot_dimension_numbers<[1], [1], [0], [0], [0, 0, 1, 0], [], []>} : vector<8x4xbf16>, vector<4x4xbf16>, vector<8x4xf32> -> vector<8x4xf32>
    %c0_24 = arith.constant 0 : index
    %c0_25 = arith.constant 0 : index
    %56 = vector.load %arg10[%c0_24, %c0_25] : memref<32x4xf32, #tpu.memory_space<vmem>>, vector<8x4xf32>
    tpu.vector_store %arg10[%c0_24, %c0_25], %55 {strides = array<i32>} : memref<32x4xf32, #tpu.memory_space<vmem>>, vector<8x4xf32>,
    %57 = vector.extract_strided_slice %32 {offsets = [24, 0], sizes = [8, 4], strides = [1, 1]} : vector<96x4xf32> to vector<8x4xf32>
    %cst_26 = arith.constant 0.594603539 : f32
    %58 = vector.broadcast %cst_26 : f32 to vector<8x4xf32>
    %59 = arith.mulf %57, %58 : vector<8x4xf32>
    %60 = vector.extract_strided_slice %32 {offsets = [32, 0], sizes = [8, 4], strides = [1, 1]} : vector<96x4xf32> to vector<8x4xf32>
    %cst_27 = arith.constant 0.594603539 : f32
    %61 = vector.broadcast %cst_27 : f32 to vector<8x4xf32>
    %62 = arith.mulf %60, %61 : vector<8x4xf32>
    %63 = vector.extract_strided_slice %32 {offsets = [40, 0], sizes = [8, 4], strides = [1, 1]} : vector<96x4xf32> to vector<8x4xf32>
    %64 = arith.truncf %59 : vector<8x4xf32> to vector<8x4xbf16>
    %65 = arith.truncf %62 : vector<8x4xf32> to vector<8x4xbf16>
    %cst_28 = arith.constant dense<0.000000e+00> : vector<4x4xf32>
    %66 = tpu.matmul %64, %65, %cst_28 {dimension_numbers = #tpu.dot_dimension_numbers<[0], [0], [1], [1], [0, 1, 1, 1], [], []>} : vector<8x4xbf16>, vector<8x4xbf16>, vector<4x4xf32> -> vector<4x4xf32>
    %cst_29 = arith.constant dense<0xFF800000> : vector<4xf32>
    %67 = vector.multi_reduction <maximumf>, %66, %cst_29 [1] : vector<4x4xf32> to vector<4xf32>
    %68 = vector.shape_cast %67 : vector<4xf32> to vector<4x1xf32>
    %69 = vector.broadcast %68 : vector<4x1xf32> to vector<4x4xf32>
    %70 = arith.subf %66, %69 : vector<4x4xf32>
    %71 = math.exp %70 : vector<4x4xf32>
    %cst_30 = arith.constant dense<0.000000e+00> : vector<4xf32>
    %72 = vector.multi_reduction <add>, %71, %cst_30 [1] : vector<4x4xf32> to vector<4xf32>
    %73 = vector.shape_cast %72 : vector<4xf32> to vector<4x1xf32>
    %74 = tpu.reciprocal %73 {approx = true} : vector<4x1xf32> -> vector<4x1xf32>
    %75 = vector.broadcast %74 : vector<4x1xf32> to vector<4x4xf32>
    %76 = arith.mulf %71, %75 : vector<4x4xf32>
    %77 = arith.truncf %63 : vector<8x4xf32> to vector<8x4xbf16>
    %78 = arith.truncf %76 : vector<4x4xf32> to vector<4x4xbf16>
    %cst_31 = arith.constant dense<0.000000e+00> : vector<8x4xf32>
    %79 = tpu.matmul %77, %78, %cst_31 {dimension_numbers = #tpu.dot_dimension_numbers<[1], [1], [0], [0], [0, 0, 1, 0], [], []>} : vector<8x4xbf16>, vector<4x4xbf16>, vector<8x4xf32> -> vector<8x4xf32>
    %c8 = arith.constant 8 : index
    %c0_32 = arith.constant 0 : index
    %80 = vector.load %arg10[%c8, %c0_32] : memref<32x4xf32, #tpu.memory_space<vmem>>, vector<8x4xf32>
    tpu.vector_store %arg10[%c8, %c0_32], %79 {strides = array<i32>} : memref<32x4xf32, #tpu.memory_space<vmem>>, vector<8x4xf32>,
    %81 = vector.extract_strided_slice %32 {offsets = [48, 0], sizes = [8, 4], strides = [1, 1]} : vector<96x4xf32> to vector<8x4xf32>
    %cst_33 = arith.constant 0.594603539 : f32
    %82 = vector.broadcast %cst_33 : f32 to vector<8x4xf32>
    %83 = arith.mulf %81, %82 : vector<8x4xf32>
    %84 = vector.extract_strided_slice %32 {offsets = [56, 0], sizes = [8, 4], strides = [1, 1]} : vector<96x4xf32> to vector<8x4xf32>
    %cst_34 = arith.constant 0.594603539 : f32
    %85 = vector.broadcast %cst_34 : f32 to vector<8x4xf32>
    %86 = arith.mulf %84, %85 : vector<8x4xf32>
    %87 = vector.extract_strided_slice %32 {offsets = [64, 0], sizes = [8, 4], strides = [1, 1]} : vector<96x4xf32> to vector<8x4xf32>
    %88 = arith.truncf %83 : vector<8x4xf32> to vector<8x4xbf16>
    %89 = arith.truncf %86 : vector<8x4xf32> to vector<8x4xbf16>
    %cst_35 = arith.constant dense<0.000000e+00> : vector<4x4xf32>
    %90 = tpu.matmul %88, %89, %cst_35 {dimension_numbers = #tpu.dot_dimension_numbers<[0], [0], [1], [1], [0, 1, 1, 1], [], []>} : vector<8x4xbf16>, vector<8x4xbf16>, vector<4x4xf32> -> vector<4x4xf32>
    %cst_36 = arith.constant dense<0xFF800000> : vector<4xf32>
    %91 = vector.multi_reduction <maximumf>, %90, %cst_36 [1] : vector<4x4xf32> to vector<4xf32>
    %92 = vector.shape_cast %91 : vector<4xf32> to vector<4x1xf32>
    %93 = vector.broadcast %92 : vector<4x1xf32> to vector<4x4xf32>
    %94 = arith.subf %90, %93 : vector<4x4xf32>
    %95 = math.exp %94 : vector<4x4xf32>
    %cst_37 = arith.constant dense<0.000000e+00> : vector<4xf32>
    %96 = vector.multi_reduction <add>, %95, %cst_37 [1] : vector<4x4xf32> to vector<4xf32>
    %97 = vector.shape_cast %96 : vector<4xf32> to vector<4x1xf32>
    %98 = tpu.reciprocal %97 {approx = true} : vector<4x1xf32> -> vector<4x1xf32>
    %99 = vector.broadcast %98 : vector<4x1xf32> to vector<4x4xf32>
    %100 = arith.mulf %95, %99 : vector<4x4xf32>
    %101 = arith.truncf %87 : vector<8x4xf32> to vector<8x4xbf16>
    %102 = arith.truncf %100 : vector<4x4xf32> to vector<4x4xbf16>
    %cst_38 = arith.constant dense<0.000000e+00> : vector<8x4xf32>
    %103 = tpu.matmul %101, %102, %cst_38 {dimension_numbers = #tpu.dot_dimension_numbers<[1], [1], [0], [0], [0, 0, 1, 0], [], []>} : vector<8x4xbf16>, vector<4x4xbf16>, vector<8x4xf32> -> vector<8x4xf32>
    %c16 = arith.constant 16 : index
    %c0_39 = arith.constant 0 : index
    %104 = vector.load %arg10[%c16, %c0_39] : memref<32x4xf32, #tpu.memory_space<vmem>>, vector<8x4xf32>
    tpu.vector_store %arg10[%c16, %c0_39], %103 {strides = array<i32>} : memref<32x4xf32, #tpu.memory_space<vmem>>, vector<8x4xf32>,
    %105 = vector.extract_strided_slice %32 {offsets = [72, 0], sizes = [8, 4], strides = [1, 1]} : vector<96x4xf32> to vector<8x4xf32>
    %cst_40 = arith.constant 0.594603539 : f32
    %106 = vector.broadcast %cst_40 : f32 to vector<8x4xf32>
    %107 = arith.mulf %105, %106 : vector<8x4xf32>
    %108 = vector.extract_strided_slice %32 {offsets = [80, 0], sizes = [8, 4], strides = [1, 1]} : vector<96x4xf32> to vector<8x4xf32>
    %cst_41 = arith.constant 0.594603539 : f32
    %109 = vector.broadcast %cst_41 : f32 to vector<8x4xf32>
    %110 = arith.mulf %108, %109 : vector<8x4xf32>
    %111 = vector.extract_strided_slice %32 {offsets = [88, 0], sizes = [8, 4], strides = [1, 1]} : vector<96x4xf32> to vector<8x4xf32>
    %112 = arith.truncf %107 : vector<8x4xf32> to vector<8x4xbf16>
    %113 = arith.truncf %110 : vector<8x4xf32> to vector<8x4xbf16>
    %cst_42 = arith.constant dense<0.000000e+00> : vector<4x4xf32>
    %114 = tpu.matmul %112, %113, %cst_42 {dimension_numbers = #tpu.dot_dimension_numbers<[0], [0], [1], [1], [0, 1, 1, 1], [], []>} : vector<8x4xbf16>, vector<8x4xbf16>, vector<4x4xf32> -> vector<4x4xf32>
    %cst_43 = arith.constant dense<0xFF800000> : vector<4xf32>
    %115 = vector.multi_reduction <maximumf>, %114, %cst_43 [1] : vector<4x4xf32> to vector<4xf32>
    %116 = vector.shape_cast %115 : vector<4xf32> to vector<4x1xf32>
    %117 = vector.broadcast %116 : vector<4x1xf32> to vector<4x4xf32>
    %118 = arith.subf %114, %117 : vector<4x4xf32>
    %119 = math.exp %118 : vector<4x4xf32>
    %cst_44 = arith.constant dense<0.000000e+00> : vector<4xf32>
    %120 = vector.multi_reduction <add>, %119, %cst_44 [1] : vector<4x4xf32> to vector<4xf32>
    %121 = vector.shape_cast %120 : vector<4xf32> to vector<4x1xf32>
    %122 = tpu.reciprocal %121 {approx = true} : vector<4x1xf32> -> vector<4x1xf32>
    %123 = vector.broadcast %122 : vector<4x1xf32> to vector<4x4xf32>
    %124 = arith.mulf %119, %123 : vector<4x4xf32>
    %125 = arith.truncf %111 : vector<8x4xf32> to vector<8x4xbf16>
    %126 = arith.truncf %124 : vector<4x4xf32> to vector<4x4xbf16>
    %cst_45 = arith.constant dense<0.000000e+00> : vector<8x4xf32>
    %127 = tpu.matmul %125, %126, %cst_45 {dimension_numbers = #tpu.dot_dimension_numbers<[1], [1], [0], [0], [0, 0, 1, 0], [], []>} : vector<8x4xbf16>, vector<4x4xbf16>, vector<8x4xf32> -> vector<8x4xf32>
    %c24 = arith.constant 24 : index
    %c0_46 = arith.constant 0 : index
    %128 = vector.load %arg10[%c24, %c0_46] : memref<32x4xf32, #tpu.memory_space<vmem>>, vector<8x4xf32>
    tpu.vector_store %arg10[%c24, %c0_46], %127 {strides = array<i32>} : memref<32x4xf32, #tpu.memory_space<vmem>>, vector<8x4xf32>,
    %c0_47 = arith.constant 0 : index
    %c0_48 = arith.constant 0 : index
    %129 = vector.load %arg7[%c0_47, %c0_48] : memref<32x32xbf16, #tpu.memory_space<vmem>>, vector<32x32xbf16>
    %c0_49 = arith.constant 0 : index
    %c0_50 = arith.constant 0 : index
    %130 = vector.load %arg10[%c0_49, %c0_50] : memref<32x4xf32, #tpu.memory_space<vmem>>, vector<32x4xf32>
    %131 = arith.truncf %130 : vector<32x4xf32> to vector<32x4xbf16>
    %cst_51 = arith.constant dense<0.000000e+00> : vector<32x4xf32>
    %132 = tpu.matmul %129, %131, %cst_51 {dimension_numbers = #tpu.dot_dimension_numbers<[1], [0], [0], [1], [0, 0, 1, 1], [], []>} : vector<32x32xbf16>, vector<32x4xbf16>, vector<32x4xf32> -> vector<32x4xf32>
    %c0_52 = arith.constant 0 : index
    %c0_53 = arith.constant 0 : index
    %133 = vector.load %arg8[%c0_52, %c0_53] : memref<32x1xf32, #tpu.memory_space<vmem>>, vector<32x1xf32>
    %134 = vector.broadcast %133 : vector<32x1xf32> to vector<32x4xf32>
    %135 = arith.addf %132, %134 : vector<32x4xf32>
    %136 = arith.addf %1, %135 : vector<32x4xf32>
    %c0_54 = arith.constant 0 : index
    %c0_55 = arith.constant 0 : index
    %c0_56 = arith.constant 0 : index
    %137 = vector.load %arg9[%c0_54, %c0_55, %c0_56] : memref<1x32x4xf32, #tpu.memory_space<vmem>>, vector<1x32x4xf32>
    %138 = vector.shape_cast %137 : vector<1x32x4xf32> to vector<32x4xf32>
    %139 = vector.shape_cast %136 : vector<32x4xf32> to vector<1x32x4xf32>
    tpu.vector_store %arg9[%c0_54, %c0_55, %c0_56], %139 {strides = array<i32>} : memref<1x32x4xf32, #tpu.memory_space<vmem>>, vector<1x32x4xf32>,
    return
  }
  func.func @transform_0(%arg0: i32) -> (i32, i32, i32) {
    %c0_i32 = arith.constant 0 : i32
    %c0_i32_0 = arith.constant 0 : i32
    %c0_i32_1 = arith.constant 0 : i32
    return %arg0, %c0_i32, %c0_i32_0 : i32, i32, i32
  }
  func.func @transform_1(%arg0: i32) -> (i32, i32) {
    %c0_i32 = arith.constant 0 : i32
    %c0_i32_0 = arith.constant 0 : i32
    %c0_i32_1 = arith.constant 0 : i32
    return %c0_i32, %c0_i32_0 : i32, i32
  }
  func.func @transform_2(%arg0: i32) -> (i32, i32) {
    %c0_i32 = arith.constant 0 : i32
    %c0_i32_0 = arith.constant 0 : i32
    %c0_i32_1 = arith.constant 0 : i32
    return %c0_i32, %c0_i32_0 : i32, i32
  }
  func.func @transform_3(%arg0: i32) -> (i32, i32) {
    %c0_i32 = arith.constant 0 : i32
    %c0_i32_0 = arith.constant 0 : i32
    %c0_i32_1 = arith.constant 0 : i32
    return %c0_i32, %c0_i32_0 : i32, i32
  }
  func.func @transform_4(%arg0: i32) -> (i32, i32) {
    %c0_i32 = arith.constant 0 : i32
    %c0_i32_0 = arith.constant 0 : i32
    %c0_i32_1 = arith.constant 0 : i32
    return %c0_i32, %c0_i32_0 : i32, i32
  }
  func.func @transform_5(%arg0: i32) -> (i32, i32) {
    %c0_i32 = arith.constant 0 : i32
    %c0_i32_0 = arith.constant 0 : i32
    %c0_i32_1 = arith.constant 0 : i32
    return %c0_i32, %c0_i32_0 : i32, i32
  }
  func.func @transform_6(%arg0: i32) -> (i32, i32) {
    %c0_i32 = arith.constant 0 : i32
    %c0_i32_0 = arith.constant 0 : i32
    %c0_i32_1 = arith.constant 0 : i32
    return %c0_i32, %c0_i32_0 : i32, i32
  }
  func.func @transform_7(%arg0: i32) -> (i32, i32) {
    %c0_i32 = arith.constant 0 : i32
    %c0_i32_0 = arith.constant 0 : i32
    %c0_i32_1 = arith.constant 0 : i32
    return %c0_i32, %c0_i32_0 : i32, i32
  }
  func.func @transform_8(%arg0: i32) -> (i32, i32, i32) {
    %c0_i32 = arith.constant 0 : i32
    %c0_i32_0 = arith.constant 0 : i32
    %c0_i32_1 = arith.constant 0 : i32
    return %arg0, %c0_i32, %c0_i32_0 : i32, i32, i32
  }
}

</mosaic_0001>

<llo_original>
// kernel: _lambda_.13
$region0: #{_lambda_.13}
  #allocation0 [shape = 'u32[]', space=smem, size = 0x4, offset = 0x4, fixed_abs, tag = 'smem constant byte address 0x4 - core index']
  #allocation1 [shape = 'u32[72,128]{1,0:T(1,128)}', space=vmem, size = 0x9000, scoped, tag = 'internal scratch']
  %s0 = inlined_call_operand.vmem [shape: bf16[16,48], index: 0, kind: input, shape index: {}]
  %s1 = inlined_call_operand.vmem [shape: bf16[48,32], index: 1, kind: input, shape index: {}]
  %s2 = inlined_call_operand.vmem [shape: f32[16,1], index: 2, kind: input, shape index: {}]
  %s3 = inlined_call_operand.vmem [shape: f32[16,32], index: 3, kind: output, shape index: {}]
  %s4 = sld [smem:[#allocation0]]
  $region22: #{_lambda_.13} parent=0
    _
  %s6 = ssub.s32 1, %s4
  %s7 = scalar_select 0, %s6, %s4
  // Predicated region
  $region2: #{_lambda_.13} parent=0 // pred_check
    _
  $region3: #{_lambda_.13} parent=0 // pred_check_branch
    %9 = sbr.rel (0) target = $region5
  $region4: #{_lambda_.13} parent=0 // pred_region
    _
  $region5: #{_lambda_.13} parent=0 // pred_fallthru
    _
  // Predicated region
  $region6: #{_lambda_.13} parent=0 // pred_check
    _
  $region7: #{_lambda_.13} parent=0 // pred_check_branch
    %11 = sbr.rel (0) target = $region9
  $region8: #{_lambda_.13} parent=0 // pred_region
    _
  $region9: #{_lambda_.13} parent=0 // pred_fallthru
    _
  // Predicated region
  $region10: #{_lambda_.13} parent=0 // pred_check
    _
  $region11: #{_lambda_.13} parent=0 // pred_check_branch
    %13 = sbr.rel (0) target = $region13
  $region12: #{_lambda_.13} parent=0 // pred_region
    _
  $region13: #{_lambda_.13} parent=0 // pred_fallthru
    _
  %v15 = vld [vmem:[%s0] sm:$0xf]
  %v16 = vld [vmem:[%s0 + $0x4] sm:$0xf]
  %v17 = vld [vmem:[%s1] sm:$0xf]
  %v18 = vld [vmem:[%s1 + $0x4] sm:$0xf]
  %v19 = vld [vmem:[%s1 + $0x8] sm:$0xf]
  %v20 = vld [vmem:[%s1 + $0xc] sm:$0xf]
  %v21 = vld [vmem:[%s1 + $0x10] sm:$0xf]
  %v22 = vld [vmem:[%s1 + $0x14] sm:$0xf]
  %v23 = vld [vmem:[%s2] sm:$0xff]
  %v24 = vld [vmem:[%s2 + $0x8] sm:$0xff]
  %26 = vset.pattern.permute.xlu0 0
  %27 = vperm.xlu0 %26, %v23
  %v28 = vpop.permute.xlu0 %27
  %31 = vset.pattern.permute.xlu0 0
  %32 = vperm.xlu0 %31, %v24
  %v33 = vpop.permute.xlu0 %32
  %v37 = vunpack.c.l.b16 %v15
  %v38 = vunpack.c.l.b16 %v16
  %v39 = vpack.c.b16 %v38, %v37
  %v46 = vunpack.c.l.b16 %v17
  %v47 = vunpack.c.l.b16 %v18
  %v48 = vunpack.c.l.b16 %v19
  %v49 = vunpack.c.l.b16 %v20
  %v50 = vunpack.c.l.b16 %v21
  %v51 = vunpack.c.l.b16 %v22
  %v52 = vpack.c.b16 %v47, %v46
  %v53 = vpack.c.b16 %v49, %v48
  %v54 = vpack.c.b16 %v51, %v50
  %vm58 = vcmask 392192
  %v60 = vsel %vm58, %v39, 0
  %62 = vmatpush.bf16.msra.mxu0 0
  %63 = vmatpush.bf16.msra.mxu0 0
  %64 = vmatpush.bf16.msra.mxu0 0
  %65 = vmatpush.bf16.msra.mxu0 0
  %66 = vmatpush.bf16.msra.mxu0 0
  %67 = vmatpush.bf16.msra.mxu0 %v54
  %68 = vmatpush.bf16.msra.mxu0 %v53
  %69 = vmatpush.bf16.msra.mxu0 %v52
  %70 = vmatmul.bf16.gmra.mxu0 %v60
  %v71 = vpop.f32.mrf.mxu0
  %v72 = vadd.f32 %v28, %v71
  %v73 = vpop.f32.mrf.mxu0
  %v74 = vadd.f32 %v33, %v73
  %75 = vdwg.mxu0
  %vm76 = vcmask 261120
  %77 = vst.msk [vmem:[%s3] sm:$0xff] %vm76, %v72
  %78 = vst.msk [vmem:[%s3 + $0x8] sm:$0xff] %vm76, %v74
  // Predicated region
  $region14: #{_lambda_.13} parent=0 // pred_check
    _
  $region15: #{_lambda_.13} parent=0 // pred_check_branch
    %80 = sbr.rel (0) target = $region17
  $region16: #{_lambda_.13} parent=0 // pred_region
    _
  $region17: #{_lambda_.13} parent=0 // pred_fallthru
    _
  // Predicated region
  $region18: #{_lambda_.13} parent=0 // pred_check
    _
  $region19: #{_lambda_.13} parent=0 // pred_check_branch
    %82 = sbr.rel (0) target = $region21
  $region20: #{_lambda_.13} parent=0 // pred_region
    _
  $region21: #{_lambda_.13} parent=0 // pred_fallthru
    _

// kernel: _lambda_.14
$region0: #{_lambda_.14}
  #allocation0 [shape = 'u32[]', space=smem, size = 0x4, offset = 0x4, fixed_abs, tag = 'smem constant byte address 0x4 - core index']
  #allocation1 [shape = 'u32[72,128]{1,0:T(1,128)}', space=vmem, size = 0x9000, scoped, tag = 'internal scratch']
  #allocation2 [shape = 'f32[16,18]{1,0:T(8,128)}', space=vmem, size = 0x2000, scoped, tag = 'scratch operand']
  %s0 = inlined_call_operand.vmem [shape: f32[2,16,16], index: 0, kind: input, shape index: {}]
  %s1 = inlined_call_operand.vmem [shape: f32[16,16], index: 1, kind: input, shape index: {}]
  %s2 = inlined_call_operand.vmem [shape: f32[16,1], index: 2, kind: input, shape index: {}]
  %s3 = inlined_call_operand.vmem [shape: f32[16,1], index: 3, kind: input, shape index: {}]
  %s4 = inlined_call_operand.vmem [shape: bf16[3,16,16], index: 4, kind: input, shape index: {}]
  %s5 = inlined_call_operand.vmem [shape: f32[16,1], index: 5, kind: input, shape index: {}]
  %s6 = inlined_call_operand.vmem [shape: f32[16,1], index: 6, kind: input, shape index: {}]
  %s7 = inlined_call_operand.vmem [shape: f32[16,1], index: 7, kind: input, shape index: {}]
  %s8 = inlined_call_operand.vmem [shape: bf16[3,16,16], index: 8, kind: input, shape index: {}]
  %s9 = inlined_call_operand.vmem [shape: f32[16,1], index: 9, kind: input, shape index: {}]
  %s10 = inlined_call_operand.vmem [shape: f32[2,16,16], index: 10, kind: output, shape index: {}]
  %s11 = sld [smem:[#allocation0]]
  $region73: #{_lambda_.14} parent=0
    _
  %s13 = ssub.s32 1, %s11
  %s14 = scalar_select 0, %s13, %s11
  loop: start=0, step=1, limit=4
  $region2: #{_lambda_.14} parent=0 // loop_pre_header
    _
  $region3: #{_lambda_.14} parent=0 // loop_header
    %s16 = sphi 0, %s20
    %p17 = scmp.ge.s32.totalorder %s16, 4
    %s26 = sphi 0, %s28
    %s29 = sphi 0, %s26
    %s30 = sphi 0, %s29
    %s46 = sphi 0, %s30
    %s50 = sphi 0, %s50
    %s52 = sphi 0, %s50
    %s53 = sphi 0, %s52
    %s67 = sphi 0, %s53
    %s71 = sphi 0, %s71
    %s73 = sphi 0, %s71
    %s74 = sphi 0, %s73
    %s88 = sphi 0, %s74
    %s92 = sphi 0, %s92
    %s94 = sphi 0, %s92
    %s95 = sphi 0, %s94
    %s109 = sphi 0, %s95
    %s113 = sphi 0, %s113
    %s115 = sphi 0, %s113
    %s116 = sphi 0, %s115
    %s130 = sphi 0, %s116
    %s134 = sphi 0, %s134
    %s136 = sphi 0, %s134
    %s137 = sphi 0, %s136
    %s151 = sphi 0, %s137
    %s155 = sphi 0, %s155
    %s157 = sphi 0, %s155
    %s158 = sphi 0, %s157
    %s172 = sphi 0, %s158
    %s176 = sphi 0, %s176
    %s178 = sphi 0, %s176
    %s179 = sphi 0, %s178
    %s193 = sphi 0, %s179
    %s197 = sphi 0, %s197
    %s199 = sphi 0, %s197
    %s200 = sphi 0, %s199
    %s214 = sphi 0, %s200
    %s218 = sphi 0, %s218
    %s220 = sphi 0, %s218
    %s221 = sphi 0, %s220
    %s235 = sphi 0, %s221
    %s241 = sphi 0, %s243
    %s244 = sphi 0, %s241
    %s245 = sphi 0, %s244
    %s261 = sphi 0, %s245
  $region4: #{_lambda_.14} parent=0 // loop_header_branch
    %19 = sbr.rel (%p17) target = $region8
  $region5: #{_lambda_.14} parent=0 // loop_body
    %s21 = ssub.s32 %s16, 1
    %s22 = ssub.s32 %s16, 2
    %s23 = sadd.s32 %s16, 1
    %s24 = ssub.s32 %s16, %s23
    %p25 = scmp.eq.s32.totalorder %s24, 0
    %s27 = sadd.s32 %s26, 1
    %s28 = scalar_select %p25, %s26, %s27
    %p31 = pneg %p25
    %p32 = scmp.eq.s32.totalorder %s16, 1
    %p33 = por %p31, %p32
    %p34 = scmp.ne.s32.totalorder %s26, %s29
    %p35 = scmp.eq.s32.totalorder %s16, 0
    %p36 = por %p34, %p35
    %p37 = scmp.ne.s32.totalorder %s26, %s29
    %p38 = scmp.eq.s32.totalorder %s21, 1
    %p39 = por %p37, %p38
    %p40 = scmp.ne.s32.totalorder %s29, %s30
    %p41 = scmp.eq.s32.totalorder %s21, 0
    %p42 = por %p40, %p41
    %p43 = scmp.ne.s32.totalorder %s29, %s30
    %p44 = scmp.eq.s32.totalorder %s22, 1
    %p45 = por %p43, %p44
    %p47 = scmp.ne.s32.totalorder %s30, %s46
    %p48 = scmp.eq.s32.totalorder %s22, 0
    %p49 = por %p47, %p48
    %s51 = sadd.s32 %s50, 1
    %p54 = scmp.eq.s32.totalorder %s16, 1
    %p55 = scmp.ne.s32.totalorder %s50, %s52
    %p56 = scmp.eq.s32.totalorder %s16, 0
    %p57 = por %p55, %p56
    %p58 = scmp.ne.s32.totalorder %s50, %s52
    %p59 = scmp.eq.s32.totalorder %s21, 1
    %p60 = por %p58, %p59
    %p61 = scmp.ne.s32.totalorder %s52, %s53
    %p62 = scmp.eq.s32.totalorder %s21, 0
    %p63 = por %p61, %p62
    %p64 = scmp.ne.s32.totalorder %s52, %s53
    %p65 = scmp.eq.s32.totalorder %s22, 1
    %p66 = por %p64, %p65
    %p68 = scmp.ne.s32.totalorder %s53, %s67
    %p69 = scmp.eq.s32.totalorder %s22, 0
    %p70 = por %p68, %p69
    %s72 = sadd.s32 %s71, 1
    %p75 = scmp.eq.s32.totalorder %s16, 1
    %p76 = scmp.ne.s32.totalorder %s71, %s73
    %p77 = scmp.eq.s32.totalorder %s16, 0
    %p78 = por %p76, %p77
    %p79 = scmp.ne.s32.totalorder %s71, %s73
    %p80 = scmp.eq.s32.totalorder %s21, 1
    %p81 = por %p79, %p80
    %p82 = scmp.ne.s32.totalorder %s73, %s74
    %p83 = scmp.eq.s32.totalorder %s21, 0
    %p84 = por %p82, %p83
    %p85 = scmp.ne.s32.totalorder %s73, %s74
    %p86 = scmp.eq.s32.totalorder %s22, 1
    %p87 = por %p85, %p86
    %p89 = scmp.ne.s32.totalorder %s74, %s88
    %p90 = scmp.eq.s32.totalorder %s22, 0
    %p91 = por %p89, %p90
    %s93 = sadd.s32 %s92, 1
    %p96 = scmp.eq.s32.totalorder %s16, 1
    %p97 = scmp.ne.s32.totalorder %s92, %s94
    %p98 = scmp.eq.s32.totalorder %s16, 0
    %p99 = por %p97, %p98
    %p100 = scmp.ne.s32.totalorder %s92, %s94
    %p101 = scmp.eq.s32.totalorder %s21, 1
    %p102 = por %p100, %p101
    %p103 = scmp.ne.s32.totalorder %s94, %s95
    %p104 = scmp.eq.s32.totalorder %s21, 0
    %p105 = por %p103, %p104
    %p106 = scmp.ne.s32.totalorder %s94, %s95
    %p107 = scmp.eq.s32.totalorder %s22, 1
    %p108 = por %p106, %p107
    %p110 = scmp.ne.s32.totalorder %s95, %s109
    %p111 = scmp.eq.s32.totalorder %s22, 0
    %p112 = por %p110, %p111
    %s114 = sadd.s32 %s113, 1
    %p117 = scmp.eq.s32.totalorder %s16, 1
    %p118 = scmp.ne.s32.totalorder %s113, %s115
    %p119 = scmp.eq.s32.totalorder %s16, 0
    %p120 = por %p118, %p119
    %p121 = scmp.ne.s32.totalorder %s113, %s115
    %p122 = scmp.eq.s32.totalorder %s21, 1
    %p123 = por %p121, %p122
    %p124 = scmp.ne.s32.totalorder %s115, %s116
    %p125 = scmp.eq.s32.totalorder %s21, 0
    %p126 = por %p124, %p125
    %p127 = scmp.ne.s32.totalorder %s115, %s116
    %p128 = scmp.eq.s32.totalorder %s22, 1
    %p129 = por %p127, %p128
    %p131 = scmp.ne.s32.totalorder %s116, %s130
    %p132 = scmp.eq.s32.totalorder %s22, 0
    %p133 = por %p131, %p132
    %s135 = sadd.s32 %s134, 1
    %p138 = scmp.eq.s32.totalorder %s16, 1
    %p139 = scmp.ne.s32.totalorder %s134, %s136
    %p140 = scmp.eq.s32.totalorder %s16, 0
    %p141 = por %p139, %p140
    %p142 = scmp.ne.s32.totalorder %s134, %s136
    %p143 = scmp.eq.s32.totalorder %s21, 1
    %p144 = por %p142, %p143
    %p145 = scmp.ne.s32.totalorder %s136, %s137
    %p146 = scmp.eq.s32.totalorder %s21, 0
    %p147 = por %p145, %p146
    %p148 = scmp.ne.s32.totalorder %s136, %s137
    %p149 = scmp.eq.s32.totalorder %s22, 1
    %p150 = por %p148, %p149
    %p152 = scmp.ne.s32.totalorder %s137, %s151
    %p153 = scmp.eq.s32.totalorder %s22, 0
    %p154 = por %p152, %p153
    %s156 = sadd.s32 %s155, 1
    %p159 = scmp.eq.s32.totalorder %s16, 1
    %p160 = scmp.ne.s32.totalorder %s155, %s157
    %p161 = scmp.eq.s32.totalorder %s16, 0
    %p162 = por %p160, %p161
    %p163 = scmp.ne.s32.totalorder %s155, %s157
    %p164 = scmp.eq.s32.totalorder %s21, 1
    %p165 = por %p163, %p164
    %p166 = scmp.ne.s32.totalorder %s157, %s158
    %p167 = scmp.eq.s32.totalorder %s21, 0
    %p168 = por %p166, %p167
    %p169 = scmp.ne.s32.totalorder %s157, %s158
    %p170 = scmp.eq.s32.totalorder %s22, 1
    %p171 = por %p169, %p170
    %p173 = scmp.ne.s32.totalorder %s158, %s172
    %p174 = scmp.eq.s32.totalorder %s22, 0
    %p175 = por %p173, %p174
    %s177 = sadd.s32 %s176, 1
    %p180 = scmp.eq.s32.totalorder %s16, 1
    %p181 = scmp.ne.s32.totalorder %s176, %s178
    %p182 = scmp.eq.s32.totalorder %s16, 0
    %p183 = por %p181, %p182
    %p184 = scmp.ne.s32.totalorder %s176, %s178
    %p185 = scmp.eq.s32.totalorder %s21, 1
    %p186 = por %p184, %p185
    %p187 = scmp.ne.s32.totalorder %s178, %s179
    %p188 = scmp.eq.s32.totalorder %s21, 0
    %p189 = por %p187, %p188
    %p190 = scmp.ne.s32.totalorder %s178, %s179
    %p191 = scmp.eq.s32.totalorder %s22, 1
    %p192 = por %p190, %p191
    %p194 = scmp.ne.s32.totalorder %s179, %s193
    %p195 = scmp.eq.s32.totalorder %s22, 0
    %p196 = por %p194, %p195
    %s198 = sadd.s32 %s197, 1
    %p201 = scmp.eq.s32.totalorder %s16, 1
    %p202 = scmp.ne.s32.totalorder %s197, %s199
    %p203 = scmp.eq.s32.totalorder %s16, 0
    %p204 = por %p202, %p203
    %p205 = scmp.ne.s32.totalorder %s197, %s199
    %p206 = scmp.eq.s32.totalorder %s21, 1
    %p207 = por %p205, %p206
    %p208 = scmp.ne.s32.totalorder %s199, %s200
    %p209 = scmp.eq.s32.totalorder %s21, 0
    %p210 = por %p208, %p209
    %p211 = scmp.ne.s32.totalorder %s199, %s200
    %p212 = scmp.eq.s32.totalorder %s22, 1
    %p213 = por %p211, %p212
    %p215 = scmp.ne.s32.totalorder %s200, %s214
    %p216 = scmp.eq.s32.totalorder %s22, 0
    %p217 = por %p215, %p216
    %s219 = sadd.s32 %s218, 1
    %p222 = scmp.eq.s32.totalorder %s16, 1
    %p223 = scmp.ne.s32.totalorder %s218, %s220
    %p224 = scmp.eq.s32.totalorder %s16, 0
    %p225 = por %p223, %p224
    %p226 = scmp.ne.s32.totalorder %s218, %s220
    %p227 = scmp.eq.s32.totalorder %s21, 1
    %p228 = por %p226, %p227
    %p229 = scmp.ne.s32.totalorder %s220, %s221
    %p230 = scmp.eq.s32.totalorder %s21, 0
    %p231 = por %p229, %p230
    %p232 = scmp.ne.s32.totalorder %s220, %s221
    %p233 = scmp.eq.s32.totalorder %s22, 1
    %p234 = por %p232, %p233
    %p236 = scmp.ne.s32.totalorder %s221, %s235
    %p237 = scmp.eq.s32.totalorder %s22, 0
    %p238 = por %p236, %p237
    %s239 = ssub.s32 %s16, %s23
    %p240 = scmp.eq.s32.totalorder %s239, 0
    %s242 = sadd.s32 %s241, 1
    %s243 = scalar_select %p240, %s241, %s242
    %p246 = pneg %p240
    %p247 = scmp.eq.s32.totalorder %s16, 1
    %p248 = por %p246, %p247
    %p249 = scmp.ne.s32.totalorder %s241, %s244
    %p250 = scmp.eq.s32.totalorder %s16, 0
    %p251 = por %p249, %p250
    %p252 = scmp.ne.s32.totalorder %s241, %s244
    %p253 = scmp.eq.s32.totalorder %s21, 1
    %p254 = por %p252, %p253
    %p255 = scmp.ne.s32.totalorder %s244, %s245
    %p256 = scmp.eq.s32.totalorder %s21, 0
    %p257 = por %p255, %p256
    %p258 = scmp.ne.s32.totalorder %s244, %s245
    %p259 = scmp.eq.s32.totalorder %s22, 1
    %p260 = por %p258, %p259
    %p262 = scmp.ne.s32.totalorder %s245, %s261
    %p263 = scmp.eq.s32.totalorder %s22, 0
    %p264 = por %p262, %p263
    %p265 = scmp.le.s32.totalorder 1, %s16
    %p266 = scmp.lt.s32.totalorder %s16, 3
    %p267 = pnand %p265, %p266
    %p268 = pneg %p267
    // Predicated region
    $region9: #{_lambda_.14} parent=5 // pred_check
      _
    $region10: #{_lambda_.14} parent=5 // pred_check_branch
      %270 = sbr.rel (%p267) target = $region12
    $region11: #{_lambda_.14} parent=5 // pred_region
      %s271 = ssub.s32 %s16, 1
      // Predicated region
      $region13: #{_lambda_.14} parent=11 // pred_check
        %p272 = pneg %p63
      $region14: #{_lambda_.14} parent=11 // pred_check_branch
        %274 = sbr.rel (%p272) target = $region16
      $region15: #{_lambda_.14} parent=11 // pred_region
        _
      $region16: #{_lambda_.14} parent=11 // pred_fallthru
        _
      // Predicated region
      $region17: #{_lambda_.14} parent=11 // pred_check
        %p275 = pneg %p84
      $region18: #{_lambda_.14} parent=11 // pred_check_branch
        %277 = sbr.rel (%p275) target = $region20
      $region19: #{_lambda_.14} parent=11 // pred_region
        _
      $region20: #{_lambda_.14} parent=11 // pred_fallthru
        _
      // Predicated region
      $region21: #{_lambda_.14} parent=11 // pred_check
        %p278 = pneg %p105
      $region22: #{_lambda_.14} parent=11 // pred_check_branch
        %280 = sbr.rel (%p278) target = $region24
      $region23: #{_lambda_.14} parent=11 // pred_region
        _
      $region24: #{_lambda_.14} parent=11 // pred_fallthru
        _
      // Predicated region
      $region25: #{_lambda_.14} parent=11 // pred_check
        %p281 = pneg %p126
      $region26: #{_lambda_.14} parent=11 // pred_check_branch
        %283 = sbr.rel (%p281) target = $region28
      $region27: #{_lambda_.14} parent=11 // pred_region
        _
      $region28: #{_lambda_.14} parent=11 // pred_fallthru
        _
      // Predicated region
      $region29: #{_lambda_.14} parent=11 // pred_check
        %p284 = pneg %p147
      $region30: #{_lambda_.14} parent=11 // pred_check_branch
        %286 = sbr.rel (%p284) target = $region32
      $region31: #{_lambda_.14} parent=11 // pred_region
        _
      $region32: #{_lambda_.14} parent=11 // pred_fallthru
        _
      // Predicated region
      $region33: #{_lambda_.14} parent=11 // pred_check
        %p287 = pneg %p168
      $region34: #{_lambda_.14} parent=11 // pred_check_branch
        %289 = sbr.rel (%p287) target = $region36
      $region35: #{_lambda_.14} parent=11 // pred_region
        _
      $region36: #{_lambda_.14} parent=11 // pred_fallthru
        _
      // Predicated region
      $region37: #{_lambda_.14} parent=11 // pred_check
        %p290 = pneg %p189
      $region38: #{_lambda_.14} parent=11 // pred_check_branch
        %292 = sbr.rel (%p290) target = $region40
      $region39: #{_lambda_.14} parent=11 // pred_region
        _
      $region40: #{_lambda_.14} parent=11 // pred_fallthru
        _
      // Predicated region
      $region41: #{_lambda_.14} parent=11 // pred_check
        %p293 = pneg %p210
      $region42: #{_lambda_.14} parent=11 // pred_check_branch
        %295 = sbr.rel (%p293) target = $region44
      $region43: #{_lambda_.14} parent=11 // pred_region
        _
      $region44: #{_lambda_.14} parent=11 // pred_fallthru
        _
      // Predicated region
      $region45: #{_lambda_.14} parent=11 // pred_check
        %p296 = pneg %p231
      $region46: #{_lambda_.14} parent=11 // pred_check_branch
        %298 = sbr.rel (%p296) target = $region48
      $region47: #{_lambda_.14} parent=11 // pred_region
        _
      $region48: #{_lambda_.14} parent=11 // pred_fallthru
        _
    $region12: #{_lambda_.14} parent=5 // pred_fallthru
      _
    %p299 = scmp.lt.s32.totalorder %s16, 2
    // Predicated region
    $region49: #{_lambda_.14} parent=5 // pred_check
      %p300 = pneg %p299
    $region50: #{_lambda_.14} parent=5 // pred_check_branch
      %302 = sbr.rel (%p300) target = $region52
    $region51: #{_lambda_.14} parent=5 // pred_region
      // Predicated region
      $region53: #{_lambda_.14} parent=51 // pred_check
        %p303 = pneg %p36
      $region54: #{_lambda_.14} parent=51 // pred_check_branch
        %305 = sbr.rel (%p303) target = $region56
      $region55: #{_lambda_.14} parent=51 // pred_region
        %p306 = scmp.lt.s32.totalorder %s16, 1
        %s307 = scalar_select %p306, %s16, 1
        %s308 = smul.addr %s307, 2
        %s309 = smul.addr %s308, 8
        %s310 = scalar_lea.vmem %s0, %s309
      $region56: #{_lambda_.14} parent=51 // pred_fallthru
        _
    $region52: #{_lambda_.14} parent=5 // pred_fallthru
      _
    %p311 = scmp.le.s32.totalorder 1, %s16
    %p312 = scmp.lt.s32.totalorder %s16, 3
    %p313 = pnand %p311, %p312
    %p314 = pneg %p313
    // Predicated region
    $region57: #{_lambda_.14} parent=5 // pred_check
      _
    $region58: #{_lambda_.14} parent=5 // pred_check_branch
      %316 = sbr.rel (%p313) target = $region60
    $region59: #{_lambda_.14} parent=5 // pred_region
      %s317 = ssub.s32 %s16, 1
      %p318 = scmp.lt.s32.totalorder %s21, 1
      %s319 = scalar_select %p318, %s21, 1
      %s320 = smul.addr %s319, 2
      %s321 = smul.addr %s320, 8
      %s322 = scalar_lea.vmem %s0, %s321
      %p323 = pneg %p42
      %p324 = pneg %p39
      %p325 = pneg %p63
      %p326 = pneg %p60
      %p327 = pneg %p84
      %p328 = pneg %p81
      %p329 = pneg %p105
      %p330 = pneg %p102
      %p331 = pneg %p126
      %p332 = pneg %p123
      %p333 = pneg %p147
      %p334 = pneg %p144
      %p335 = pneg %p168
      %p336 = pneg %p165
      %p337 = pneg %p189
      %p338 = pneg %p186
      %p339 = pneg %p210
      %p340 = pneg %p207
      %p341 = pneg %p231
      %p342 = pneg %p228
      %p343 = pneg %p257
      %p344 = pneg %p254
      %p345 = scmp.lt.s32.totalorder %s21, 1
      %s346 = scalar_select %p345, %s21, 1
      %s347 = smul.addr %s346, 2
      %s348 = smul.addr %s347, 8
      %s349 = scalar_lea.vmem %s10, %s348
      %p350 = scmp.lt.s32.totalorder %s21, 1
      %s351 = scalar_select %p350, %s21, 1
      %s352 = smul.addr %s351, 2
      %s353 = smul.addr %s352, 8
      %s354 = scalar_lea.vmem %s0, %s353
      %p355 = scmp.lt.s32.totalorder %s21, 1
      %s356 = scalar_select %p355, %s21, 1
      %s357 = smul.addr %s356, 2
      %s358 = smul.addr %s357, 8
      %s359 = scalar_lea.vmem %s10, %s358
      %v361 = vld [vmem:[%s354] sm:$0xff]
      %v362 = vld [vmem:[%s354 + $0x8] sm:$0xff]
      %v363 = vld [vmem:[%s1] sm:$0xff]
      %v364 = vld [vmem:[%s1 + $0x8] sm:$0xff]
      %v365 = vld [vmem:[%s2] sm:$0xff]
      %v366 = vld [vmem:[%s2 + $0x8] sm:$0xff]
      %v367 = vld [vmem:[%s3] sm:$0xff]
      %v368 = vld [vmem:[%s3 + $0x8] sm:$0xff]
      %vm369 = vcmask 130048
      %v371 = vsel %vm369, %v363, 0
      %v374 = vsel %vm369, %v364, 0
      %376 = vmatpush.msra.mxu0 0.0
      %377 = vmatpush.msra.mxu0 0.0
      %378 = vmatpush.msra.mxu0 0.0
      %379 = vmatpush.msra.mxu0 0.0
      %380 = vmatpush.msra.mxu0 0.0
      %381 = vmatpush.msra.mxu0 0.0
      %382 = vmatpush.msra.mxu0 0.0
      %383 = vmatpush.msra.mxu0 0.0
      %384 = vmatpush.msra.mxu0 0.0
      %385 = vmatpush.msra.mxu0 0.0
      %386 = vmatpush.msra.mxu0 0.0
      %387 = vmatpush.msra.mxu0 0.0
      %388 = vmatpush.msra.mxu0 0.0
      %389 = vmatpush.msra.mxu0 0.0
      %390 = vmatpush.msra.mxu0 %v362
      %391 = vmatpush.msra.mxu0 %v361
      %392 = vmatmul.f32.gmra.mxu0 %v371
      %v393 = vpop.f32.mrf.mxu0
      %v394 = vadd.f32 0.0, %v393
      %395 = vmatmul.f32.gmra.mxu0 %v374
      %v396 = vpop.f32.mrf.mxu0
      %v397 = vadd.f32 0.0, %v396
      %398 = vdwg.mxu0
      %v399 = vsel %vm369, %v394, 0.0
      %400 = vadd.xlane.f32.xlu0 %v399
      %v401 = vpop.xlane.xlu0 %400
      %v402 = vsel %vm369, %v397, 0.0
      %403 = vadd.xlane.f32.xlu0 %v402
      %v404 = vpop.xlane.xlu0 %403
      %v405 = vmul.f32 %v361, %v361
      %v406 = vmul.f32 %v362, %v362
      %407 = vmatpush.msra.mxu0 0.0
      %408 = vmatpush.msra.mxu0 0.0
      %409 = vmatpush.msra.mxu0 0.0
      %410 = vmatpush.msra.mxu0 0.0
      %411 = vmatpush.msra.mxu0 0.0
      %412 = vmatpush.msra.mxu0 0.0
      %413 = vmatpush.msra.mxu0 0.0
      %414 = vmatpush.msra.mxu0 0.0
      %415 = vmatpush.msra.mxu0 0.0
      %416 = vmatpush.msra.mxu0 0.0
      %417 = vmatpush.msra.mxu0 0.0
      %418 = vmatpush.msra.mxu0 0.0
      %419 = vmatpush.msra.mxu0 0.0
      %420 = vmatpush.msra.mxu0 0.0
      %421 = vmatpush.msra.mxu0 %v406
      %422 = vmatpush.msra.mxu0 %v405
      %423 = vmatmul.f32.gmra.mxu0 %v371
      %v424 = vpop.f32.mrf.mxu0
      %v425 = vadd.f32 0.0, %v424
      %426 = vmatmul.f32.gmra.mxu0 %v374
      %v427 = vpop.f32.mrf.mxu0
      %v428 = vadd.f32 0.0, %v427
      %429 = vdwg.mxu0
      %v430 = vsel %vm369, %v425, 0.0
      %431 = vadd.xlane.f32.xlu0 %v430
      %v432 = vpop.xlane.xlu0 %431
      %v433 = vsel %vm369, %v428, 0.0
      %434 = vadd.xlane.f32.xlu0 %v433
      %v435 = vpop.xlane.xlu0 %434
      %v436 = vmul.f32 %v401, %v401
      %v437 = vmul.f32 %v404, %v404
      %v438 = vsub.f32 %v432, %v436
      %v439 = vsub.f32 %v435, %v437
      %v440 = vmax.f32 %v438, 0.0
      %v441 = vmax.f32 %v439, 0.0
      %v442 = vsub.f32 %v361, %v401
      %v443 = vsub.f32 %v362, %v404
      %v444 = vadd.f32 %v440, 1e-05
      %v445 = vadd.f32 %v441, 1e-05
      %v446 = vrsqrt.pop %v444
      %v447 = vmul.f32 %v446, %v444
      %v448 = vmul.f32 %v447, %v446
      %v449 = vmul.f32 0.5, %v448
      %v450 = vsub.f32 1.5, %v449
      %v451 = vmul.f32 %v446, %v450
      %vm452 = vweird.f32 %v444
      %vm453 = vweird.f32 %v446
      %vm454 = vmor %vm452, %vm453
      %v455 = vsel %vm454, %v446, %v451
      %v456 = vrsqrt.pop %v445
      %v457 = vmul.f32 %v456, %v445
      %v458 = vmul.f32 %v457, %v456
      %v459 = vmul.f32 0.5, %v458
      %v460 = vsub.f32 1.5, %v459
      %v461 = vmul.f32 %v456, %v460
      %vm462 = vweird.f32 %v445
      %vm463 = vweird.f32 %v456
      %vm464 = vmor %vm462, %vm463
      %v465 = vsel %vm464, %v456, %v461
      %v466 = vmul.f32 %v442, %v455
      %v467 = vmul.f32 %v443, %v465
      %469 = vset.pattern.permute.xlu0 0
      %470 = vperm.xlu0 %469, %v365
      %v471 = vpop.permute.xlu0 %470
      %474 = vset.pattern.permute.xlu0 0
      %475 = vperm.xlu0 %474, %v366
      %v476 = vpop.permute.xlu0 %475
      %v478 = vmul.f32 %v466, %v471
      %v479 = vmul.f32 %v467, %v476
      %481 = vset.pattern.permute.xlu0 0
      %482 = vperm.xlu0 %481, %v367
      %v483 = vpop.permute.xlu0 %482
      %486 = vset.pattern.permute.xlu0 0
      %487 = vperm.xlu0 %486, %v368
      %v488 = vpop.permute.xlu0 %487
      %v490 = vadd.f32 %v478, %v483
      %v491 = vadd.f32 %v479, %v488
      %v492 = vxor.u32 %v490, 2147483648
      %v493 = vxor.u32 %v491, 2147483648
      %v494 = vmul.f32 %v492, 1.442695
      %v495 = vpow.pop %v494
      %v496 = vmul.f32 %v493, 1.442695
      %v497 = vpow.pop %v496
      %v498 = vadd.f32 %v495, 1.0
      %v499 = vadd.f32 %v497, 1.0
      %v500 = vrcp.pop %v498
      %v501 = vmul.f32 %v498, %v500
      %v502 = vsub.f32 1.0, %v501
      %v503 = vmul.f32 %v500, %v502
      %v504 = vadd.f32 %v500, %v503
      %vm505 = vweird.f32 %v498
      %vm506 = vweird.f32 %v500
      %vm507 = vmor %vm505, %vm506
      %v508 = vsel %vm507, %v500, %v504
      %v509 = vand.u32 2147483647, %v498
      %vm510 = vcmp.eq.f32.partialorder %v509, 8.507059e+37
      %v511 = vand.u32 %v498, 2147483648
      %v512 = vor.u32 1.1754944e-38, %v511
      %v513 = vsel %vm510, %v512, %v508
      %v514 = vmul.f32 1.0, %v513
      %v515 = vrcp.pop %v499
      %v516 = vmul.f32 %v499, %v515
      %v517 = vsub.f32 1.0, %v516
      %v518 = vmul.f32 %v515, %v517
      %v519 = vadd.f32 %v515, %v518
      %vm520 = vweird.f32 %v499
      %vm521 = vweird.f32 %v515
      %vm522 = vmor %vm520, %vm521
      %v523 = vsel %vm522, %v515, %v519
      %v524 = vand.u32 2147483647, %v499
      %vm525 = vcmp.eq.f32.partialorder %v524, 8.507059e+37
      %v526 = vand.u32 %v499, 2147483648
      %v527 = vor.u32 1.1754944e-38, %v526
      %v528 = vsel %vm525, %v527, %v523
      %v529 = vmul.f32 1.0, %v528
      %v530 = vmul.f32 %v490, %v514
      %v531 = vmul.f32 %v491, %v529
      %vm532 = vcmask 146432
      %533 = vst.msk [vmem:[#allocation2] sm:$0xff] %vm532, 0.0
      %534 = vst.msk [vmem:[#allocation2 + $0x8] sm:$0xff] %vm532, 0.0
      %537 = vrot.lane.b32.xlu0 %v530, 1
      %v538 = vpop.permute.xlu0 %537
      %539 = vrot.lane.b32.xlu0 %v531, 1
      %v540 = vpop.permute.xlu0 %539
      %vm543 = vcmask 138248
      %544 = vst.msk [vmem:[#allocation2] sm:$0xff] %vm543, %v538
      %545 = vst.msk [vmem:[#allocation2 + $0x8] sm:$0xff] %vm543, %v540
      %v546 = vld [vmem:[%s4] sm:$0xf]
      %v547 = vld [vmem:[%s4 + $0x4] sm:$0xf]
      %v548 = vld [vmem:[#allocation2] sm:$0xff]
      %v549 = vld [vmem:[#allocation2 + $0x8] sm:$0xff]
      %v550 = vpack.c.bf16 %v549, %v548
      %s551 = scalar_lea.vmem %s4, 8
      %v552 = vld [vmem:[%s551] sm:$0xf]
      %v553 = vld [vmem:[%s551 + $0x4] sm:$0xf]
      %v556 = vunpack.c.l.b16 %v552
      %v557 = vunpack.c.l.b16 %v553
      %v558 = vpack.c.b16 %v557, %v556
      %560 = vrot.lane.b32.xlu0 %v550, 127
      %v561 = vpop.permute.xlu0 %560
      %v564 = vsel %vm369, %v558, 0
      %566 = vmatpush.bf16.msra.mxu0 0
      %567 = vmatpush.bf16.msra.mxu0 0
      %568 = vmatpush.bf16.msra.mxu0 0
      %569 = vmatpush.bf16.msra.mxu0 0
      %570 = vmatpush.bf16.msra.mxu0 0
      %571 = vmatpush.bf16.msra.mxu0 0
      %572 = vmatpush.bf16.msra.mxu0 0
      %573 = vmatpush.bf16.msra.mxu0 %v561
      %574 = vmatmul.bf16.gmra.mxu0 %v564
      %v575 = vpop.f32.mrf.mxu0
      %v576 = vadd.f32 0.0, %v575
      %v577 = vpop.f32.mrf.mxu0
      %v578 = vadd.f32 0.0, %v577
      %579 = vdwg.mxu0
      %v582 = vunpack.c.l.b16 %v546
      %v583 = vunpack.c.l.b16 %v547
      %v584 = vpack.c.b16 %v583, %v582
      %v586 = vsel %vm369, %v584, 0
      %588 = vmatpush.bf16.msra.mxu0 0
      %589 = vmatpush.bf16.msra.mxu0 0
      %590 = vmatpush.bf16.msra.mxu0 0
      %591 = vmatpush.bf16.msra.mxu0 0
      %592 = vmatpush.bf16.msra.mxu0 0
      %593 = vmatpush.bf16.msra.mxu0 0
      %594 = vmatpush.bf16.msra.mxu0 0
      %595 = vmatpush.bf16.msra.mxu0 %v550
      %596 = vmatmul.bf16.gmra.mxu0 %v586
      %v597 = vpop.f32.mrf.mxu0
      %v598 = vadd.f32 %v576, %v597
      %v599 = vpop.f32.mrf.mxu0
      %v600 = vadd.f32 %v578, %v599
      %601 = vdwg.mxu0
      %s602 = scalar_lea.vmem %s4, 16
      %v603 = vld [vmem:[%s602] sm:$0xf]
      %v604 = vld [vmem:[%s602 + $0x4] sm:$0xf]
      %v607 = vunpack.c.l.b16 %v603
      %v608 = vunpack.c.l.b16 %v604
      %v609 = vpack.c.b16 %v608, %v607
      %610 = vrot.lane.b32.xlu0 %v550, 126
      %v611 = vpop.permute.xlu0 %610
      %v614 = vsel %vm369, %v609, 0
      %616 = vmatpush.bf16.msra.mxu0 0
      %617 = vmatpush.bf16.msra.mxu0 0
      %618 = vmatpush.bf16.msra.mxu0 0
      %619 = vmatpush.bf16.msra.mxu0 0
      %620 = vmatpush.bf16.msra.mxu0 0
      %621 = vmatpush.bf16.msra.mxu0 0
      %622 = vmatpush.bf16.msra.mxu0 0
      %623 = vmatpush.bf16.msra.mxu0 %v611
      %624 = vmatmul.bf16.gmra.mxu0 %v614
      %v625 = vpop.f32.mrf.mxu0
      %v626 = vadd.f32 0.0, %v625
      %v627 = vpop.f32.mrf.mxu0
      %v628 = vadd.f32 0.0, %v627
      %629 = vdwg.mxu0
      %v630 = vadd.f32 %v598, %v626
      %v631 = vadd.f32 %v600, %v628
      %v632 = vld [vmem:[%s5] sm:$0xff]
      %v633 = vld [vmem:[%s5 + $0x8] sm:$0xff]
      %635 = vset.pattern.permute.xlu0 0
      %636 = vperm.xlu0 %635, %v632
      %v637 = vpop.permute.xlu0 %636
      %640 = vset.pattern.permute.xlu0 0
      %641 = vperm.xlu0 %640, %v633
      %v642 = vpop.permute.xlu0 %641
      %v644 = vadd.f32 %v630, %v637
      %v645 = vadd.f32 %v631, %v642
      %v646 = vld [vmem:[%s1] sm:$0xff]
      %v647 = vld [vmem:[%s1 + $0x8] sm:$0xff]
      %v648 = vld [vmem:[%s6] sm:$0xff]
      %v649 = vld [vmem:[%s6 + $0x8] sm:$0xff]
      %v650 = vld [vmem:[%s7] sm:$0xff]
      %v651 = vld [vmem:[%s7 + $0x8] sm:$0xff]
      %v653 = vsel %vm369, %v646, 0
      %v656 = vsel %vm369, %v647, 0
      %658 = vmatpush.msra.mxu0 0.0
      %659 = vmatpush.msra.mxu0 0.0
      %660 = vmatpush.msra.mxu0 0.0
      %661 = vmatpush.msra.mxu0 0.0
      %662 = vmatpush.msra.mxu0 0.0
      %663 = vmatpush.msra.mxu0 0.0
      %664 = vmatpush.msra.mxu0 0.0
      %665 = vmatpush.msra.mxu0 0.0
      %666 = vmatpush.msra.mxu0 0.0
      %667 = vmatpush.msra.mxu0 0.0
      %668 = vmatpush.msra.mxu0 0.0
      %669 = vmatpush.msra.mxu0 0.0
      %670 = vmatpush.msra.mxu0 0.0
      %671 = vmatpush.msra.mxu0 0.0
      %672 = vmatpush.msra.mxu0 %v645
      %673 = vmatpush.msra.mxu0 %v644
      %674 = vmatmul.f32.gmra.mxu0 %v653
      %v675 = vpop.f32.mrf.mxu0
      %v676 = vadd.f32 0.0, %v675
      %677 = vmatmul.f32.gmra.mxu0 %v656
      %v678 = vpop.f32.mrf.mxu0
      %v679 = vadd.f32 0.0, %v678
      %680 = vdwg.mxu0
      %v681 = vsel %vm369, %v676, 0.0
      %682 = vadd.xlane.f32.xlu0 %v681
      %v683 = vpop.xlane.xlu0 %682
      %v684 = vsel %vm369, %v679, 0.0
      %685 = vadd.xlane.f32.xlu0 %v684
      %v686 = vpop.xlane.xlu0 %685
      %v687 = vmul.f32 %v644, %v644
      %v688 = vmul.f32 %v645, %v645
      %689 = vmatpush.msra.mxu0 0.0
      %690 = vmatpush.msra.mxu0 0.0
      %691 = vmatpush.msra.mxu0 0.0
      %692 = vmatpush.msra.mxu0 0.0
      %693 = vmatpush.msra.mxu0 0.0
      %694 = vmatpush.msra.mxu0 0.0
      %695 = vmatpush.msra.mxu0 0.0
      %696 = vmatpush.msra.mxu0 0.0
      %697 = vmatpush.msra.mxu0 0.0
      %698 = vmatpush.msra.mxu0 0.0
      %699 = vmatpush.msra.mxu0 0.0
      %700 = vmatpush.msra.mxu0 0.0
      %701 = vmatpush.msra.mxu0 0.0
      %702 = vmatpush.msra.mxu0 0.0
      %703 = vmatpush.msra.mxu0 %v688
      %704 = vmatpush.msra.mxu0 %v687
      %705 = vmatmul.f32.gmra.mxu0 %v653
      %v706 = vpop.f32.mrf.mxu0
      %v707 = vadd.f32 0.0, %v706
      %708 = vmatmul.f32.gmra.mxu0 %v656
      %v709 = vpop.f32.mrf.mxu0
      %v710 = vadd.f32 0.0, %v709
      %711 = vdwg.mxu0
      %v712 = vsel %vm369, %v707, 0.0
      %713 = vadd.xlane.f32.xlu0 %v712
      %v714 = vpop.xlane.xlu0 %713
      %v715 = vsel %vm369, %v710, 0.0
      %716 = vadd.xlane.f32.xlu0 %v715
      %v717 = vpop.xlane.xlu0 %716
      %v718 = vmul.f32 %v683, %v683
      %v719 = vmul.f32 %v686, %v686
      %v720 = vsub.f32 %v714, %v718
      %v721 = vsub.f32 %v717, %v719
      %v722 = vmax.f32 %v720, 0.0
      %v723 = vmax.f32 %v721, 0.0
      %v724 = vsub.f32 %v644, %v683
      %v725 = vsub.f32 %v645, %v686
      %v726 = vadd.f32 %v722, 1e-05
      %v727 = vadd.f32 %v723, 1e-05
      %v728 = vrsqrt.pop %v726
      %v729 = vmul.f32 %v728, %v726
      %v730 = vmul.f32 %v729, %v728
      %v731 = vmul.f32 0.5, %v730
      %v732 = vsub.f32 1.5, %v731
      %v733 = vmul.f32 %v728, %v732
      %vm734 = vweird.f32 %v726
      %vm735 = vweird.f32 %v728
      %vm736 = vmor %vm734, %vm735
      %v737 = vsel %vm736, %v728, %v733
      %v738 = vrsqrt.pop %v727
      %v739 = vmul.f32 %v738, %v727
      %v740 = vmul.f32 %v739, %v738
      %v741 = vmul.f32 0.5, %v740
      %v742 = vsub.f32 1.5, %v741
      %v743 = vmul.f32 %v738, %v742
      %vm744 = vweird.f32 %v727
      %vm745 = vweird.f32 %v738
      %vm746 = vmor %vm744, %vm745
      %v747 = vsel %vm746, %v738, %v743
      %v748 = vmul.f32 %v724, %v737
      %v749 = vmul.f32 %v725, %v747
      %751 = vset.pattern.permute.xlu0 0
      %752 = vperm.xlu0 %751, %v648
      %v753 = vpop.permute.xlu0 %752
      %756 = vset.pattern.permute.xlu0 0
      %757 = vperm.xlu0 %756, %v649
      %v758 = vpop.permute.xlu0 %757
      %v760 = vmul.f32 %v748, %v753
      %v761 = vmul.f32 %v749, %v758
      %763 = vset.pattern.permute.xlu0 0
      %764 = vperm.xlu0 %763, %v650
      %v765 = vpop.permute.xlu0 %764
      %768 = vset.pattern.permute.xlu0 0
      %769 = vperm.xlu0 %768, %v651
      %v770 = vpop.permute.xlu0 %769
      %v772 = vadd.f32 %v760, %v765
      %v773 = vadd.f32 %v761, %v770
      %v774 = vxor.u32 %v772, 2147483648
      %v775 = vxor.u32 %v773, 2147483648
      %v776 = vmul.f32 %v774, 1.442695
      %v777 = vpow.pop %v776
      %v778 = vmul.f32 %v775, 1.442695
      %v779 = vpow.pop %v778
      %v780 = vadd.f32 %v777, 1.0
      %v781 = vadd.f32 %v779, 1.0
      %v782 = vrcp.pop %v780
      %v783 = vmul.f32 %v780, %v782
      %v784 = vsub.f32 1.0, %v783
      %v785 = vmul.f32 %v782, %v784
      %v786 = vadd.f32 %v782, %v785
      %vm787 = vweird.f32 %v780
      %vm788 = vweird.f32 %v782
      %vm789 = vmor %vm787, %vm788
      %v790 = vsel %vm789, %v782, %v786
      %v791 = vand.u32 2147483647, %v780
      %vm792 = vcmp.eq.f32.partialorder %v791, 8.507059e+37
      %v793 = vand.u32 %v780, 2147483648
      %v794 = vor.u32 1.1754944e-38, %v793
      %v795 = vsel %vm792, %v794, %v790
      %v796 = vmul.f32 1.0, %v795
      %v797 = vrcp.pop %v781
      %v798 = vmul.f32 %v781, %v797
      %v799 = vsub.f32 1.0, %v798
      %v800 = vmul.f32 %v797, %v799
      %v801 = vadd.f32 %v797, %v800
      %vm802 = vweird.f32 %v781
      %vm803 = vweird.f32 %v797
      %vm804 = vmor %vm802, %vm803
      %v805 = vsel %vm804, %v797, %v801
      %v806 = vand.u32 2147483647, %v781
      %vm807 = vcmp.eq.f32.partialorder %v806, 8.507059e+37
      %v808 = vand.u32 %v781, 2147483648
      %v809 = vor.u32 1.1754944e-38, %v808
      %v810 = vsel %vm807, %v809, %v805
      %v811 = vmul.f32 1.0, %v810
      %v812 = vmul.f32 %v772, %v796
      %v813 = vmul.f32 %v773, %v811
      %814 = vst.msk [vmem:[#allocation2] sm:$0xff] %vm532, 0.0
      %815 = vst.msk [vmem:[#allocation2 + $0x8] sm:$0xff] %vm532, 0.0
      %818 = vrot.lane.b32.xlu0 %v812, 1
      %v819 = vpop.permute.xlu0 %818
      %820 = vrot.lane.b32.xlu0 %v813, 1
      %v821 = vpop.permute.xlu0 %820
      %824 = vst.msk [vmem:[#allocation2] sm:$0xff] %vm543, %v819
      %825 = vst.msk [vmem:[#allocation2 + $0x8] sm:$0xff] %vm543, %v821
      %v826 = vld [vmem:[%s8] sm:$0xf]
      %v827 = vld [vmem:[%s8 + $0x4] sm:$0xf]
      %v828 = vld [vmem:[#allocation2] sm:$0xff]
      %v829 = vld [vmem:[#allocation2 + $0x8] sm:$0xff]
      %v830 = vpack.c.bf16 %v829, %v828
      %s831 = scalar_lea.vmem %s8, 8
      %v832 = vld [vmem:[%s831] sm:$0xf]
      %v833 = vld [vmem:[%s831 + $0x4] sm:$0xf]
      %v836 = vunpack.c.l.b16 %v832
      %v837 = vunpack.c.l.b16 %v833
      %v838 = vpack.c.b16 %v837, %v836
      %840 = vrot.lane.b32.xlu0 %v830, 127
      %v841 = vpop.permute.xlu0 %840
      %v844 = vsel %vm369, %v838, 0
      %846 = vmatpush.bf16.msra.mxu0 0
      %847 = vmatpush.bf16.msra.mxu0 0
      %848 = vmatpush.bf16.msra.mxu0 0
      %849 = vmatpush.bf16.msra.mxu0 0
      %850 = vmatpush.bf16.msra.mxu0 0
      %851 = vmatpush.bf16.msra.mxu0 0
      %852 = vmatpush.bf16.msra.mxu0 0
      %853 = vmatpush.bf16.msra.mxu0 %v841
      %854 = vmatmul.bf16.gmra.mxu0 %v844
      %v855 = vpop.f32.mrf.mxu0
      %v856 = vadd.f32 0.0, %v855
      %v857 = vpop.f32.mrf.mxu0
      %v858 = vadd.f32 0.0, %v857
      %859 = vdwg.mxu0
      %v862 = vunpack.c.l.b16 %v826
      %v863 = vunpack.c.l.b16 %v827
      %v864 = vpack.c.b16 %v863, %v862
      %v866 = vsel %vm369, %v864, 0
      %868 = vmatpush.bf16.msra.mxu0 0
      %869 = vmatpush.bf16.msra.mxu0 0
      %870 = vmatpush.bf16.msra.mxu0 0
      %871 = vmatpush.bf16.msra.mxu0 0
      %872 = vmatpush.bf16.msra.mxu0 0
      %873 = vmatpush.bf16.msra.mxu0 0
      %874 = vmatpush.bf16.msra.mxu0 0
      %875 = vmatpush.bf16.msra.mxu0 %v830
      %876 = vmatmul.bf16.gmra.mxu0 %v866
      %v877 = vpop.f32.mrf.mxu0
      %v878 = vadd.f32 %v856, %v877
      %v879 = vpop.f32.mrf.mxu0
      %v880 = vadd.f32 %v858, %v879
      %881 = vdwg.mxu0
      %s882 = scalar_lea.vmem %s8, 16
      %v883 = vld [vmem:[%s882] sm:$0xf]
      %v884 = vld [vmem:[%s882 + $0x4] sm:$0xf]
      %v887 = vunpack.c.l.b16 %v883
      %v888 = vunpack.c.l.b16 %v884
      %v889 = vpack.c.b16 %v888, %v887
      %890 = vrot.lane.b32.xlu0 %v830, 126
      %v891 = vpop.permute.xlu0 %890
      %v894 = vsel %vm369, %v889, 0
      %896 = vmatpush.bf16.msra.mxu0 0
      %897 = vmatpush.bf16.msra.mxu0 0
      %898 = vmatpush.bf16.msra.mxu0 0
      %899 = vmatpush.bf16.msra.mxu0 0
      %900 = vmatpush.bf16.msra.mxu0 0
      %901 = vmatpush.bf16.msra.mxu0 0
      %902 = vmatpush.bf16.msra.mxu0 0
      %903 = vmatpush.bf16.msra.mxu0 %v891
      %904 = vmatmul.bf16.gmra.mxu0 %v894
      %v905 = vpop.f32.mrf.mxu0
      %v906 = vadd.f32 0.0, %v905
      %v907 = vpop.f32.mrf.mxu0
      %v908 = vadd.f32 0.0, %v907
      %909 = vdwg.mxu0
      %v910 = vadd.f32 %v878, %v906
      %v911 = vadd.f32 %v880, %v908
      %v912 = vld [vmem:[%s9] sm:$0xff]
      %v913 = vld [vmem:[%s9 + $0x8] sm:$0xff]
      %915 = vset.pattern.permute.xlu0 0
      %916 = vperm.xlu0 %915, %v912
      %v917 = vpop.permute.xlu0 %916
      %920 = vset.pattern.permute.xlu0 0
      %921 = vperm.xlu0 %920, %v913
      %v922 = vpop.permute.xlu0 %921
      %v924 = vadd.f32 %v910, %v917
      %v925 = vadd.f32 %v911, %v922
      %v926 = vadd.f32 %v361, %v924
      %v927 = vadd.f32 %v362, %v925
      %928 = vst.msk [vmem:[%s359] sm:$0xff] %vm369, %v926
      %929 = vst.msk [vmem:[%s359 + $0x8] sm:$0xff] %vm369, %v927
      %p930 = scmp.lt.s32.totalorder %s21, 1
      %s931 = scalar_select %p930, %s21, 1
      %s932 = smul.addr %s931, 2
      %s933 = smul.addr %s932, 8
      %s934 = scalar_lea.vmem %s10, %s933
      // Predicated region
      $region61: #{_lambda_.14} parent=59 // pred_check
        %p935 = pneg %p254
      $region62: #{_lambda_.14} parent=59 // pred_check_branch
        %937 = sbr.rel (%p935) target = $region64
      $region63: #{_lambda_.14} parent=59 // pred_region
        _
      $region64: #{_lambda_.14} parent=59 // pred_fallthru
        _
    $region60: #{_lambda_.14} parent=5 // pred_fallthru
      _
    %p938 = scmp.le.s32.totalorder 2, %s16
    // Predicated region
    $region65: #{_lambda_.14} parent=5 // pred_check
      %p939 = pneg %p938
    $region66: #{_lambda_.14} parent=5 // pred_check_branch
      %941 = sbr.rel (%p939) target = $region68
    $region67: #{_lambda_.14} parent=5 // pred_region
      %s942 = ssub.s32 %s16, 2
      // Predicated region
      $region69: #{_lambda_.14} parent=67 // pred_check
        %p943 = pneg %p260
      $region70: #{_lambda_.14} parent=67 // pred_check_branch
        %945 = sbr.rel (%p943) target = $region72
      $region71: #{_lambda_.14} parent=67 // pred_region
        %p946 = scmp.lt.s32.totalorder %s22, 1
        %s947 = scalar_select %p946, %s22, 1
        %s948 = smul.addr %s947, 2
        %s949 = smul.addr %s948, 8
        %s950 = scalar_lea.vmem %s10, %s949
      $region72: #{_lambda_.14} parent=67 // pred_fallthru
        _
    $region68: #{_lambda_.14} parent=5 // pred_fallthru
      _
  $region6: #{_lambda_.14} parent=0 // loop_footer
    %s20 = sadd.s32 1, %s16
  $region7: #{_lambda_.14} parent=0 // loop_footer_branch
    %15 = sbr.rel target = $region3
  $region8: #{_lambda_.14} parent=0 // loop_exit
    _

// kernel: _lambda_.16
$region0: #{_lambda_.16}
  #allocation0 [shape = 'u32[]', space=smem, size = 0x4, offset = 0x4, fixed_abs, tag = 'smem constant byte address 0x4 - core index']
  #allocation1 [shape = 'u32[72,128]{1,0:T(1,128)}', space=vmem, size = 0x9000, scoped, tag = 'internal scratch']
  %s0 = inlined_call_operand.vmem [shape: bf16[32,80], index: 0, kind: input, shape index: {}]
  %s1 = inlined_call_operand.vmem [shape: bf16[80,16], index: 1, kind: input, shape index: {}]
  %s2 = inlined_call_operand.vmem [shape: f32[32,1], index: 2, kind: input, shape index: {}]
  %s3 = inlined_call_operand.vmem [shape: f32[32,16], index: 3, kind: output, shape index: {}]
  %s4 = sld [smem:[#allocation0]]
  $region22: #{_lambda_.16} parent=0
    _
  %s6 = ssub.s32 1, %s4
  %s7 = scalar_select 0, %s6, %s4
  // Predicated region
  $region2: #{_lambda_.16} parent=0 // pred_check
    _
  $region3: #{_lambda_.16} parent=0 // pred_check_branch
    %9 = sbr.rel (0) target = $region5
  $region4: #{_lambda_.16} parent=0 // pred_region
    _
  $region5: #{_lambda_.16} parent=0 // pred_fallthru
    _
  // Predicated region
  $region6: #{_lambda_.16} parent=0 // pred_check
    _
  $region7: #{_lambda_.16} parent=0 // pred_check_branch
    %11 = sbr.rel (0) target = $region9
  $region8: #{_lambda_.16} parent=0 // pred_region
    _
  $region9: #{_lambda_.16} parent=0 // pred_fallthru
    _
  // Predicated region
  $region10: #{_lambda_.16} parent=0 // pred_check
    _
  $region11: #{_lambda_.16} parent=0 // pred_check_branch
    %13 = sbr.rel (0) target = $region13
  $region12: #{_lambda_.16} parent=0 // pred_region
    _
  $region13: #{_lambda_.16} parent=0 // pred_fallthru
    _
  %v15 = vld [vmem:[%s0] sm:$0xf]
  %v16 = vld [vmem:[%s0 + $0x4] sm:$0xf]
  %v17 = vld [vmem:[%s0 + $0x8] sm:$0xf]
  %v18 = vld [vmem:[%s0 + $0xc] sm:$0xf]
  %v19 = vld [vmem:[%s1] sm:$0xf]
  %v20 = vld [vmem:[%s1 + $0x4] sm:$0xf]
  %v21 = vld [vmem:[%s1 + $0x8] sm:$0xf]
  %v22 = vld [vmem:[%s1 + $0xc] sm:$0xf]
  %v23 = vld [vmem:[%s1 + $0x10] sm:$0xf]
  %v24 = vld [vmem:[%s1 + $0x14] sm:$0xf]
  %v25 = vld [vmem:[%s1 + $0x18] sm:$0xf]
  %v26 = vld [vmem:[%s1 + $0x1c] sm:$0xf]
  %v27 = vld [vmem:[%s1 + $0x20] sm:$0xf]
  %v28 = vld [vmem:[%s1 + $0x24] sm:$0xf]
  %v29 = vld [vmem:[%s2] sm:$0xff]
  %v30 = vld [vmem:[%s2 + $0x8] sm:$0xff]
  %v31 = vld [vmem:[%s2 + $0x10] sm:$0xff]
  %v32 = vld [vmem:[%s2 + $0x18] sm:$0xff]
  %34 = vset.pattern.permute.xlu0 0
  %35 = vperm.xlu0 %34, %v29
  %v36 = vpop.permute.xlu0 %35
  %39 = vset.pattern.permute.xlu0 0
  %40 = vperm.xlu0 %39, %v30
  %v41 = vpop.permute.xlu0 %40
  %44 = vset.pattern.permute.xlu0 0
  %45 = vperm.xlu0 %44, %v31
  %v46 = vpop.permute.xlu0 %45
  %49 = vset.pattern.permute.xlu0 0
  %50 = vperm.xlu0 %49, %v32
  %v51 = vpop.permute.xlu0 %50
  %v57 = vunpack.c.l.b16 %v15
  %v58 = vunpack.c.l.b16 %v16
  %v59 = vunpack.c.l.b16 %v17
  %v60 = vunpack.c.l.b16 %v18
  %v61 = vpack.c.b16 %v58, %v57
  %v62 = vpack.c.b16 %v60, %v59
  %v73 = vunpack.c.l.b16 %v19
  %v74 = vunpack.c.l.b16 %v20
  %v75 = vunpack.c.l.b16 %v21
  %v76 = vunpack.c.l.b16 %v22
  %v77 = vunpack.c.l.b16 %v23
  %v78 = vunpack.c.l.b16 %v24
  %v79 = vunpack.c.l.b16 %v25
  %v80 = vunpack.c.l.b16 %v26
  %v81 = vunpack.c.l.b16 %v27
  %v82 = vunpack.c.l.b16 %v28
  %v83 = vpack.c.b16 %v74, %v73
  %v84 = vpack.c.b16 %v76, %v75
  %v85 = vpack.c.b16 %v78, %v77
  %v86 = vpack.c.b16 %v80, %v79
  %v87 = vpack.c.b16 %v82, %v81
  %vm93 = vcmask 654336
  %v95 = vsel %vm93, %v61, 0
  %v98 = vsel %vm93, %v62, 0
  %100 = vmatpush.bf16.msra.mxu0 0
  %101 = vmatpush.bf16.msra.mxu0 0
  %102 = vmatpush.bf16.msra.mxu0 0
  %103 = vmatpush.bf16.msra.mxu0 %v87
  %104 = vmatpush.bf16.msra.mxu0 %v86
  %105 = vmatpush.bf16.msra.mxu0 %v85
  %106 = vmatpush.bf16.msra.mxu0 %v84
  %107 = vmatpush.bf16.msra.mxu0 %v83
  %108 = vmatmul.bf16.gmra.mxu0 %v95
  %v109 = vpop.f32.mrf.mxu0
  %v110 = vadd.f32 %v36, %v109
  %v111 = vpop.f32.mrf.mxu0
  %v112 = vadd.f32 %v41, %v111
  %113 = vmatmul.bf16.gmra.mxu0 %v98
  %v114 = vpop.f32.mrf.mxu0
  %v115 = vadd.f32 %v46, %v114
  %v116 = vpop.f32.mrf.mxu0
  %v117 = vadd.f32 %v51, %v116
  %118 = vdwg.mxu0
  %vm119 = vcmask 130048
  %120 = vst.msk [vmem:[%s3] sm:$0xff] %vm119, %v110
  %121 = vst.msk [vmem:[%s3 + $0x8] sm:$0xff] %vm119, %v112
  %122 = vst.msk [vmem:[%s3 + $0x10] sm:$0xff] %vm119, %v115
  %123 = vst.msk [vmem:[%s3 + $0x18] sm:$0xff] %vm119, %v117
  // Predicated region
  $region14: #{_lambda_.16} parent=0 // pred_check
    _
  $region15: #{_lambda_.16} parent=0 // pred_check_branch
    %125 = sbr.rel (0) target = $region17
  $region16: #{_lambda_.16} parent=0 // pred_region
    _
  $region17: #{_lambda_.16} parent=0 // pred_fallthru
    _
  // Predicated region
  $region18: #{_lambda_.16} parent=0 // pred_check
    _
  $region19: #{_lambda_.16} parent=0 // pred_check_branch
    %127 = sbr.rel (0) target = $region21
  $region20: #{_lambda_.16} parent=0 // pred_region
    _
  $region21: #{_lambda_.16} parent=0 // pred_fallthru
    _

// kernel: _lambda_.17
$region0: #{_lambda_.17}
  #allocation0 [shape = 'u32[]', space=smem, size = 0x4, offset = 0x4, fixed_abs, tag = 'smem constant byte address 0x4 - core index']
  #allocation1 [shape = 'u32[72,128]{1,0:T(1,128)}', space=vmem, size = 0x9000, scoped, tag = 'internal scratch']
  #allocation2 [shape = 'f32[32,10]{1,0:T(8,128)}', space=vmem, size = 0x4000, scoped, tag = 'scratch operand']
  %s0 = inlined_call_operand.vmem [shape: f32[2,32,8], index: 0, kind: input, shape index: {}]
  %s1 = inlined_call_operand.vmem [shape: f32[32,32], index: 1, kind: input, shape index: {}]
  %s2 = inlined_call_operand.vmem [shape: f32[32,1], index: 2, kind: input, shape index: {}]
  %s3 = inlined_call_operand.vmem [shape: f32[32,1], index: 3, kind: input, shape index: {}]
  %s4 = inlined_call_operand.vmem [shape: bf16[3,32,32], index: 4, kind: input, shape index: {}]
  %s5 = inlined_call_operand.vmem [shape: f32[32,1], index: 5, kind: input, shape index: {}]
  %s6 = inlined_call_operand.vmem [shape: f32[32,1], index: 6, kind: input, shape index: {}]
  %s7 = inlined_call_operand.vmem [shape: f32[32,1], index: 7, kind: input, shape index: {}]
  %s8 = inlined_call_operand.vmem [shape: bf16[3,32,32], index: 8, kind: input, shape index: {}]
  %s9 = inlined_call_operand.vmem [shape: f32[32,1], index: 9, kind: input, shape index: {}]
  %s10 = inlined_call_operand.vmem [shape: f32[2,32,8], index: 10, kind: output, shape index: {}]
  %s11 = sld [smem:[#allocation0]]
  $region73: #{_lambda_.17} parent=0
    _
  %s13 = ssub.s32 1, %s11
  %s14 = scalar_select 0, %s13, %s11
  loop: start=0, step=1, limit=4
  $region2: #{_lambda_.17} parent=0 // loop_pre_header
    _
  $region3: #{_lambda_.17} parent=0 // loop_header
    %s16 = sphi 0, %s20
    %p17 = scmp.ge.s32.totalorder %s16, 4
    %s26 = sphi 0, %s28
    %s29 = sphi 0, %s26
    %s30 = sphi 0, %s29
    %s46 = sphi 0, %s30
    %s50 = sphi 0, %s50
    %s52 = sphi 0, %s50
    %s53 = sphi 0, %s52
    %s67 = sphi 0, %s53
    %s71 = sphi 0, %s71
    %s73 = sphi 0, %s71
    %s74 = sphi 0, %s73
    %s88 = sphi 0, %s74
    %s92 = sphi 0, %s92
    %s94 = sphi 0, %s92
    %s95 = sphi 0, %s94
    %s109 = sphi 0, %s95
    %s113 = sphi 0, %s113
    %s115 = sphi 0, %s113
    %s116 = sphi 0, %s115
    %s130 = sphi 0, %s116
    %s134 = sphi 0, %s134
    %s136 = sphi 0, %s134
    %s137 = sphi 0, %s136
    %s151 = sphi 0, %s137
    %s155 = sphi 0, %s155
    %s157 = sphi 0, %s155
    %s158 = sphi 0, %s157
    %s172 = sphi 0, %s158
    %s176 = sphi 0, %s176
    %s178 = sphi 0, %s176
    %s179 = sphi 0, %s178
    %s193 = sphi 0, %s179
    %s197 = sphi 0, %s197
    %s199 = sphi 0, %s197
    %s200 = sphi 0, %s199
    %s214 = sphi 0, %s200
    %s218 = sphi 0, %s218
    %s220 = sphi 0, %s218
    %s221 = sphi 0, %s220
    %s235 = sphi 0, %s221
    %s241 = sphi 0, %s243
    %s244 = sphi 0, %s241
    %s245 = sphi 0, %s244
    %s261 = sphi 0, %s245
  $region4: #{_lambda_.17} parent=0 // loop_header_branch
    %19 = sbr.rel (%p17) target = $region8
  $region5: #{_lambda_.17} parent=0 // loop_body
    %s21 = ssub.s32 %s16, 1
    %s22 = ssub.s32 %s16, 2
    %s23 = sadd.s32 %s16, 1
    %s24 = ssub.s32 %s16, %s23
    %p25 = scmp.eq.s32.totalorder %s24, 0
    %s27 = sadd.s32 %s26, 1
    %s28 = scalar_select %p25, %s26, %s27
    %p31 = pneg %p25
    %p32 = scmp.eq.s32.totalorder %s16, 1
    %p33 = por %p31, %p32
    %p34 = scmp.ne.s32.totalorder %s26, %s29
    %p35 = scmp.eq.s32.totalorder %s16, 0
    %p36 = por %p34, %p35
    %p37 = scmp.ne.s32.totalorder %s26, %s29
    %p38 = scmp.eq.s32.totalorder %s21, 1
    %p39 = por %p37, %p38
    %p40 = scmp.ne.s32.totalorder %s29, %s30
    %p41 = scmp.eq.s32.totalorder %s21, 0
    %p42 = por %p40, %p41
    %p43 = scmp.ne.s32.totalorder %s29, %s30
    %p44 = scmp.eq.s32.totalorder %s22, 1
    %p45 = por %p43, %p44
    %p47 = scmp.ne.s32.totalorder %s30, %s46
    %p48 = scmp.eq.s32.totalorder %s22, 0
    %p49 = por %p47, %p48
    %s51 = sadd.s32 %s50, 1
    %p54 = scmp.eq.s32.totalorder %s16, 1
    %p55 = scmp.ne.s32.totalorder %s50, %s52
    %p56 = scmp.eq.s32.totalorder %s16, 0
    %p57 = por %p55, %p56
    %p58 = scmp.ne.s32.totalorder %s50, %s52
    %p59 = scmp.eq.s32.totalorder %s21, 1
    %p60 = por %p58, %p59
    %p61 = scmp.ne.s32.totalorder %s52, %s53
    %p62 = scmp.eq.s32.totalorder %s21, 0
    %p63 = por %p61, %p62
    %p64 = scmp.ne.s32.totalorder %s52, %s53
    %p65 = scmp.eq.s32.totalorder %s22, 1
    %p66 = por %p64, %p65
    %p68 = scmp.ne.s32.totalorder %s53, %s67
    %p69 = scmp.eq.s32.totalorder %s22, 0
    %p70 = por %p68, %p69
    %s72 = sadd.s32 %s71, 1
    %p75 = scmp.eq.s32.totalorder %s16, 1
    %p76 = scmp.ne.s32.totalorder %s71, %s73
    %p77 = scmp.eq.s32.totalorder %s16, 0
    %p78 = por %p76, %p77
    %p79 = scmp.ne.s32.totalorder %s71, %s73
    %p80 = scmp.eq.s32.totalorder %s21, 1
    %p81 = por %p79, %p80
    %p82 = scmp.ne.s32.totalorder %s73, %s74
    %p83 = scmp.eq.s32.totalorder %s21, 0
    %p84 = por %p82, %p83
    %p85 = scmp.ne.s32.totalorder %s73, %s74
    %p86 = scmp.eq.s32.totalorder %s22, 1
    %p87 = por %p85, %p86
    %p89 = scmp.ne.s32.totalorder %s74, %s88
    %p90 = scmp.eq.s32.totalorder %s22, 0
    %p91 = por %p89, %p90
    %s93 = sadd.s32 %s92, 1
    %p96 = scmp.eq.s32.totalorder %s16, 1
    %p97 = scmp.ne.s32.totalorder %s92, %s94
    %p98 = scmp.eq.s32.totalorder %s16, 0
    %p99 = por %p97, %p98
    %p100 = scmp.ne.s32.totalorder %s92, %s94
    %p101 = scmp.eq.s32.totalorder %s21, 1
    %p102 = por %p100, %p101
    %p103 = scmp.ne.s32.totalorder %s94, %s95
    %p104 = scmp.eq.s32.totalorder %s21, 0
    %p105 = por %p103, %p104
    %p106 = scmp.ne.s32.totalorder %s94, %s95
    %p107 = scmp.eq.s32.totalorder %s22, 1
    %p108 = por %p106, %p107
    %p110 = scmp.ne.s32.totalorder %s95, %s109
    %p111 = scmp.eq.s32.totalorder %s22, 0
    %p112 = por %p110, %p111
    %s114 = sadd.s32 %s113, 1
    %p117 = scmp.eq.s32.totalorder %s16, 1
    %p118 = scmp.ne.s32.totalorder %s113, %s115
    %p119 = scmp.eq.s32.totalorder %s16, 0
    %p120 = por %p118, %p119
    %p121 = scmp.ne.s32.totalorder %s113, %s115
    %p122 = scmp.eq.s32.totalorder %s21, 1
    %p123 = por %p121, %p122
    %p124 = scmp.ne.s32.totalorder %s115, %s116
    %p125 = scmp.eq.s32.totalorder %s21, 0
    %p126 = por %p124, %p125
    %p127 = scmp.ne.s32.totalorder %s115, %s116
    %p128 = scmp.eq.s32.totalorder %s22, 1
    %p129 = por %p127, %p128
    %p131 = scmp.ne.s32.totalorder %s116, %s130
    %p132 = scmp.eq.s32.totalorder %s22, 0
    %p133 = por %p131, %p132
    %s135 = sadd.s32 %s134, 1
    %p138 = scmp.eq.s32.totalorder %s16, 1
    %p139 = scmp.ne.s32.totalorder %s134, %s136
    %p140 = scmp.eq.s32.totalorder %s16, 0
    %p141 = por %p139, %p140
    %p142 = scmp.ne.s32.totalorder %s134, %s136
    %p143 = scmp.eq.s32.totalorder %s21, 1
    %p144 = por %p142, %p143
    %p145 = scmp.ne.s32.totalorder %s136, %s137
    %p146 = scmp.eq.s32.totalorder %s21, 0
    %p147 = por %p145, %p146
    %p148 = scmp.ne.s32.totalorder %s136, %s137
    %p149 = scmp.eq.s32.totalorder %s22, 1
    %p150 = por %p148, %p149
    %p152 = scmp.ne.s32.totalorder %s137, %s151
    %p153 = scmp.eq.s32.totalorder %s22, 0
    %p154 = por %p152, %p153
    %s156 = sadd.s32 %s155, 1
    %p159 = scmp.eq.s32.totalorder %s16, 1
    %p160 = scmp.ne.s32.totalorder %s155, %s157
    %p161 = scmp.eq.s32.totalorder %s16, 0
    %p162 = por %p160, %p161
    %p163 = scmp.ne.s32.totalorder %s155, %s157
    %p164 = scmp.eq.s32.totalorder %s21, 1
    %p165 = por %p163, %p164
    %p166 = scmp.ne.s32.totalorder %s157, %s158
    %p167 = scmp.eq.s32.totalorder %s21, 0
    %p168 = por %p166, %p167
    %p169 = scmp.ne.s32.totalorder %s157, %s158
    %p170 = scmp.eq.s32.totalorder %s22, 1
    %p171 = por %p169, %p170
    %p173 = scmp.ne.s32.totalorder %s158, %s172
    %p174 = scmp.eq.s32.totalorder %s22, 0
    %p175 = por %p173, %p174
    %s177 = sadd.s32 %s176, 1
    %p180 = scmp.eq.s32.totalorder %s16, 1
    %p181 = scmp.ne.s32.totalorder %s176, %s178
    %p182 = scmp.eq.s32.totalorder %s16, 0
    %p183 = por %p181, %p182
    %p184 = scmp.ne.s32.totalorder %s176, %s178
    %p185 = scmp.eq.s32.totalorder %s21, 1
    %p186 = por %p184, %p185
    %p187 = scmp.ne.s32.totalorder %s178, %s179
    %p188 = scmp.eq.s32.totalorder %s21, 0
    %p189 = por %p187, %p188
    %p190 = scmp.ne.s32.totalorder %s178, %s179
    %p191 = scmp.eq.s32.totalorder %s22, 1
    %p192 = por %p190, %p191
    %p194 = scmp.ne.s32.totalorder %s179, %s193
    %p195 = scmp.eq.s32.totalorder %s22, 0
    %p196 = por %p194, %p195
    %s198 = sadd.s32 %s197, 1
    %p201 = scmp.eq.s32.totalorder %s16, 1
    %p202 = scmp.ne.s32.totalorder %s197, %s199
    %p203 = scmp.eq.s32.totalorder %s16, 0
    %p204 = por %p202, %p203
    %p205 = scmp.ne.s32.totalorder %s197, %s199
    %p206 = scmp.eq.s32.totalorder %s21, 1
    %p207 = por %p205, %p206
    %p208 = scmp.ne.s32.totalorder %s199, %s200
    %p209 = scmp.eq.s32.totalorder %s21, 0
    %p210 = por %p208, %p209
    %p211 = scmp.ne.s32.totalorder %s199, %s200
    %p212 = scmp.eq.s32.totalorder %s22, 1
    %p213 = por %p211, %p212
    %p215 = scmp.ne.s32.totalorder %s200, %s214
    %p216 = scmp.eq.s32.totalorder %s22, 0
    %p217 = por %p215, %p216
    %s219 = sadd.s32 %s218, 1
    %p222 = scmp.eq.s32.totalorder %s16, 1
    %p223 = scmp.ne.s32.totalorder %s218, %s220
    %p224 = scmp.eq.s32.totalorder %s16, 0
    %p225 = por %p223, %p224
    %p226 = scmp.ne.s32.totalorder %s218, %s220
    %p227 = scmp.eq.s32.totalorder %s21, 1
    %p228 = por %p226, %p227
    %p229 = scmp.ne.s32.totalorder %s220, %s221
    %p230 = scmp.eq.s32.totalorder %s21, 0
    %p231 = por %p229, %p230
    %p232 = scmp.ne.s32.totalorder %s220, %s221
    %p233 = scmp.eq.s32.totalorder %s22, 1
    %p234 = por %p232, %p233
    %p236 = scmp.ne.s32.totalorder %s221, %s235
    %p237 = scmp.eq.s32.totalorder %s22, 0
    %p238 = por %p236, %p237
    %s239 = ssub.s32 %s16, %s23
    %p240 = scmp.eq.s32.totalorder %s239, 0
    %s242 = sadd.s32 %s241, 1
    %s243 = scalar_select %p240, %s241, %s242
    %p246 = pneg %p240
    %p247 = scmp.eq.s32.totalorder %s16, 1
    %p248 = por %p246, %p247
    %p249 = scmp.ne.s32.totalorder %s241, %s244
    %p250 = scmp.eq.s32.totalorder %s16, 0
    %p251 = por %p249, %p250
    %p252 = scmp.ne.s32.totalorder %s241, %s244
    %p253 = scmp.eq.s32.totalorder %s21, 1
    %p254 = por %p252, %p253
    %p255 = scmp.ne.s32.totalorder %s244, %s245
    %p256 = scmp.eq.s32.totalorder %s21, 0
    %p257 = por %p255, %p256
    %p258 = scmp.ne.s32.totalorder %s244, %s245
    %p259 = scmp.eq.s32.totalorder %s22, 1
    %p260 = por %p258, %p259
    %p262 = scmp.ne.s32.totalorder %s245, %s261
    %p263 = scmp.eq.s32.totalorder %s22, 0
    %p264 = por %p262, %p263
    %p265 = scmp.le.s32.totalorder 1, %s16
    %p266 = scmp.lt.s32.totalorder %s16, 3
    %p267 = pnand %p265, %p266
    %p268 = pneg %p267
    // Predicated region
    $region9: #{_lambda_.17} parent=5 // pred_check
      _
    $region10: #{_lambda_.17} parent=5 // pred_check_branch
      %270 = sbr.rel (%p267) target = $region12
    $region11: #{_lambda_.17} parent=5 // pred_region
      %s271 = ssub.s32 %s16, 1
      // Predicated region
      $region13: #{_lambda_.17} parent=11 // pred_check
        %p272 = pneg %p63
      $region14: #{_lambda_.17} parent=11 // pred_check_branch
        %274 = sbr.rel (%p272) target = $region16
      $region15: #{_lambda_.17} parent=11 // pred_region
        _
      $region16: #{_lambda_.17} parent=11 // pred_fallthru
        _
      // Predicated region
      $region17: #{_lambda_.17} parent=11 // pred_check
        %p275 = pneg %p84
      $region18: #{_lambda_.17} parent=11 // pred_check_branch
        %277 = sbr.rel (%p275) target = $region20
      $region19: #{_lambda_.17} parent=11 // pred_region
        _
      $region20: #{_lambda_.17} parent=11 // pred_fallthru
        _
      // Predicated region
      $region21: #{_lambda_.17} parent=11 // pred_check
        %p278 = pneg %p105
      $region22: #{_lambda_.17} parent=11 // pred_check_branch
        %280 = sbr.rel (%p278) target = $region24
      $region23: #{_lambda_.17} parent=11 // pred_region
        _
      $region24: #{_lambda_.17} parent=11 // pred_fallthru
        _
      // Predicated region
      $region25: #{_lambda_.17} parent=11 // pred_check
        %p281 = pneg %p126
      $region26: #{_lambda_.17} parent=11 // pred_check_branch
        %283 = sbr.rel (%p281) target = $region28
      $region27: #{_lambda_.17} parent=11 // pred_region
        _
      $region28: #{_lambda_.17} parent=11 // pred_fallthru
        _
      // Predicated region
      $region29: #{_lambda_.17} parent=11 // pred_check
        %p284 = pneg %p147
      $region30: #{_lambda_.17} parent=11 // pred_check_branch
        %286 = sbr.rel (%p284) target = $region32
      $region31: #{_lambda_.17} parent=11 // pred_region
        _
      $region32: #{_lambda_.17} parent=11 // pred_fallthru
        _
      // Predicated region
      $region33: #{_lambda_.17} parent=11 // pred_check
        %p287 = pneg %p168
      $region34: #{_lambda_.17} parent=11 // pred_check_branch
        %289 = sbr.rel (%p287) target = $region36
      $region35: #{_lambda_.17} parent=11 // pred_region
        _
      $region36: #{_lambda_.17} parent=11 // pred_fallthru
        _
      // Predicated region
      $region37: #{_lambda_.17} parent=11 // pred_check
        %p290 = pneg %p189
      $region38: #{_lambda_.17} parent=11 // pred_check_branch
        %292 = sbr.rel (%p290) target = $region40
      $region39: #{_lambda_.17} parent=11 // pred_region
        _
      $region40: #{_lambda_.17} parent=11 // pred_fallthru
        _
      // Predicated region
      $region41: #{_lambda_.17} parent=11 // pred_check
        %p293 = pneg %p210
      $region42: #{_lambda_.17} parent=11 // pred_check_branch
        %295 = sbr.rel (%p293) target = $region44
      $region43: #{_lambda_.17} parent=11 // pred_region
        _
      $region44: #{_lambda_.17} parent=11 // pred_fallthru
        _
      // Predicated region
      $region45: #{_lambda_.17} parent=11 // pred_check
        %p296 = pneg %p231
      $region46: #{_lambda_.17} parent=11 // pred_check_branch
        %298 = sbr.rel (%p296) target = $region48
      $region47: #{_lambda_.17} parent=11 // pred_region
        _
      $region48: #{_lambda_.17} parent=11 // pred_fallthru
        _
    $region12: #{_lambda_.17} parent=5 // pred_fallthru
      _
    %p299 = scmp.lt.s32.totalorder %s16, 2
    // Predicated region
    $region49: #{_lambda_.17} parent=5 // pred_check
      %p300 = pneg %p299
    $region50: #{_lambda_.17} parent=5 // pred_check_branch
      %302 = sbr.rel (%p300) target = $region52
    $region51: #{_lambda_.17} parent=5 // pred_region
      // Predicated region
      $region53: #{_lambda_.17} parent=51 // pred_check
        %p303 = pneg %p36
      $region54: #{_lambda_.17} parent=51 // pred_check_branch
        %305 = sbr.rel (%p303) target = $region56
      $region55: #{_lambda_.17} parent=51 // pred_region
        %p306 = scmp.lt.s32.totalorder %s16, 1
        %s307 = scalar_select %p306, %s16, 1
        %s308 = smul.addr %s307, 4
        %s309 = smul.addr %s308, 8
        %s310 = scalar_lea.vmem %s0, %s309
      $region56: #{_lambda_.17} parent=51 // pred_fallthru
        _
    $region52: #{_lambda_.17} parent=5 // pred_fallthru
      _
    %p311 = scmp.le.s32.totalorder 1, %s16
    %p312 = scmp.lt.s32.totalorder %s16, 3
    %p313 = pnand %p311, %p312
    %p314 = pneg %p313
    // Predicated region
    $region57: #{_lambda_.17} parent=5 // pred_check
      _
    $region58: #{_lambda_.17} parent=5 // pred_check_branch
      %316 = sbr.rel (%p313) target = $region60
    $region59: #{_lambda_.17} parent=5 // pred_region
      %s317 = ssub.s32 %s16, 1
      %p318 = scmp.lt.s32.totalorder %s21, 1
      %s319 = scalar_select %p318, %s21, 1
      %s320 = smul.addr %s319, 4
      %s321 = smul.addr %s320, 8
      %s322 = scalar_lea.vmem %s0, %s321
      %p323 = pneg %p42
      %p324 = pneg %p39
      %p325 = pneg %p63
      %p326 = pneg %p60
      %p327 = pneg %p84
      %p328 = pneg %p81
      %p329 = pneg %p105
      %p330 = pneg %p102
      %p331 = pneg %p126
      %p332 = pneg %p123
      %p333 = pneg %p147
      %p334 = pneg %p144
      %p335 = pneg %p168
      %p336 = pneg %p165
      %p337 = pneg %p189
      %p338 = pneg %p186
      %p339 = pneg %p210
      %p340 = pneg %p207
      %p341 = pneg %p231
      %p342 = pneg %p228
      %p343 = pneg %p257
      %p344 = pneg %p254
      %p345 = scmp.lt.s32.totalorder %s21, 1
      %s346 = scalar_select %p345, %s21, 1
      %s347 = smul.addr %s346, 4
      %s348 = smul.addr %s347, 8
      %s349 = scalar_lea.vmem %s10, %s348
      %p350 = scmp.lt.s32.totalorder %s21, 1
      %s351 = scalar_select %p350, %s21, 1
      %s352 = smul.addr %s351, 4
      %s353 = smul.addr %s352, 8
      %s354 = scalar_lea.vmem %s0, %s353
      %p355 = scmp.lt.s32.totalorder %s21, 1
      %s356 = scalar_select %p355, %s21, 1
      %s357 = smul.addr %s356, 4
      %s358 = smul.addr %s357, 8
      %s359 = scalar_lea.vmem %s10, %s358
      %v361 = vld [vmem:[%s354] sm:$0xff]
      %v362 = vld [vmem:[%s354 + $0x8] sm:$0xff]
      %v363 = vld [vmem:[%s354 + $0x10] sm:$0xff]
      %v364 = vld [vmem:[%s354 + $0x18] sm:$0xff]
      %v365 = vld [vmem:[%s1] sm:$0xff]
      %v366 = vld [vmem:[%s1 + $0x8] sm:$0xff]
      %v367 = vld [vmem:[%s1 + $0x10] sm:$0xff]
      %v368 = vld [vmem:[%s1 + $0x18] sm:$0xff]
      %v369 = vld [vmem:[%s2] sm:$0xff]
      %v370 = vld [vmem:[%s2 + $0x8] sm:$0xff]
      %v371 = vld [vmem:[%s2 + $0x10] sm:$0xff]
      %v372 = vld [vmem:[%s2 + $0x18] sm:$0xff]
      %v373 = vld [vmem:[%s3] sm:$0xff]
      %v374 = vld [vmem:[%s3 + $0x8] sm:$0xff]
      %v375 = vld [vmem:[%s3 + $0x10] sm:$0xff]
      %v376 = vld [vmem:[%s3 + $0x18] sm:$0xff]
      %vm377 = vcmask 261120
      %v379 = vsel %vm377, %v365, 0
      %v382 = vsel %vm377, %v366, 0
      %v385 = vsel %vm377, %v367, 0
      %v388 = vsel %vm377, %v368, 0
      %390 = vmatpush.msra.mxu0 0.0
      %391 = vmatpush.msra.mxu0 0.0
      %392 = vmatpush.msra.mxu0 0.0
      %393 = vmatpush.msra.mxu0 0.0
      %394 = vmatpush.msra.mxu0 0.0
      %395 = vmatpush.msra.mxu0 0.0
      %396 = vmatpush.msra.mxu0 0.0
      %397 = vmatpush.msra.mxu0 0.0
      %398 = vmatpush.msra.mxu0 0.0
      %399 = vmatpush.msra.mxu0 0.0
      %400 = vmatpush.msra.mxu0 0.0
      %401 = vmatpush.msra.mxu0 0.0
      %402 = vmatpush.msra.mxu0 %v364
      %403 = vmatpush.msra.mxu0 %v363
      %404 = vmatpush.msra.mxu0 %v362
      %405 = vmatpush.msra.mxu0 %v361
      %406 = vmatmul.f32.gmra.mxu0 %v379
      %v407 = vpop.f32.mrf.mxu0
      %v408 = vadd.f32 0.0, %v407
      %409 = vmatmul.f32.gmra.mxu0 %v382
      %v410 = vpop.f32.mrf.mxu0
      %v411 = vadd.f32 0.0, %v410
      %412 = vmatmul.f32.gmra.mxu0 %v385
      %v413 = vpop.f32.mrf.mxu0
      %v414 = vadd.f32 0.0, %v413
      %415 = vmatmul.f32.gmra.mxu0 %v388
      %v416 = vpop.f32.mrf.mxu0
      %v417 = vadd.f32 0.0, %v416
      %418 = vdwg.mxu0
      %vm419 = vcmask 64512
      %v420 = vsel %vm419, %v408, 0.0
      %421 = vadd.xlane.f32.xlu0 %v420
      %v422 = vpop.xlane.xlu0 %421
      %v423 = vsel %vm419, %v411, 0.0
      %424 = vadd.xlane.f32.xlu0 %v423
      %v425 = vpop.xlane.xlu0 %424
      %v426 = vsel %vm419, %v414, 0.0
      %427 = vadd.xlane.f32.xlu0 %v426
      %v428 = vpop.xlane.xlu0 %427
      %v429 = vsel %vm419, %v417, 0.0
      %430 = vadd.xlane.f32.xlu0 %v429
      %v431 = vpop.xlane.xlu0 %430
      %v432 = vmul.f32 %v361, %v361
      %v433 = vmul.f32 %v362, %v362
      %v434 = vmul.f32 %v363, %v363
      %v435 = vmul.f32 %v364, %v364
      %436 = vmatpush.msra.mxu0 0.0
      %437 = vmatpush.msra.mxu0 0.0
      %438 = vmatpush.msra.mxu0 0.0
      %439 = vmatpush.msra.mxu0 0.0
      %440 = vmatpush.msra.mxu0 0.0
      %441 = vmatpush.msra.mxu0 0.0
      %442 = vmatpush.msra.mxu0 0.0
      %443 = vmatpush.msra.mxu0 0.0
      %444 = vmatpush.msra.mxu0 0.0
      %445 = vmatpush.msra.mxu0 0.0
      %446 = vmatpush.msra.mxu0 0.0
      %447 = vmatpush.msra.mxu0 0.0
      %448 = vmatpush.msra.mxu0 %v435
      %449 = vmatpush.msra.mxu0 %v434
      %450 = vmatpush.msra.mxu0 %v433
      %451 = vmatpush.msra.mxu0 %v432
      %452 = vmatmul.f32.gmra.mxu0 %v379
      %v453 = vpop.f32.mrf.mxu0
      %v454 = vadd.f32 0.0, %v453
      %455 = vmatmul.f32.gmra.mxu0 %v382
      %v456 = vpop.f32.mrf.mxu0
      %v457 = vadd.f32 0.0, %v456
      %458 = vmatmul.f32.gmra.mxu0 %v385
      %v459 = vpop.f32.mrf.mxu0
      %v460 = vadd.f32 0.0, %v459
      %461 = vmatmul.f32.gmra.mxu0 %v388
      %v462 = vpop.f32.mrf.mxu0
      %v463 = vadd.f32 0.0, %v462
      %464 = vdwg.mxu0
      %v465 = vsel %vm419, %v454, 0.0
      %466 = vadd.xlane.f32.xlu0 %v465
      %v467 = vpop.xlane.xlu0 %466
      %v468 = vsel %vm419, %v457, 0.0
      %469 = vadd.xlane.f32.xlu0 %v468
      %v470 = vpop.xlane.xlu0 %469
      %v471 = vsel %vm419, %v460, 0.0
      %472 = vadd.xlane.f32.xlu0 %v471
      %v473 = vpop.xlane.xlu0 %472
      %v474 = vsel %vm419, %v463, 0.0
      %475 = vadd.xlane.f32.xlu0 %v474
      %v476 = vpop.xlane.xlu0 %475
      %v477 = vmul.f32 %v422, %v422
      %v478 = vmul.f32 %v425, %v425
      %v479 = vmul.f32 %v428, %v428
      %v480 = vmul.f32 %v431, %v431
      %v481 = vsub.f32 %v467, %v477
      %v482 = vsub.f32 %v470, %v478
      %v483 = vsub.f32 %v473, %v479
      %v484 = vsub.f32 %v476, %v480
      %v485 = vmax.f32 %v481, 0.0
      %v486 = vmax.f32 %v482, 0.0
      %v487 = vmax.f32 %v483, 0.0
      %v488 = vmax.f32 %v484, 0.0
      %v489 = vsub.f32 %v361, %v422
      %v490 = vsub.f32 %v362, %v425
      %v491 = vsub.f32 %v363, %v428
      %v492 = vsub.f32 %v364, %v431
      %v493 = vadd.f32 %v485, 1e-05
      %v494 = vadd.f32 %v486, 1e-05
      %v495 = vadd.f32 %v487, 1e-05
      %v496 = vadd.f32 %v488, 1e-05
      %v497 = vrsqrt.pop %v493
      %v498 = vmul.f32 %v497, %v493
      %v499 = vmul.f32 %v498, %v497
      %v500 = vmul.f32 0.5, %v499
      %v501 = vsub.f32 1.5, %v500
      %v502 = vmul.f32 %v497, %v501
      %vm503 = vweird.f32 %v493
      %vm504 = vweird.f32 %v497
      %vm505 = vmor %vm503, %vm504
      %v506 = vsel %vm505, %v497, %v502
      %v507 = vrsqrt.pop %v494
      %v508 = vmul.f32 %v507, %v494
      %v509 = vmul.f32 %v508, %v507
      %v510 = vmul.f32 0.5, %v509
      %v511 = vsub.f32 1.5, %v510
      %v512 = vmul.f32 %v507, %v511
      %vm513 = vweird.f32 %v494
      %vm514 = vweird.f32 %v507
      %vm515 = vmor %vm513, %vm514
      %v516 = vsel %vm515, %v507, %v512
      %v517 = vrsqrt.pop %v495
      %v518 = vmul.f32 %v517, %v495
      %v519 = vmul.f32 %v518, %v517
      %v520 = vmul.f32 0.5, %v519
      %v521 = vsub.f32 1.5, %v520
      %v522 = vmul.f32 %v517, %v521
      %vm523 = vweird.f32 %v495
      %vm524 = vweird.f32 %v517
      %vm525 = vmor %vm523, %vm524
      %v526 = vsel %vm525, %v517, %v522
      %v527 = vrsqrt.pop %v496
      %v528 = vmul.f32 %v527, %v496
      %v529 = vmul.f32 %v528, %v527
      %v530 = vmul.f32 0.5, %v529
      %v531 = vsub.f32 1.5, %v530
      %v532 = vmul.f32 %v527, %v531
      %vm533 = vweird.f32 %v496
      %vm534 = vweird.f32 %v527
      %vm535 = vmor %vm533, %vm534
      %v536 = vsel %vm535, %v527, %v532
      %v537 = vmul.f32 %v489, %v506
      %v538 = vmul.f32 %v490, %v516
      %v539 = vmul.f32 %v491, %v526
      %v540 = vmul.f32 %v492, %v536
      %542 = vset.pattern.permute.xlu0 0
      %543 = vperm.xlu0 %542, %v369
      %v544 = vpop.permute.xlu0 %543
      %547 = vset.pattern.permute.xlu0 0
      %548 = vperm.xlu0 %547, %v370
      %v549 = vpop.permute.xlu0 %548
      %552 = vset.pattern.permute.xlu0 0
      %553 = vperm.xlu0 %552, %v371
      %v554 = vpop.permute.xlu0 %553
      %557 = vset.pattern.permute.xlu0 0
      %558 = vperm.xlu0 %557, %v372
      %v559 = vpop.permute.xlu0 %558
      %v561 = vmul.f32 %v537, %v544
      %v562 = vmul.f32 %v538, %v549
      %v563 = vmul.f32 %v539, %v554
      %v564 = vmul.f32 %v540, %v559
      %566 = vset.pattern.permute.xlu0 0
      %567 = vperm.xlu0 %566, %v373
      %v568 = vpop.permute.xlu0 %567
      %571 = vset.pattern.permute.xlu0 0
      %572 = vperm.xlu0 %571, %v374
      %v573 = vpop.permute.xlu0 %572
      %576 = vset.pattern.permute.xlu0 0
      %577 = vperm.xlu0 %576, %v375
      %v578 = vpop.permute.xlu0 %577
      %581 = vset.pattern.permute.xlu0 0
      %582 = vperm.xlu0 %581, %v376
      %v583 = vpop.permute.xlu0 %582
      %v585 = vadd.f32 %v561, %v568
      %v586 = vadd.f32 %v562, %v573
      %v587 = vadd.f32 %v563, %v578
      %v588 = vadd.f32 %v564, %v583
      %v589 = vxor.u32 %v585, 2147483648
      %v590 = vxor.u32 %v586, 2147483648
      %v591 = vxor.u32 %v587, 2147483648
      %v592 = vxor.u32 %v588, 2147483648
      %v593 = vmul.f32 %v589, 1.442695
      %v594 = vpow.pop %v593
      %v595 = vmul.f32 %v590, 1.442695
      %v596 = vpow.pop %v595
      %v597 = vmul.f32 %v591, 1.442695
      %v598 = vpow.pop %v597
      %v599 = vmul.f32 %v592, 1.442695
      %v600 = vpow.pop %v599
      %v601 = vadd.f32 %v594, 1.0
      %v602 = vadd.f32 %v596, 1.0
      %v603 = vadd.f32 %v598, 1.0
      %v604 = vadd.f32 %v600, 1.0
      %v605 = vrcp.pop %v601
      %v606 = vmul.f32 %v601, %v605
      %v607 = vsub.f32 1.0, %v606
      %v608 = vmul.f32 %v605, %v607
      %v609 = vadd.f32 %v605, %v608
      %vm610 = vweird.f32 %v601
      %vm611 = vweird.f32 %v605
      %vm612 = vmor %vm610, %vm611
      %v613 = vsel %vm612, %v605, %v609
      %v614 = vand.u32 2147483647, %v601
      %vm615 = vcmp.eq.f32.partialorder %v614, 8.507059e+37
      %v616 = vand.u32 %v601, 2147483648
      %v617 = vor.u32 1.1754944e-38, %v616
      %v618 = vsel %vm615, %v617, %v613
      %v619 = vmul.f32 1.0, %v618
      %v620 = vrcp.pop %v602
      %v621 = vmul.f32 %v602, %v620
      %v622 = vsub.f32 1.0, %v621
      %v623 = vmul.f32 %v620, %v622
      %v624 = vadd.f32 %v620, %v623
      %vm625 = vweird.f32 %v602
      %vm626 = vweird.f32 %v620
      %vm627 = vmor %vm625, %vm626
      %v628 = vsel %vm627, %v620, %v624
      %v629 = vand.u32 2147483647, %v602
      %vm630 = vcmp.eq.f32.partialorder %v629, 8.507059e+37
      %v631 = vand.u32 %v602, 2147483648
      %v632 = vor.u32 1.1754944e-38, %v631
      %v633 = vsel %vm630, %v632, %v628
      %v634 = vmul.f32 1.0, %v633
      %v635 = vrcp.pop %v603
      %v636 = vmul.f32 %v603, %v635
      %v637 = vsub.f32 1.0, %v636
      %v638 = vmul.f32 %v635, %v637
      %v639 = vadd.f32 %v635, %v638
      %vm640 = vweird.f32 %v603
      %vm641 = vweird.f32 %v635
      %vm642 = vmor %vm640, %vm641
      %v643 = vsel %vm642, %v635, %v639
      %v644 = vand.u32 2147483647, %v603
      %vm645 = vcmp.eq.f32.partialorder %v644, 8.507059e+37
      %v646 = vand.u32 %v603, 2147483648
      %v647 = vor.u32 1.1754944e-38, %v646
      %v648 = vsel %vm645, %v647, %v643
      %v649 = vmul.f32 1.0, %v648
      %v650 = vrcp.pop %v604
      %v651 = vmul.f32 %v604, %v650
      %v652 = vsub.f32 1.0, %v651
      %v653 = vmul.f32 %v650, %v652
      %v654 = vadd.f32 %v650, %v653
      %vm655 = vweird.f32 %v604
      %vm656 = vweird.f32 %v650
      %vm657 = vmor %vm655, %vm656
      %v658 = vsel %vm657, %v650, %v654
      %v659 = vand.u32 2147483647, %v604
      %vm660 = vcmp.eq.f32.partialorder %v659, 8.507059e+37
      %v661 = vand.u32 %v604, 2147483648
      %v662 = vor.u32 1.1754944e-38, %v661
      %v663 = vsel %vm660, %v662, %v658
      %v664 = vmul.f32 1.0, %v663
      %v665 = vmul.f32 %v585, %v619
      %v666 = vmul.f32 %v586, %v634
      %v667 = vmul.f32 %v587, %v649
      %v668 = vmul.f32 %v588, %v664
      %vm669 = vcmask 80896
      %670 = vst.msk [vmem:[#allocation2] sm:$0xff] %vm669, 0.0
      %671 = vst.msk [vmem:[#allocation2 + $0x8] sm:$0xff] %vm669, 0.0
      %672 = vst.msk [vmem:[#allocation2 + $0x10] sm:$0xff] %vm669, 0.0
      %673 = vst.msk [vmem:[#allocation2 + $0x18] sm:$0xff] %vm669, 0.0
      %678 = vrot.lane.b32.xlu0 %v665, 1
      %v679 = vpop.permute.xlu0 %678
      %680 = vrot.lane.b32.xlu0 %v666, 1
      %v681 = vpop.permute.xlu0 %680
      %682 = vrot.lane.b32.xlu0 %v667, 1
      %v683 = vpop.permute.xlu0 %682
      %684 = vrot.lane.b32.xlu0 %v668, 1
      %v685 = vpop.permute.xlu0 %684
      %vm690 = vcmask 72712
      %691 = vst.msk [vmem:[#allocation2] sm:$0xff] %vm690, %v679
      %692 = vst.msk [vmem:[#allocation2 + $0x8] sm:$0xff] %vm690, %v681
      %693 = vst.msk [vmem:[#allocation2 + $0x10] sm:$0xff] %vm690, %v683
      %694 = vst.msk [vmem:[#allocation2 + $0x18] sm:$0xff] %vm690, %v685
      %v695 = vld [vmem:[%s4] sm:$0xf]
      %v696 = vld [vmem:[%s4 + $0x4] sm:$0xf]
      %v697 = vld [vmem:[%s4 + $0x8] sm:$0xf]
      %v698 = vld [vmem:[%s4 + $0xc] sm:$0xf]
      %v699 = vld [vmem:[#allocation2] sm:$0xff]
      %v700 = vld [vmem:[#allocation2 + $0x8] sm:$0xff]
      %v701 = vld [vmem:[#allocation2 + $0x10] sm:$0xff]
      %v702 = vld [vmem:[#allocation2 + $0x18] sm:$0xff]
      %v703 = vpack.c.bf16 %v700, %v699
      %v704 = vpack.c.bf16 %v702, %v701
      %s705 = scalar_lea.vmem %s4, 16
      %v706 = vld [vmem:[%s705] sm:$0xf]
      %v707 = vld [vmem:[%s705 + $0x4] sm:$0xf]
      %v708 = vld [vmem:[%s705 + $0x8] sm:$0xf]
      %v709 = vld [vmem:[%s705 + $0xc] sm:$0xf]
      %v714 = vunpack.c.l.b16 %v706
      %v715 = vunpack.c.l.b16 %v707
      %v716 = vunpack.c.l.b16 %v708
      %v717 = vunpack.c.l.b16 %v709
      %v718 = vpack.c.b16 %v715, %v714
      %v719 = vpack.c.b16 %v717, %v716
      %722 = vrot.lane.b32.xlu0 %v703, 127
      %v723 = vpop.permute.xlu0 %722
      %724 = vrot.lane.b32.xlu0 %v704, 127
      %v725 = vpop.permute.xlu0 %724
      %v729 = vsel %vm377, %v718, 0
      %v732 = vsel %vm377, %v719, 0
      %734 = vmatpush.bf16.msra.mxu0 0
      %735 = vmatpush.bf16.msra.mxu0 0
      %736 = vmatpush.bf16.msra.mxu0 0
      %737 = vmatpush.bf16.msra.mxu0 0
      %738 = vmatpush.bf16.msra.mxu0 0
      %739 = vmatpush.bf16.msra.mxu0 0
      %740 = vmatpush.bf16.msra.mxu0 %v725
      %741 = vmatpush.bf16.msra.mxu0 %v723
      %742 = vmatmul.bf16.gmra.mxu0 %v729
      %v743 = vpop.f32.mrf.mxu0
      %v744 = vadd.f32 0.0, %v743
      %v745 = vpop.f32.mrf.mxu0
      %v746 = vadd.f32 0.0, %v745
      %747 = vmatmul.bf16.gmra.mxu0 %v732
      %v748 = vpop.f32.mrf.mxu0
      %v749 = vadd.f32 0.0, %v748
      %v750 = vpop.f32.mrf.mxu0
      %v751 = vadd.f32 0.0, %v750
      %752 = vdwg.mxu0
      %v757 = vunpack.c.l.b16 %v695
      %v758 = vunpack.c.l.b16 %v696
      %v759 = vunpack.c.l.b16 %v697
      %v760 = vunpack.c.l.b16 %v698
      %v761 = vpack.c.b16 %v758, %v757
      %v762 = vpack.c.b16 %v760, %v759
      %v764 = vsel %vm377, %v761, 0
      %v767 = vsel %vm377, %v762, 0
      %769 = vmatpush.bf16.msra.mxu0 0
      %770 = vmatpush.bf16.msra.mxu0 0
      %771 = vmatpush.bf16.msra.mxu0 0
      %772 = vmatpush.bf16.msra.mxu0 0
      %773 = vmatpush.bf16.msra.mxu0 0
      %774 = vmatpush.bf16.msra.mxu0 0
      %775 = vmatpush.bf16.msra.mxu0 %v704
      %776 = vmatpush.bf16.msra.mxu0 %v703
      %777 = vmatmul.bf16.gmra.mxu0 %v764
      %v778 = vpop.f32.mrf.mxu0
      %v779 = vadd.f32 %v744, %v778
      %v780 = vpop.f32.mrf.mxu0
      %v781 = vadd.f32 %v746, %v780
      %782 = vmatmul.bf16.gmra.mxu0 %v767
      %v783 = vpop.f32.mrf.mxu0
      %v784 = vadd.f32 %v749, %v783
      %v785 = vpop.f32.mrf.mxu0
      %v786 = vadd.f32 %v751, %v785
      %787 = vdwg.mxu0
      %s788 = scalar_lea.vmem %s4, 32
      %v789 = vld [vmem:[%s788] sm:$0xf]
      %v790 = vld [vmem:[%s788 + $0x4] sm:$0xf]
      %v791 = vld [vmem:[%s788 + $0x8] sm:$0xf]
      %v792 = vld [vmem:[%s788 + $0xc] sm:$0xf]
      %v797 = vunpack.c.l.b16 %v789
      %v798 = vunpack.c.l.b16 %v790
      %v799 = vunpack.c.l.b16 %v791
      %v800 = vunpack.c.l.b16 %v792
      %v801 = vpack.c.b16 %v798, %v797
      %v802 = vpack.c.b16 %v800, %v799
      %803 = vrot.lane.b32.xlu0 %v703, 126
      %v804 = vpop.permute.xlu0 %803
      %805 = vrot.lane.b32.xlu0 %v704, 126
      %v806 = vpop.permute.xlu0 %805
      %v810 = vsel %vm377, %v801, 0
      %v813 = vsel %vm377, %v802, 0
      %815 = vmatpush.bf16.msra.mxu0 0
      %816 = vmatpush.bf16.msra.mxu0 0
      %817 = vmatpush.bf16.msra.mxu0 0
      %818 = vmatpush.bf16.msra.mxu0 0
      %819 = vmatpush.bf16.msra.mxu0 0
      %820 = vmatpush.bf16.msra.mxu0 0
      %821 = vmatpush.bf16.msra.mxu0 %v806
      %822 = vmatpush.bf16.msra.mxu0 %v804
      %823 = vmatmul.bf16.gmra.mxu0 %v810
      %v824 = vpop.f32.mrf.mxu0
      %v825 = vadd.f32 0.0, %v824
      %v826 = vpop.f32.mrf.mxu0
      %v827 = vadd.f32 0.0, %v826
      %828 = vmatmul.bf16.gmra.mxu0 %v813
      %v829 = vpop.f32.mrf.mxu0
      %v830 = vadd.f32 0.0, %v829
      %v831 = vpop.f32.mrf.mxu0
      %v832 = vadd.f32 0.0, %v831
      %833 = vdwg.mxu0
      %v834 = vadd.f32 %v779, %v825
      %v835 = vadd.f32 %v781, %v827
      %v836 = vadd.f32 %v784, %v830
      %v837 = vadd.f32 %v786, %v832
      %v838 = vld [vmem:[%s5] sm:$0xff]
      %v839 = vld [vmem:[%s5 + $0x8] sm:$0xff]
      %v840 = vld [vmem:[%s5 + $0x10] sm:$0xff]
      %v841 = vld [vmem:[%s5 + $0x18] sm:$0xff]
      %843 = vset.pattern.permute.xlu0 0
      %844 = vperm.xlu0 %843, %v838
      %v845 = vpop.permute.xlu0 %844
      %848 = vset.pattern.permute.xlu0 0
      %849 = vperm.xlu0 %848, %v839
      %v850 = vpop.permute.xlu0 %849
      %853 = vset.pattern.permute.xlu0 0
      %854 = vperm.xlu0 %853, %v840
      %v855 = vpop.permute.xlu0 %854
      %858 = vset.pattern.permute.xlu0 0
      %859 = vperm.xlu0 %858, %v841
      %v860 = vpop.permute.xlu0 %859
      %v862 = vadd.f32 %v834, %v845
      %v863 = vadd.f32 %v835, %v850
      %v864 = vadd.f32 %v836, %v855
      %v865 = vadd.f32 %v837, %v860
      %v866 = vld [vmem:[%s1] sm:$0xff]
      %v867 = vld [vmem:[%s1 + $0x8] sm:$0xff]
      %v868 = vld [vmem:[%s1 + $0x10] sm:$0xff]
      %v869 = vld [vmem:[%s1 + $0x18] sm:$0xff]
      %v870 = vld [vmem:[%s6] sm:$0xff]
      %v871 = vld [vmem:[%s6 + $0x8] sm:$0xff]
      %v872 = vld [vmem:[%s6 + $0x10] sm:$0xff]
      %v873 = vld [vmem:[%s6 + $0x18] sm:$0xff]
      %v874 = vld [vmem:[%s7] sm:$0xff]
      %v875 = vld [vmem:[%s7 + $0x8] sm:$0xff]
      %v876 = vld [vmem:[%s7 + $0x10] sm:$0xff]
      %v877 = vld [vmem:[%s7 + $0x18] sm:$0xff]
      %v879 = vsel %vm377, %v866, 0
      %v882 = vsel %vm377, %v867, 0
      %v885 = vsel %vm377, %v868, 0
      %v888 = vsel %vm377, %v869, 0
      %890 = vmatpush.msra.mxu0 0.0
      %891 = vmatpush.msra.mxu0 0.0
      %892 = vmatpush.msra.mxu0 0.0
      %893 = vmatpush.msra.mxu0 0.0
      %894 = vmatpush.msra.mxu0 0.0
      %895 = vmatpush.msra.mxu0 0.0
      %896 = vmatpush.msra.mxu0 0.0
      %897 = vmatpush.msra.mxu0 0.0
      %898 = vmatpush.msra.mxu0 0.0
      %899 = vmatpush.msra.mxu0 0.0
      %900 = vmatpush.msra.mxu0 0.0
      %901 = vmatpush.msra.mxu0 0.0
      %902 = vmatpush.msra.mxu0 %v865
      %903 = vmatpush.msra.mxu0 %v864
      %904 = vmatpush.msra.mxu0 %v863
      %905 = vmatpush.msra.mxu0 %v862
      %906 = vmatmul.f32.gmra.mxu0 %v879
      %v907 = vpop.f32.mrf.mxu0
      %v908 = vadd.f32 0.0, %v907
      %909 = vmatmul.f32.gmra.mxu0 %v882
      %v910 = vpop.f32.mrf.mxu0
      %v911 = vadd.f32 0.0, %v910
      %912 = vmatmul.f32.gmra.mxu0 %v885
      %v913 = vpop.f32.mrf.mxu0
      %v914 = vadd.f32 0.0, %v913
      %915 = vmatmul.f32.gmra.mxu0 %v888
      %v916 = vpop.f32.mrf.mxu0
      %v917 = vadd.f32 0.0, %v916
      %918 = vdwg.mxu0
      %v919 = vsel %vm419, %v908, 0.0
      %920 = vadd.xlane.f32.xlu0 %v919
      %v921 = vpop.xlane.xlu0 %920
      %v922 = vsel %vm419, %v911, 0.0
      %923 = vadd.xlane.f32.xlu0 %v922
      %v924 = vpop.xlane.xlu0 %923
      %v925 = vsel %vm419, %v914, 0.0
      %926 = vadd.xlane.f32.xlu0 %v925
      %v927 = vpop.xlane.xlu0 %926
      %v928 = vsel %vm419, %v917, 0.0
      %929 = vadd.xlane.f32.xlu0 %v928
      %v930 = vpop.xlane.xlu0 %929
      %v931 = vmul.f32 %v862, %v862
      %v932 = vmul.f32 %v863, %v863
      %v933 = vmul.f32 %v864, %v864
      %v934 = vmul.f32 %v865, %v865
      %935 = vmatpush.msra.mxu0 0.0
      %936 = vmatpush.msra.mxu0 0.0
      %937 = vmatpush.msra.mxu0 0.0
      %938 = vmatpush.msra.mxu0 0.0
      %939 = vmatpush.msra.mxu0 0.0
      %940 = vmatpush.msra.mxu0 0.0
      %941 = vmatpush.msra.mxu0 0.0
      %942 = vmatpush.msra.mxu0 0.0
      %943 = vmatpush.msra.mxu0 0.0
      %944 = vmatpush.msra.mxu0 0.0
      %945 = vmatpush.msra.mxu0 0.0
      %946 = vmatpush.msra.mxu0 0.0
      %947 = vmatpush.msra.mxu0 %v934
      %948 = vmatpush.msra.mxu0 %v933
      %949 = vmatpush.msra.mxu0 %v932
      %950 = vmatpush.msra.mxu0 %v931
      %951 = vmatmul.f32.gmra.mxu0 %v879
      %v952 = vpop.f32.mrf.mxu0
      %v953 = vadd.f32 0.0, %v952
      %954 = vmatmul.f32.gmra.mxu0 %v882
      %v955 = vpop.f32.mrf.mxu0
      %v956 = vadd.f32 0.0, %v955
      %957 = vmatmul.f32.gmra.mxu0 %v885
      %v958 = vpop.f32.mrf.mxu0
      %v959 = vadd.f32 0.0, %v958
      %960 = vmatmul.f32.gmra.mxu0 %v888
      %v961 = vpop.f32.mrf.mxu0
      %v962 = vadd.f32 0.0, %v961
      %963 = vdwg.mxu0
      %v964 = vsel %vm419, %v953, 0.0
      %965 = vadd.xlane.f32.xlu0 %v964
      %v966 = vpop.xlane.xlu0 %965
      %v967 = vsel %vm419, %v956, 0.0
      %968 = vadd.xlane.f32.xlu0 %v967
      %v969 = vpop.xlane.xlu0 %968
      %v970 = vsel %vm419, %v959, 0.0
      %971 = vadd.xlane.f32.xlu0 %v970
      %v972 = vpop.xlane.xlu0 %971
      %v973 = vsel %vm419, %v962, 0.0
      %974 = vadd.xlane.f32.xlu0 %v973
      %v975 = vpop.xlane.xlu0 %974
      %v976 = vmul.f32 %v921, %v921
      %v977 = vmul.f32 %v924, %v924
      %v978 = vmul.f32 %v927, %v927
      %v979 = vmul.f32 %v930, %v930
      %v980 = vsub.f32 %v966, %v976
      %v981 = vsub.f32 %v969, %v977
      %v982 = vsub.f32 %v972, %v978
      %v983 = vsub.f32 %v975, %v979
      %v984 = vmax.f32 %v980, 0.0
      %v985 = vmax.f32 %v981, 0.0
      %v986 = vmax.f32 %v982, 0.0
      %v987 = vmax.f32 %v983, 0.0
      %v988 = vsub.f32 %v862, %v921
      %v989 = vsub.f32 %v863, %v924
      %v990 = vsub.f32 %v864, %v927
      %v991 = vsub.f32 %v865, %v930
      %v992 = vadd.f32 %v984, 1e-05
      %v993 = vadd.f32 %v985, 1e-05
      %v994 = vadd.f32 %v986, 1e-05
      %v995 = vadd.f32 %v987, 1e-05
      %v996 = vrsqrt.pop %v992
      %v997 = vmul.f32 %v996, %v992
      %v998 = vmul.f32 %v997, %v996
      %v999 = vmul.f32 0.5, %v998
      %v1000 = vsub.f32 1.5, %v999
      %v1001 = vmul.f32 %v996, %v1000
      %vm1002 = vweird.f32 %v992
      %vm1003 = vweird.f32 %v996
      %vm1004 = vmor %vm1002, %vm1003
      %v1005 = vsel %vm1004, %v996, %v1001
      %v1006 = vrsqrt.pop %v993
      %v1007 = vmul.f32 %v1006, %v993
      %v1008 = vmul.f32 %v1007, %v1006
      %v1009 = vmul.f32 0.5, %v1008
      %v1010 = vsub.f32 1.5, %v1009
      %v1011 = vmul.f32 %v1006, %v1010
      %vm1012 = vweird.f32 %v993
      %vm1013 = vweird.f32 %v1006
      %vm1014 = vmor %vm1012, %vm1013
      %v1015 = vsel %vm1014, %v1006, %v1011
      %v1016 = vrsqrt.pop %v994
      %v1017 = vmul.f32 %v1016, %v994
      %v1018 = vmul.f32 %v1017, %v1016
      %v1019 = vmul.f32 0.5, %v1018
      %v1020 = vsub.f32 1.5, %v1019
      %v1021 = vmul.f32 %v1016, %v1020
      %vm1022 = vweird.f32 %v994
      %vm1023 = vweird.f32 %v1016
      %vm1024 = vmor %vm1022, %vm1023
      %v1025 = vsel %vm1024, %v1016, %v1021
      %v1026 = vrsqrt.pop %v995
      %v1027 = vmul.f32 %v1026, %v995
      %v1028 = vmul.f32 %v1027, %v1026
      %v1029 = vmul.f32 0.5, %v1028
      %v1030 = vsub.f32 1.5, %v1029
      %v1031 = vmul.f32 %v1026, %v1030
      %vm1032 = vweird.f32 %v995
      %vm1033 = vweird.f32 %v1026
      %vm1034 = vmor %vm1032, %vm1033
      %v1035 = vsel %vm1034, %v1026, %v1031
      %v1036 = vmul.f32 %v988, %v1005
      %v1037 = vmul.f32 %v989, %v1015
      %v1038 = vmul.f32 %v990, %v1025
      %v1039 = vmul.f32 %v991, %v1035
      %1041 = vset.pattern.permute.xlu0 0
      %1042 = vperm.xlu0 %1041, %v870
      %v1043 = vpop.permute.xlu0 %1042
      %1046 = vset.pattern.permute.xlu0 0
      %1047 = vperm.xlu0 %1046, %v871
      %v1048 = vpop.permute.xlu0 %1047
      %1051 = vset.pattern.permute.xlu0 0
      %1052 = vperm.xlu0 %1051, %v872
      %v1053 = vpop.permute.xlu0 %1052
      %1056 = vset.pattern.permute.xlu0 0
      %1057 = vperm.xlu0 %1056, %v873
      %v1058 = vpop.permute.xlu0 %1057
      %v1060 = vmul.f32 %v1036, %v1043
      %v1061 = vmul.f32 %v1037, %v1048
      %v1062 = vmul.f32 %v1038, %v1053
      %v1063 = vmul.f32 %v1039, %v1058
      %1065 = vset.pattern.permute.xlu0 0
      %1066 = vperm.xlu0 %1065, %v874
      %v1067 = vpop.permute.xlu0 %1066
      %1070 = vset.pattern.permute.xlu0 0
      %1071 = vperm.xlu0 %1070, %v875
      %v1072 = vpop.permute.xlu0 %1071
      %1075 = vset.pattern.permute.xlu0 0
      %1076 = vperm.xlu0 %1075, %v876
      %v1077 = vpop.permute.xlu0 %1076
      %1080 = vset.pattern.permute.xlu0 0
      %1081 = vperm.xlu0 %1080, %v877
      %v1082 = vpop.permute.xlu0 %1081
      %v1084 = vadd.f32 %v1060, %v1067
      %v1085 = vadd.f32 %v1061, %v1072
      %v1086 = vadd.f32 %v1062, %v1077
      %v1087 = vadd.f32 %v1063, %v1082
      %v1088 = vxor.u32 %v1084, 2147483648
      %v1089 = vxor.u32 %v1085, 2147483648
      %v1090 = vxor.u32 %v1086, 2147483648
      %v1091 = vxor.u32 %v1087, 2147483648
      %v1092 = vmul.f32 %v1088, 1.442695
      %v1093 = vpow.pop %v1092
      %v1094 = vmul.f32 %v1089, 1.442695
      %v1095 = vpow.pop %v1094
      %v1096 = vmul.f32 %v1090, 1.442695
      %v1097 = vpow.pop %v1096
      %v1098 = vmul.f32 %v1091, 1.442695
      %v1099 = vpow.pop %v1098
      %v1100 = vadd.f32 %v1093, 1.0
      %v1101 = vadd.f32 %v1095, 1.0
      %v1102 = vadd.f32 %v1097, 1.0
      %v1103 = vadd.f32 %v1099, 1.0
      %v1104 = vrcp.pop %v1100
      %v1105 = vmul.f32 %v1100, %v1104
      %v1106 = vsub.f32 1.0, %v1105
      %v1107 = vmul.f32 %v1104, %v1106
      %v1108 = vadd.f32 %v1104, %v1107
      %vm1109 = vweird.f32 %v1100
      %vm1110 = vweird.f32 %v1104
      %vm1111 = vmor %vm1109, %vm1110
      %v1112 = vsel %vm1111, %v1104, %v1108
      %v1113 = vand.u32 2147483647, %v1100
      %vm1114 = vcmp.eq.f32.partialorder %v1113, 8.507059e+37
      %v1115 = vand.u32 %v1100, 2147483648
      %v1116 = vor.u32 1.1754944e-38, %v1115
      %v1117 = vsel %vm1114, %v1116, %v1112
      %v1118 = vmul.f32 1.0, %v1117
      %v1119 = vrcp.pop %v1101
      %v1120 = vmul.f32 %v1101, %v1119
      %v1121 = vsub.f32 1.0, %v1120
      %v1122 = vmul.f32 %v1119, %v1121
      %v1123 = vadd.f32 %v1119, %v1122
      %vm1124 = vweird.f32 %v1101
      %vm1125 = vweird.f32 %v1119
      %vm1126 = vmor %vm1124, %vm1125
      %v1127 = vsel %vm1126, %v1119, %v1123
      %v1128 = vand.u32 2147483647, %v1101
      %vm1129 = vcmp.eq.f32.partialorder %v1128, 8.507059e+37
      %v1130 = vand.u32 %v1101, 2147483648
      %v1131 = vor.u32 1.1754944e-38, %v1130
      %v1132 = vsel %vm1129, %v1131, %v1127
      %v1133 = vmul.f32 1.0, %v1132
      %v1134 = vrcp.pop %v1102
      %v1135 = vmul.f32 %v1102, %v1134
      %v1136 = vsub.f32 1.0, %v1135
      %v1137 = vmul.f32 %v1134, %v1136
      %v1138 = vadd.f32 %v1134, %v1137
      %vm1139 = vweird.f32 %v1102
      %vm1140 = vweird.f32 %v1134
      %vm1141 = vmor %vm1139, %vm1140
      %v1142 = vsel %vm1141, %v1134, %v1138
      %v1143 = vand.u32 2147483647, %v1102
      %vm1144 = vcmp.eq.f32.partialorder %v1143, 8.507059e+37
      %v1145 = vand.u32 %v1102, 2147483648
      %v1146 = vor.u32 1.1754944e-38, %v1145
      %v1147 = vsel %vm1144, %v1146, %v1142
      %v1148 = vmul.f32 1.0, %v1147
      %v1149 = vrcp.pop %v1103
      %v1150 = vmul.f32 %v1103, %v1149
      %v1151 = vsub.f32 1.0, %v1150
      %v1152 = vmul.f32 %v1149, %v1151
      %v1153 = vadd.f32 %v1149, %v1152
      %vm1154 = vweird.f32 %v1103
      %vm1155 = vweird.f32 %v1149
      %vm1156 = vmor %vm1154, %vm1155
      %v1157 = vsel %vm1156, %v1149, %v1153
      %v1158 = vand.u32 2147483647, %v1103
      %vm1159 = vcmp.eq.f32.partialorder %v1158, 8.507059e+37
      %v1160 = vand.u32 %v1103, 2147483648
      %v1161 = vor.u32 1.1754944e-38, %v1160
      %v1162 = vsel %vm1159, %v1161, %v1157
      %v1163 = vmul.f32 1.0, %v1162
      %v1164 = vmul.f32 %v1084, %v1118
      %v1165 = vmul.f32 %v1085, %v1133
      %v1166 = vmul.f32 %v1086, %v1148
      %v1167 = vmul.f32 %v1087, %v1163
      %1168 = vst.msk [vmem:[#allocation2] sm:$0xff] %vm669, 0.0
      %1169 = vst.msk [vmem:[#allocation2 + $0x8] sm:$0xff] %vm669, 0.0
      %1170 = vst.msk [vmem:[#allocation2 + $0x10] sm:$0xff] %vm669, 0.0
      %1171 = vst.msk [vmem:[#allocation2 + $0x18] sm:$0xff] %vm669, 0.0
      %1176 = vrot.lane.b32.xlu0 %v1164, 1
      %v1177 = vpop.permute.xlu0 %1176
      %1178 = vrot.lane.b32.xlu0 %v1165, 1
      %v1179 = vpop.permute.xlu0 %1178
      %1180 = vrot.lane.b32.xlu0 %v1166, 1
      %v1181 = vpop.permute.xlu0 %1180
      %1182 = vrot.lane.b32.xlu0 %v1167, 1
      %v1183 = vpop.permute.xlu0 %1182
      %1188 = vst.msk [vmem:[#allocation2] sm:$0xff] %vm690, %v1177
      %1189 = vst.msk [vmem:[#allocation2 + $0x8] sm:$0xff] %vm690, %v1179
      %1190 = vst.msk [vmem:[#allocation2 + $0x10] sm:$0xff] %vm690, %v1181
      %1191 = vst.msk [vmem:[#allocation2 + $0x18] sm:$0xff] %vm690, %v1183
      %v1192 = vld [vmem:[%s8] sm:$0xf]
      %v1193 = vld [vmem:[%s8 + $0x4] sm:$0xf]
      %v1194 = vld [vmem:[%s8 + $0x8] sm:$0xf]
      %v1195 = vld [vmem:[%s8 + $0xc] sm:$0xf]
      %v1196 = vld [vmem:[#allocation2] sm:$0xff]
      %v1197 = vld [vmem:[#allocation2 + $0x8] sm:$0xff]
      %v1198 = vld [vmem:[#allocation2 + $0x10] sm:$0xff]
      %v1199 = vld [vmem:[#allocation2 + $0x18] sm:$0xff]
      %v1200 = vpack.c.bf16 %v1197, %v1196
      %v1201 = vpack.c.bf16 %v1199, %v1198
      %s1202 = scalar_lea.vmem %s8, 16
      %v1203 = vld [vmem:[%s1202] sm:$0xf]
      %v1204 = vld [vmem:[%s1202 + $0x4] sm:$0xf]
      %v1205 = vld [vmem:[%s1202 + $0x8] sm:$0xf]
      %v1206 = vld [vmem:[%s1202 + $0xc] sm:$0xf]
      %v1211 = vunpack.c.l.b16 %v1203
      %v1212 = vunpack.c.l.b16 %v1204
      %v1213 = vunpack.c.l.b16 %v1205
      %v1214 = vunpack.c.l.b16 %v1206
      %v1215 = vpack.c.b16 %v1212, %v1211
      %v1216 = vpack.c.b16 %v1214, %v1213
      %1219 = vrot.lane.b32.xlu0 %v1200, 127
      %v1220 = vpop.permute.xlu0 %1219
      %1221 = vrot.lane.b32.xlu0 %v1201, 127
      %v1222 = vpop.permute.xlu0 %1221
      %v1226 = vsel %vm377, %v1215, 0
      %v1229 = vsel %vm377, %v1216, 0
      %1231 = vmatpush.bf16.msra.mxu0 0
      %1232 = vmatpush.bf16.msra.mxu0 0
      %1233 = vmatpush.bf16.msra.mxu0 0
      %1234 = vmatpush.bf16.msra.mxu0 0
      %1235 = vmatpush.bf16.msra.mxu0 0
      %1236 = vmatpush.bf16.msra.mxu0 0
      %1237 = vmatpush.bf16.msra.mxu0 %v1222
      %1238 = vmatpush.bf16.msra.mxu0 %v1220
      %1239 = vmatmul.bf16.gmra.mxu0 %v1226
      %v1240 = vpop.f32.mrf.mxu0
      %v1241 = vadd.f32 0.0, %v1240
      %v1242 = vpop.f32.mrf.mxu0
      %v1243 = vadd.f32 0.0, %v1242
      %1244 = vmatmul.bf16.gmra.mxu0 %v1229
      %v1245 = vpop.f32.mrf.mxu0
      %v1246 = vadd.f32 0.0, %v1245
      %v1247 = vpop.f32.mrf.mxu0
      %v1248 = vadd.f32 0.0, %v1247
      %1249 = vdwg.mxu0
      %v1254 = vunpack.c.l.b16 %v1192
      %v1255 = vunpack.c.l.b16 %v1193
      %v1256 = vunpack.c.l.b16 %v1194
      %v1257 = vunpack.c.l.b16 %v1195
      %v1258 = vpack.c.b16 %v1255, %v1254
      %v1259 = vpack.c.b16 %v1257, %v1256
      %v1261 = vsel %vm377, %v1258, 0
      %v1264 = vsel %vm377, %v1259, 0
      %1266 = vmatpush.bf16.msra.mxu0 0
      %1267 = vmatpush.bf16.msra.mxu0 0
      %1268 = vmatpush.bf16.msra.mxu0 0
      %1269 = vmatpush.bf16.msra.mxu0 0
      %1270 = vmatpush.bf16.msra.mxu0 0
      %1271 = vmatpush.bf16.msra.mxu0 0
      %1272 = vmatpush.bf16.msra.mxu0 %v1201
      %1273 = vmatpush.bf16.msra.mxu0 %v1200
      %1274 = vmatmul.bf16.gmra.mxu0 %v1261
      %v1275 = vpop.f32.mrf.mxu0
      %v1276 = vadd.f32 %v1241, %v1275
      %v1277 = vpop.f32.mrf.mxu0
      %v1278 = vadd.f32 %v1243, %v1277
      %1279 = vmatmul.bf16.gmra.mxu0 %v1264
      %v1280 = vpop.f32.mrf.mxu0
      %v1281 = vadd.f32 %v1246, %v1280
      %v1282 = vpop.f32.mrf.mxu0
      %v1283 = vadd.f32 %v1248, %v1282
      %1284 = vdwg.mxu0
      %s1285 = scalar_lea.vmem %s8, 32
      %v1286 = vld [vmem:[%s1285] sm:$0xf]
      %v1287 = vld [vmem:[%s1285 + $0x4] sm:$0xf]
      %v1288 = vld [vmem:[%s1285 + $0x8] sm:$0xf]
      %v1289 = vld [vmem:[%s1285 + $0xc] sm:$0xf]
      %v1294 = vunpack.c.l.b16 %v1286
      %v1295 = vunpack.c.l.b16 %v1287
      %v1296 = vunpack.c.l.b16 %v1288
      %v1297 = vunpack.c.l.b16 %v1289
      %v1298 = vpack.c.b16 %v1295, %v1294
      %v1299 = vpack.c.b16 %v1297, %v1296
      %1300 = vrot.lane.b32.xlu0 %v1200, 126
      %v1301 = vpop.permute.xlu0 %1300
      %1302 = vrot.lane.b32.xlu0 %v1201, 126
      %v1303 = vpop.permute.xlu0 %1302
      %v1307 = vsel %vm377, %v1298, 0
      %v1310 = vsel %vm377, %v1299, 0
      %1312 = vmatpush.bf16.msra.mxu0 0
      %1313 = vmatpush.bf16.msra.mxu0 0
      %1314 = vmatpush.bf16.msra.mxu0 0
      %1315 = vmatpush.bf16.msra.mxu0 0
      %1316 = vmatpush.bf16.msra.mxu0 0
      %1317 = vmatpush.bf16.msra.mxu0 0
      %1318 = vmatpush.bf16.msra.mxu0 %v1303
      %1319 = vmatpush.bf16.msra.mxu0 %v1301
      %1320 = vmatmul.bf16.gmra.mxu0 %v1307
      %v1321 = vpop.f32.mrf.mxu0
      %v1322 = vadd.f32 0.0, %v1321
      %v1323 = vpop.f32.mrf.mxu0
      %v1324 = vadd.f32 0.0, %v1323
      %1325 = vmatmul.bf16.gmra.mxu0 %v1310
      %v1326 = vpop.f32.mrf.mxu0
      %v1327 = vadd.f32 0.0, %v1326
      %v1328 = vpop.f32.mrf.mxu0
      %v1329 = vadd.f32 0.0, %v1328
      %1330 = vdwg.mxu0
      %v1331 = vadd.f32 %v1276, %v1322
      %v1332 = vadd.f32 %v1278, %v1324
      %v1333 = vadd.f32 %v1281, %v1327
      %v1334 = vadd.f32 %v1283, %v1329
      %v1335 = vld [vmem:[%s9] sm:$0xff]
      %v1336 = vld [vmem:[%s9 + $0x8] sm:$0xff]
      %v1337 = vld [vmem:[%s9 + $0x10] sm:$0xff]
      %v1338 = vld [vmem:[%s9 + $0x18] sm:$0xff]
      %1340 = vset.pattern.permute.xlu0 0
      %1341 = vperm.xlu0 %1340, %v1335
      %v1342 = vpop.permute.xlu0 %1341
      %1345 = vset.pattern.permute.xlu0 0
      %1346 = vperm.xlu0 %1345, %v1336
      %v1347 = vpop.permute.xlu0 %1346
      %1350 = vset.pattern.permute.xlu0 0
      %1351 = vperm.xlu0 %1350, %v1337
      %v1352 = vpop.permute.xlu0 %1351
      %1355 = vset.pattern.permute.xlu0 0
      %1356 = vperm.xlu0 %1355, %v1338
      %v1357 = vpop.permute.xlu0 %1356
      %v1359 = vadd.f32 %v1331, %v1342
      %v1360 = vadd.f32 %v1332, %v1347
      %v1361 = vadd.f32 %v1333, %v1352
      %v1362 = vadd.f32 %v1334, %v1357
      %v1363 = vadd.f32 %v361, %v1359
      %v1364 = vadd.f32 %v362, %v1360
      %v1365 = vadd.f32 %v363, %v1361
      %v1366 = vadd.f32 %v364, %v1362
      %1367 = vst.msk [vmem:[%s359] sm:$0xff] %vm419, %v1363
      %1368 = vst.msk [vmem:[%s359 + $0x8] sm:$0xff] %vm419, %v1364
      %1369 = vst.msk [vmem:[%s359 + $0x10] sm:$0xff] %vm419, %v1365
      %1370 = vst.msk [vmem:[%s359 + $0x18] sm:$0xff] %vm419, %v1366
      %p1371 = scmp.lt.s32.totalorder %s21, 1
      %s1372 = scalar_select %p1371, %s21, 1
      %s1373 = smul.addr %s1372, 4
      %s1374 = smul.addr %s1373, 8
      %s1375 = scalar_lea.vmem %s10, %s1374
      // Predicated region
      $region61: #{_lambda_.17} parent=59 // pred_check
        %p1376 = pneg %p254
      $region62: #{_lambda_.17} parent=59 // pred_check_branch
        %1378 = sbr.rel (%p1376) target = $region64
      $region63: #{_lambda_.17} parent=59 // pred_region
        _
      $region64: #{_lambda_.17} parent=59 // pred_fallthru
        _
    $region60: #{_lambda_.17} parent=5 // pred_fallthru
      _
    %p1379 = scmp.le.s32.totalorder 2, %s16
    // Predicated region
    $region65: #{_lambda_.17} parent=5 // pred_check
      %p1380 = pneg %p1379
    $region66: #{_lambda_.17} parent=5 // pred_check_branch
      %1382 = sbr.rel (%p1380) target = $region68
    $region67: #{_lambda_.17} parent=5 // pred_region
      %s1383 = ssub.s32 %s16, 2
      // Predicated region
      $region69: #{_lambda_.17} parent=67 // pred_check
        %p1384 = pneg %p260
      $region70: #{_lambda_.17} parent=67 // pred_check_branch
        %1386 = sbr.rel (%p1384) target = $region72
      $region71: #{_lambda_.17} parent=67 // pred_region
        %p1387 = scmp.lt.s32.totalorder %s22, 1
        %s1388 = scalar_select %p1387, %s22, 1
        %s1389 = smul.addr %s1388, 4
        %s1390 = smul.addr %s1389, 8
        %s1391 = scalar_lea.vmem %s10, %s1390
      $region72: #{_lambda_.17} parent=67 // pred_fallthru
        _
    $region68: #{_lambda_.17} parent=5 // pred_fallthru
      _
  $region6: #{_lambda_.17} parent=0 // loop_footer
    %s20 = sadd.s32 1, %s16
  $region7: #{_lambda_.17} parent=0 // loop_footer_branch
    %15 = sbr.rel target = $region3
  $region8: #{_lambda_.17} parent=0 // loop_exit
    _

// kernel: _lambda_.19
$region0: #{_lambda_.19}
  #allocation0 [shape = 'u32[]', space=smem, size = 0x4, offset = 0x4, fixed_abs, tag = 'smem constant byte address 0x4 - core index']
  #allocation1 [shape = 'u32[72,128]{1,0:T(1,128)}', space=vmem, size = 0x9000, scoped, tag = 'internal scratch']
  %s0 = inlined_call_operand.vmem [shape: bf16[64,160], index: 0, kind: input, shape index: {}]
  %s1 = inlined_call_operand.vmem [shape: bf16[160,8], index: 1, kind: input, shape index: {}]
  %s2 = inlined_call_operand.vmem [shape: f32[64,1], index: 2, kind: input, shape index: {}]
  %s3 = inlined_call_operand.vmem [shape: f32[64,8], index: 3, kind: output, shape index: {}]
  %s4 = sld [smem:[#allocation0]]
  $region22: #{_lambda_.19} parent=0
    _
  %s6 = ssub.s32 1, %s4
  %s7 = scalar_select 0, %s6, %s4
  // Predicated region
  $region2: #{_lambda_.19} parent=0 // pred_check
    _
  $region3: #{_lambda_.19} parent=0 // pred_check_branch
    %9 = sbr.rel (0) target = $region5
  $region4: #{_lambda_.19} parent=0 // pred_region
    _
  $region5: #{_lambda_.19} parent=0 // pred_fallthru
    _
  // Predicated region
  $region6: #{_lambda_.19} parent=0 // pred_check
    _
  $region7: #{_lambda_.19} parent=0 // pred_check_branch
    %11 = sbr.rel (0) target = $region9
  $region8: #{_lambda_.19} parent=0 // pred_region
    _
  $region9: #{_lambda_.19} parent=0 // pred_fallthru
    _
  // Predicated region
  $region10: #{_lambda_.19} parent=0 // pred_check
    _
  $region11: #{_lambda_.19} parent=0 // pred_check_branch
    %13 = sbr.rel (0) target = $region13
  $region12: #{_lambda_.19} parent=0 // pred_region
    _
  $region13: #{_lambda_.19} parent=0 // pred_fallthru
    _
  %v15 = vld [vmem:[%s0] sm:$0xff]
  %v16 = vld [vmem:[%s0 + $0x8] sm:$0xff]
  %v17 = vld [vmem:[%s0 + $0x10] sm:$0xff]
  %v18 = vld [vmem:[%s0 + $0x18] sm:$0xff]
  %v19 = vld [vmem:[%s0 + $0x20] sm:$0xff]
  %v20 = vld [vmem:[%s0 + $0x28] sm:$0xff]
  %v21 = vld [vmem:[%s0 + $0x30] sm:$0xff]
  %v22 = vld [vmem:[%s0 + $0x38] sm:$0xff]
  %v23 = vld [vmem:[%s1] sm:$0xf]
  %v24 = vld [vmem:[%s1 + $0x4] sm:$0xf]
  %v25 = vld [vmem:[%s1 + $0x8] sm:$0xf]
  %v26 = vld [vmem:[%s1 + $0xc] sm:$0xf]
  %v27 = vld [vmem:[%s1 + $0x10] sm:$0xf]
  %v28 = vld [vmem:[%s1 + $0x14] sm:$0xf]
  %v29 = vld [vmem:[%s1 + $0x18] sm:$0xf]
  %v30 = vld [vmem:[%s1 + $0x1c] sm:$0xf]
  %v31 = vld [vmem:[%s1 + $0x20] sm:$0xf]
  %v32 = vld [vmem:[%s1 + $0x24] sm:$0xf]
  %v33 = vld [vmem:[%s1 + $0x28] sm:$0xf]
  %v34 = vld [vmem:[%s1 + $0x2c] sm:$0xf]
  %v35 = vld [vmem:[%s1 + $0x30] sm:$0xf]
  %v36 = vld [vmem:[%s1 + $0x34] sm:$0xf]
  %v37 = vld [vmem:[%s1 + $0x38] sm:$0xf]
  %v38 = vld [vmem:[%s1 + $0x3c] sm:$0xf]
  %v39 = vld [vmem:[%s1 + $0x40] sm:$0xf]
  %v40 = vld [vmem:[%s1 + $0x44] sm:$0xf]
  %v41 = vld [vmem:[%s1 + $0x48] sm:$0xf]
  %v42 = vld [vmem:[%s1 + $0x4c] sm:$0xf]
  %v43 = vld [vmem:[%s2] sm:$0xff]
  %v44 = vld [vmem:[%s2 + $0x8] sm:$0xff]
  %v45 = vld [vmem:[%s2 + $0x10] sm:$0xff]
  %v46 = vld [vmem:[%s2 + $0x18] sm:$0xff]
  %v47 = vld [vmem:[%s2 + $0x20] sm:$0xff]
  %v48 = vld [vmem:[%s2 + $0x28] sm:$0xff]
  %v49 = vld [vmem:[%s2 + $0x30] sm:$0xff]
  %v50 = vld [vmem:[%s2 + $0x38] sm:$0xff]
  %52 = vset.pattern.permute.xlu0 0
  %53 = vperm.xlu0 %52, %v43
  %v54 = vpop.permute.xlu0 %53
  %57 = vset.pattern.permute.xlu0 0
  %58 = vperm.xlu0 %57, %v44
  %v59 = vpop.permute.xlu0 %58
  %62 = vset.pattern.permute.xlu0 0
  %63 = vperm.xlu0 %62, %v45
  %v64 = vpop.permute.xlu0 %63
  %67 = vset.pattern.permute.xlu0 0
  %68 = vperm.xlu0 %67, %v46
  %v69 = vpop.permute.xlu0 %68
  %72 = vset.pattern.permute.xlu0 0
  %73 = vperm.xlu0 %72, %v47
  %v74 = vpop.permute.xlu0 %73
  %77 = vset.pattern.permute.xlu0 0
  %78 = vperm.xlu0 %77, %v48
  %v79 = vpop.permute.xlu0 %78
  %82 = vset.pattern.permute.xlu0 0
  %83 = vperm.xlu0 %82, %v49
  %v84 = vpop.permute.xlu0 %83
  %87 = vset.pattern.permute.xlu0 0
  %88 = vperm.xlu0 %87, %v50
  %v89 = vpop.permute.xlu0 %88
  %v99 = vunpack.c.l.b16 %v15
  %v100 = vunpack.c.h.b16 %v15
  %v101 = vunpack.c.l.b16 %v16
  %v102 = vunpack.c.h.b16 %v16
  %v103 = vunpack.c.l.b16 %v17
  %v104 = vunpack.c.h.b16 %v17
  %v105 = vunpack.c.l.b16 %v18
  %v106 = vunpack.c.h.b16 %v18
  %v107 = vunpack.c.l.b16 %v19
  %v108 = vunpack.c.h.b16 %v19
  %v109 = vunpack.c.l.b16 %v20
  %v110 = vunpack.c.h.b16 %v20
  %v111 = vunpack.c.l.b16 %v21
  %v112 = vunpack.c.h.b16 %v21
  %v113 = vunpack.c.l.b16 %v22
  %v114 = vunpack.c.h.b16 %v22
  %v115 = vpack.c.b16 %v101, %v99
  %v116 = vpack.c.b16 %v102, %v100
  %v117 = vpack.c.b16 %v105, %v103
  %v118 = vpack.c.b16 %v106, %v104
  %v119 = vpack.c.b16 %v109, %v107
  %v120 = vpack.c.b16 %v110, %v108
  %v121 = vpack.c.b16 %v113, %v111
  %v122 = vpack.c.b16 %v114, %v112
  %v147 = vunpack.c.l.b16 %v23
  %v148 = vunpack.c.l.b16 %v24
  %v149 = vunpack.c.l.b16 %v25
  %v150 = vunpack.c.l.b16 %v26
  %v151 = vunpack.c.l.b16 %v27
  %v152 = vunpack.c.l.b16 %v28
  %v153 = vunpack.c.l.b16 %v29
  %v154 = vunpack.c.l.b16 %v30
  %v155 = vunpack.c.l.b16 %v31
  %v156 = vunpack.c.l.b16 %v32
  %v157 = vunpack.c.l.b16 %v33
  %v158 = vunpack.c.l.b16 %v34
  %v159 = vunpack.c.l.b16 %v35
  %v160 = vunpack.c.l.b16 %v36
  %v161 = vunpack.c.l.b16 %v37
  %v162 = vunpack.c.l.b16 %v38
  %v163 = vunpack.c.l.b16 %v39
  %v164 = vunpack.c.l.b16 %v40
  %v165 = vunpack.c.l.b16 %v41
  %v166 = vunpack.c.l.b16 %v42
  %v167 = vpack.c.b16 %v148, %v147
  %v168 = vpack.c.b16 %v150, %v149
  %v169 = vpack.c.b16 %v152, %v151
  %v170 = vpack.c.b16 %v154, %v153
  %v171 = vpack.c.b16 %v156, %v155
  %v172 = vpack.c.b16 %v158, %v157
  %v173 = vpack.c.b16 %v160, %v159
  %v174 = vpack.c.b16 %v162, %v161
  %v175 = vpack.c.b16 %v164, %v163
  %v176 = vpack.c.b16 %v166, %v165
  %vm187 = vcmask 261120
  %v189 = vsel %vm187, %v116, 0
  %v192 = vsel %vm187, %v118, 0
  %v195 = vsel %vm187, %v120, 0
  %v198 = vsel %vm187, %v122, 0
  %200 = vmatpush.bf16.msra.mxu0 %v174
  %201 = vmatpush.bf16.msra.mxu0 %v173
  %202 = vmatpush.bf16.msra.mxu0 %v172
  %203 = vmatpush.bf16.msra.mxu0 %v171
  %204 = vmatpush.bf16.msra.mxu0 %v170
  %205 = vmatpush.bf16.msra.mxu0 %v169
  %206 = vmatpush.bf16.msra.mxu0 %v168
  %207 = vmatpush.bf16.msra.mxu0 %v167
  %208 = vmatmul.bf16.gmra.mxu0 %v115
  %v209 = vpop.f32.mrf.mxu0
  %v210 = vadd.f32 %v54, %v209
  %v211 = vpop.f32.mrf.mxu0
  %v212 = vadd.f32 %v59, %v211
  %213 = vmatmul.bf16.gmra.mxu0 %v117
  %v214 = vpop.f32.mrf.mxu0
  %v215 = vadd.f32 %v64, %v214
  %v216 = vpop.f32.mrf.mxu0
  %v217 = vadd.f32 %v69, %v216
  %218 = vmatmul.bf16.gmra.mxu0 %v119
  %v219 = vpop.f32.mrf.mxu0
  %v220 = vadd.f32 %v74, %v219
  %v221 = vpop.f32.mrf.mxu0
  %v222 = vadd.f32 %v79, %v221
  %223 = vmatmul.bf16.gmra.mxu0 %v121
  %v224 = vpop.f32.mrf.mxu0
  %v225 = vadd.f32 %v84, %v224
  %v226 = vpop.f32.mrf.mxu0
  %v227 = vadd.f32 %v89, %v226
  %228 = vdwg.mxu0
  %229 = vmatpush.bf16.msra.mxu0 0
  %230 = vmatpush.bf16.msra.mxu0 0
  %231 = vmatpush.bf16.msra.mxu0 0
  %232 = vmatpush.bf16.msra.mxu0 0
  %233 = vmatpush.bf16.msra.mxu0 0
  %234 = vmatpush.bf16.msra.mxu0 0
  %235 = vmatpush.bf16.msra.mxu0 %v176
  %236 = vmatpush.bf16.msra.mxu0 %v175
  %237 = vmatmul.bf16.gmra.mxu0 %v189
  %v238 = vpop.f32.mrf.mxu0
  %v239 = vadd.f32 %v210, %v238
  %v240 = vpop.f32.mrf.mxu0
  %v241 = vadd.f32 %v212, %v240
  %242 = vmatmul.bf16.gmra.mxu0 %v192
  %v243 = vpop.f32.mrf.mxu0
  %v244 = vadd.f32 %v215, %v243
  %v245 = vpop.f32.mrf.mxu0
  %v246 = vadd.f32 %v217, %v245
  %247 = vmatmul.bf16.gmra.mxu0 %v195
  %v248 = vpop.f32.mrf.mxu0
  %v249 = vadd.f32 %v220, %v248
  %v250 = vpop.f32.mrf.mxu0
  %v251 = vadd.f32 %v222, %v250
  %252 = vmatmul.bf16.gmra.mxu0 %v198
  %v253 = vpop.f32.mrf.mxu0
  %v254 = vadd.f32 %v225, %v253
  %v255 = vpop.f32.mrf.mxu0
  %v256 = vadd.f32 %v227, %v255
  %257 = vdwg.mxu0
  %vm258 = vcmask 64512
  %259 = vst.msk [vmem:[%s3] sm:$0xff] %vm258, %v239
  %260 = vst.msk [vmem:[%s3 + $0x8] sm:$0xff] %vm258, %v241
  %261 = vst.msk [vmem:[%s3 + $0x10] sm:$0xff] %vm258, %v244
  %262 = vst.msk [vmem:[%s3 + $0x18] sm:$0xff] %vm258, %v246
  %263 = vst.msk [vmem:[%s3 + $0x20] sm:$0xff] %vm258, %v249
  %264 = vst.msk [vmem:[%s3 + $0x28] sm:$0xff] %vm258, %v251
  %265 = vst.msk [vmem:[%s3 + $0x30] sm:$0xff] %vm258, %v254
  %266 = vst.msk [vmem:[%s3 + $0x38] sm:$0xff] %vm258, %v256
  // Predicated region
  $region14: #{_lambda_.19} parent=0 // pred_check
    _
  $region15: #{_lambda_.19} parent=0 // pred_check_branch
    %268 = sbr.rel (0) target = $region17
  $region16: #{_lambda_.19} parent=0 // pred_region
    _
  $region17: #{_lambda_.19} parent=0 // pred_fallthru
    _
  // Predicated region
  $region18: #{_lambda_.19} parent=0 // pred_check
    _
  $region19: #{_lambda_.19} parent=0 // pred_check_branch
    %270 = sbr.rel (0) target = $region21
  $region20: #{_lambda_.19} parent=0 // pred_region
    _
  $region21: #{_lambda_.19} parent=0 // pred_fallthru
    _

// kernel: _lambda_.21
$region0: #{_lambda_.21}
  #allocation0 [shape = 'u32[]', space=smem, size = 0x4, offset = 0x4, fixed_abs, tag = 'smem constant byte address 0x4 - core index']
  #allocation1 [shape = 'u32[72,128]{1,0:T(1,128)}', space=vmem, size = 0x9000, scoped, tag = 'internal scratch']
  %s0 = inlined_call_operand.vmem [shape: bf16[32,64], index: 0, kind: input, shape index: {}]
  %s1 = inlined_call_operand.vmem [shape: bf16[64,8], index: 1, kind: input, shape index: {}]
  %s2 = inlined_call_operand.vmem [shape: f32[32,1], index: 2, kind: input, shape index: {}]
  %s3 = inlined_call_operand.vmem [shape: f32[32,8], index: 3, kind: output, shape index: {}]
  %s4 = sld [smem:[#allocation0]]
  $region22: #{_lambda_.21} parent=0
    _
  %s6 = ssub.s32 1, %s4
  %s7 = scalar_select 0, %s6, %s4
  // Predicated region
  $region2: #{_lambda_.21} parent=0 // pred_check
    _
  $region3: #{_lambda_.21} parent=0 // pred_check_branch
    %9 = sbr.rel (0) target = $region5
  $region4: #{_lambda_.21} parent=0 // pred_region
    _
  $region5: #{_lambda_.21} parent=0 // pred_fallthru
    _
  // Predicated region
  $region6: #{_lambda_.21} parent=0 // pred_check
    _
  $region7: #{_lambda_.21} parent=0 // pred_check_branch
    %11 = sbr.rel (0) target = $region9
  $region8: #{_lambda_.21} parent=0 // pred_region
    _
  $region9: #{_lambda_.21} parent=0 // pred_fallthru
    _
  // Predicated region
  $region10: #{_lambda_.21} parent=0 // pred_check
    _
  $region11: #{_lambda_.21} parent=0 // pred_check_branch
    %13 = sbr.rel (0) target = $region13
  $region12: #{_lambda_.21} parent=0 // pred_region
    _
  $region13: #{_lambda_.21} parent=0 // pred_fallthru
    _
  %v15 = vld [vmem:[%s0] sm:$0xf]
  %v16 = vld [vmem:[%s0 + $0x4] sm:$0xf]
  %v17 = vld [vmem:[%s0 + $0x8] sm:$0xf]
  %v18 = vld [vmem:[%s0 + $0xc] sm:$0xf]
  %v19 = vld [vmem:[%s1] sm:$0xf]
  %v20 = vld [vmem:[%s1 + $0x4] sm:$0xf]
  %v21 = vld [vmem:[%s1 + $0x8] sm:$0xf]
  %v22 = vld [vmem:[%s1 + $0xc] sm:$0xf]
  %v23 = vld [vmem:[%s1 + $0x10] sm:$0xf]
  %v24 = vld [vmem:[%s1 + $0x14] sm:$0xf]
  %v25 = vld [vmem:[%s1 + $0x18] sm:$0xf]
  %v26 = vld [vmem:[%s1 + $0x1c] sm:$0xf]
  %v27 = vld [vmem:[%s2] sm:$0xff]
  %v28 = vld [vmem:[%s2 + $0x8] sm:$0xff]
  %v29 = vld [vmem:[%s2 + $0x10] sm:$0xff]
  %v30 = vld [vmem:[%s2 + $0x18] sm:$0xff]
  %32 = vset.pattern.permute.xlu0 0
  %33 = vperm.xlu0 %32, %v27
  %v34 = vpop.permute.xlu0 %33
  %37 = vset.pattern.permute.xlu0 0
  %38 = vperm.xlu0 %37, %v28
  %v39 = vpop.permute.xlu0 %38
  %42 = vset.pattern.permute.xlu0 0
  %43 = vperm.xlu0 %42, %v29
  %v44 = vpop.permute.xlu0 %43
  %47 = vset.pattern.permute.xlu0 0
  %48 = vperm.xlu0 %47, %v30
  %v49 = vpop.permute.xlu0 %48
  %v55 = vunpack.c.l.b16 %v15
  %v56 = vunpack.c.l.b16 %v16
  %v57 = vunpack.c.l.b16 %v17
  %v58 = vunpack.c.l.b16 %v18
  %v59 = vpack.c.b16 %v56, %v55
  %v60 = vpack.c.b16 %v58, %v57
  %v69 = vunpack.c.l.b16 %v19
  %v70 = vunpack.c.l.b16 %v20
  %v71 = vunpack.c.l.b16 %v21
  %v72 = vunpack.c.l.b16 %v22
  %v73 = vunpack.c.l.b16 %v23
  %v74 = vunpack.c.l.b16 %v24
  %v75 = vunpack.c.l.b16 %v25
  %v76 = vunpack.c.l.b16 %v26
  %v77 = vpack.c.b16 %v70, %v69
  %v78 = vpack.c.b16 %v72, %v71
  %v79 = vpack.c.b16 %v74, %v73
  %v80 = vpack.c.b16 %v76, %v75
  %vm85 = vcmask 523264
  %v87 = vsel %vm85, %v59, 0
  %v90 = vsel %vm85, %v60, 0
  %92 = vmatpush.bf16.msra.mxu0 0
  %93 = vmatpush.bf16.msra.mxu0 0
  %94 = vmatpush.bf16.msra.mxu0 0
  %95 = vmatpush.bf16.msra.mxu0 0
  %96 = vmatpush.bf16.msra.mxu0 %v80
  %97 = vmatpush.bf16.msra.mxu0 %v79
  %98 = vmatpush.bf16.msra.mxu0 %v78
  %99 = vmatpush.bf16.msra.mxu0 %v77
  %100 = vmatmul.bf16.gmra.mxu0 %v87
  %v101 = vpop.f32.mrf.mxu0
  %v102 = vadd.f32 %v34, %v101
  %v103 = vpop.f32.mrf.mxu0
  %v104 = vadd.f32 %v39, %v103
  %105 = vmatmul.bf16.gmra.mxu0 %v90
  %v106 = vpop.f32.mrf.mxu0
  %v107 = vadd.f32 %v44, %v106
  %v108 = vpop.f32.mrf.mxu0
  %v109 = vadd.f32 %v49, %v108
  %110 = vdwg.mxu0
  %vm111 = vcmask 64512
  %112 = vst.msk [vmem:[%s3] sm:$0xff] %vm111, %v102
  %113 = vst.msk [vmem:[%s3 + $0x8] sm:$0xff] %vm111, %v104
  %114 = vst.msk [vmem:[%s3 + $0x10] sm:$0xff] %vm111, %v107
  %115 = vst.msk [vmem:[%s3 + $0x18] sm:$0xff] %vm111, %v109
  // Predicated region
  $region14: #{_lambda_.21} parent=0 // pred_check
    _
  $region15: #{_lambda_.21} parent=0 // pred_check_branch
    %117 = sbr.rel (0) target = $region17
  $region16: #{_lambda_.21} parent=0 // pred_region
    _
  $region17: #{_lambda_.21} parent=0 // pred_fallthru
    _
  // Predicated region
  $region18: #{_lambda_.21} parent=0 // pred_check
    _
  $region19: #{_lambda_.21} parent=0 // pred_check_branch
    %119 = sbr.rel (0) target = $region21
  $region20: #{_lambda_.21} parent=0 // pred_region
    _
  $region21: #{_lambda_.21} parent=0 // pred_fallthru
    _

// kernel: _lambda_.20
$region0: #{_lambda_.20}
  #allocation0 [shape = 'u32[]', space=smem, size = 0x4, offset = 0x4, fixed_abs, tag = 'smem constant byte address 0x4 - core index']
  #allocation1 [shape = 'u32[72,128]{1,0:T(1,128)}', space=vmem, size = 0x9000, scoped, tag = 'internal scratch']
  %s0 = inlined_call_operand.vmem [shape: f32[2,64,4], index: 0, kind: input, shape index: {}]
  %s1 = inlined_call_operand.vmem [shape: f32[64,64], index: 1, kind: input, shape index: {}]
  %s2 = inlined_call_operand.vmem [shape: f32[64,1], index: 2, kind: input, shape index: {}]
  %s3 = inlined_call_operand.vmem [shape: f32[64,1], index: 3, kind: input, shape index: {}]
  %s4 = inlined_call_operand.vmem [shape: f32[2,64,4], index: 4, kind: output, shape index: {}]
  %s5 = sld [smem:[#allocation0]]
  $region49: #{_lambda_.20} parent=0
    _
  %s7 = ssub.s32 1, %s5
  %s8 = scalar_select 0, %s7, %s5
  loop: start=0, step=1, limit=4
  $region2: #{_lambda_.20} parent=0 // loop_pre_header
    _
  $region3: #{_lambda_.20} parent=0 // loop_header
    %s10 = sphi 0, %s14
    %p11 = scmp.ge.s32.totalorder %s10, 4
    %s20 = sphi 0, %s22
    %s23 = sphi 0, %s20
    %s24 = sphi 0, %s23
    %s40 = sphi 0, %s24
    %s44 = sphi 0, %s44
    %s46 = sphi 0, %s44
    %s47 = sphi 0, %s46
    %s61 = sphi 0, %s47
    %s65 = sphi 0, %s65
    %s67 = sphi 0, %s65
    %s68 = sphi 0, %s67
    %s82 = sphi 0, %s68
    %s86 = sphi 0, %s86
    %s88 = sphi 0, %s86
    %s89 = sphi 0, %s88
    %s103 = sphi 0, %s89
    %s109 = sphi 0, %s111
    %s112 = sphi 0, %s109
    %s113 = sphi 0, %s112
    %s129 = sphi 0, %s113
  $region4: #{_lambda_.20} parent=0 // loop_header_branch
    %13 = sbr.rel (%p11) target = $region8
  $region5: #{_lambda_.20} parent=0 // loop_body
    %s15 = ssub.s32 %s10, 1
    %s16 = ssub.s32 %s10, 2
    %s17 = sadd.s32 %s10, 1
    %s18 = ssub.s32 %s10, %s17
    %p19 = scmp.eq.s32.totalorder %s18, 0
    %s21 = sadd.s32 %s20, 1
    %s22 = scalar_select %p19, %s20, %s21
    %p25 = pneg %p19
    %p26 = scmp.eq.s32.totalorder %s10, 1
    %p27 = por %p25, %p26
    %p28 = scmp.ne.s32.totalorder %s20, %s23
    %p29 = scmp.eq.s32.totalorder %s10, 0
    %p30 = por %p28, %p29
    %p31 = scmp.ne.s32.totalorder %s20, %s23
    %p32 = scmp.eq.s32.totalorder %s15, 1
    %p33 = por %p31, %p32
    %p34 = scmp.ne.s32.totalorder %s23, %s24
    %p35 = scmp.eq.s32.totalorder %s15, 0
    %p36 = por %p34, %p35
    %p37 = scmp.ne.s32.totalorder %s23, %s24
    %p38 = scmp.eq.s32.totalorder %s16, 1
    %p39 = por %p37, %p38
    %p41 = scmp.ne.s32.totalorder %s24, %s40
    %p42 = scmp.eq.s32.totalorder %s16, 0
    %p43 = por %p41, %p42
    %s45 = sadd.s32 %s44, 1
    %p48 = scmp.eq.s32.totalorder %s10, 1
    %p49 = scmp.ne.s32.totalorder %s44, %s46
    %p50 = scmp.eq.s32.totalorder %s10, 0
    %p51 = por %p49, %p50
    %p52 = scmp.ne.s32.totalorder %s44, %s46
    %p53 = scmp.eq.s32.totalorder %s15, 1
    %p54 = por %p52, %p53
    %p55 = scmp.ne.s32.totalorder %s46, %s47
    %p56 = scmp.eq.s32.totalorder %s15, 0
    %p57 = por %p55, %p56
    %p58 = scmp.ne.s32.totalorder %s46, %s47
    %p59 = scmp.eq.s32.totalorder %s16, 1
    %p60 = por %p58, %p59
    %p62 = scmp.ne.s32.totalorder %s47, %s61
    %p63 = scmp.eq.s32.totalorder %s16, 0
    %p64 = por %p62, %p63
    %s66 = sadd.s32 %s65, 1
    %p69 = scmp.eq.s32.totalorder %s10, 1
    %p70 = scmp.ne.s32.totalorder %s65, %s67
    %p71 = scmp.eq.s32.totalorder %s10, 0
    %p72 = por %p70, %p71
    %p73 = scmp.ne.s32.totalorder %s65, %s67
    %p74 = scmp.eq.s32.totalorder %s15, 1
    %p75 = por %p73, %p74
    %p76 = scmp.ne.s32.totalorder %s67, %s68
    %p77 = scmp.eq.s32.totalorder %s15, 0
    %p78 = por %p76, %p77
    %p79 = scmp.ne.s32.totalorder %s67, %s68
    %p80 = scmp.eq.s32.totalorder %s16, 1
    %p81 = por %p79, %p80
    %p83 = scmp.ne.s32.totalorder %s68, %s82
    %p84 = scmp.eq.s32.totalorder %s16, 0
    %p85 = por %p83, %p84
    %s87 = sadd.s32 %s86, 1
    %p90 = scmp.eq.s32.totalorder %s10, 1
    %p91 = scmp.ne.s32.totalorder %s86, %s88
    %p92 = scmp.eq.s32.totalorder %s10, 0
    %p93 = por %p91, %p92
    %p94 = scmp.ne.s32.totalorder %s86, %s88
    %p95 = scmp.eq.s32.totalorder %s15, 1
    %p96 = por %p94, %p95
    %p97 = scmp.ne.s32.totalorder %s88, %s89
    %p98 = scmp.eq.s32.totalorder %s15, 0
    %p99 = por %p97, %p98
    %p100 = scmp.ne.s32.totalorder %s88, %s89
    %p101 = scmp.eq.s32.totalorder %s16, 1
    %p102 = por %p100, %p101
    %p104 = scmp.ne.s32.totalorder %s89, %s103
    %p105 = scmp.eq.s32.totalorder %s16, 0
    %p106 = por %p104, %p105
    %s107 = ssub.s32 %s10, %s17
    %p108 = scmp.eq.s32.totalorder %s107, 0
    %s110 = sadd.s32 %s109, 1
    %s111 = scalar_select %p108, %s109, %s110
    %p114 = pneg %p108
    %p115 = scmp.eq.s32.totalorder %s10, 1
    %p116 = por %p114, %p115
    %p117 = scmp.ne.s32.totalorder %s109, %s112
    %p118 = scmp.eq.s32.totalorder %s10, 0
    %p119 = por %p117, %p118
    %p120 = scmp.ne.s32.totalorder %s109, %s112
    %p121 = scmp.eq.s32.totalorder %s15, 1
    %p122 = por %p120, %p121
    %p123 = scmp.ne.s32.totalorder %s112, %s113
    %p124 = scmp.eq.s32.totalorder %s15, 0
    %p125 = por %p123, %p124
    %p126 = scmp.ne.s32.totalorder %s112, %s113
    %p127 = scmp.eq.s32.totalorder %s16, 1
    %p128 = por %p126, %p127
    %p130 = scmp.ne.s32.totalorder %s113, %s129
    %p131 = scmp.eq.s32.totalorder %s16, 0
    %p132 = por %p130, %p131
    %p133 = scmp.le.s32.totalorder 1, %s10
    %p134 = scmp.lt.s32.totalorder %s10, 3
    %p135 = pnand %p133, %p134
    %p136 = pneg %p135
    // Predicated region
    $region9: #{_lambda_.20} parent=5 // pred_check
      _
    $region10: #{_lambda_.20} parent=5 // pred_check_branch
      %138 = sbr.rel (%p135) target = $region12
    $region11: #{_lambda_.20} parent=5 // pred_region
      %s139 = ssub.s32 %s10, 1
      // Predicated region
      $region13: #{_lambda_.20} parent=11 // pred_check
        %p140 = pneg %p57
      $region14: #{_lambda_.20} parent=11 // pred_check_branch
        %142 = sbr.rel (%p140) target = $region16
      $region15: #{_lambda_.20} parent=11 // pred_region
        _
      $region16: #{_lambda_.20} parent=11 // pred_fallthru
        _
      // Predicated region
      $region17: #{_lambda_.20} parent=11 // pred_check
        %p143 = pneg %p78
      $region18: #{_lambda_.20} parent=11 // pred_check_branch
        %145 = sbr.rel (%p143) target = $region20
      $region19: #{_lambda_.20} parent=11 // pred_region
        _
      $region20: #{_lambda_.20} parent=11 // pred_fallthru
        _
      // Predicated region
      $region21: #{_lambda_.20} parent=11 // pred_check
        %p146 = pneg %p99
      $region22: #{_lambda_.20} parent=11 // pred_check_branch
        %148 = sbr.rel (%p146) target = $region24
      $region23: #{_lambda_.20} parent=11 // pred_region
        _
      $region24: #{_lambda_.20} parent=11 // pred_fallthru
        _
    $region12: #{_lambda_.20} parent=5 // pred_fallthru
      _
    %p149 = scmp.lt.s32.totalorder %s10, 2
    // Predicated region
    $region25: #{_lambda_.20} parent=5 // pred_check
      %p150 = pneg %p149
    $region26: #{_lambda_.20} parent=5 // pred_check_branch
      %152 = sbr.rel (%p150) target = $region28
    $region27: #{_lambda_.20} parent=5 // pred_region
      // Predicated region
      $region29: #{_lambda_.20} parent=27 // pred_check
        %p153 = pneg %p30
      $region30: #{_lambda_.20} parent=27 // pred_check_branch
        %155 = sbr.rel (%p153) target = $region32
      $region31: #{_lambda_.20} parent=27 // pred_region
        %p156 = scmp.lt.s32.totalorder %s10, 1
        %s157 = scalar_select %p156, %s10, 1
        %s158 = smul.addr %s157, 8
        %s159 = smul.addr %s158, 8
        %s160 = scalar_lea.vmem %s0, %s159
      $region32: #{_lambda_.20} parent=27 // pred_fallthru
        _
    $region28: #{_lambda_.20} parent=5 // pred_fallthru
      _
    %p161 = scmp.le.s32.totalorder 1, %s10
    %p162 = scmp.lt.s32.totalorder %s10, 3
    %p163 = pnand %p161, %p162
    %p164 = pneg %p163
    // Predicated region
    $region33: #{_lambda_.20} parent=5 // pred_check
      _
    $region34: #{_lambda_.20} parent=5 // pred_check_branch
      %166 = sbr.rel (%p163) target = $region36
    $region35: #{_lambda_.20} parent=5 // pred_region
      %s167 = ssub.s32 %s10, 1
      %p168 = scmp.lt.s32.totalorder %s15, 1
      %s169 = scalar_select %p168, %s15, 1
      %s170 = smul.addr %s169, 8
      %s171 = smul.addr %s170, 8
      %s172 = scalar_lea.vmem %s0, %s171
      %p173 = pneg %p36
      %p174 = pneg %p33
      %p175 = pneg %p57
      %p176 = pneg %p54
      %p177 = pneg %p78
      %p178 = pneg %p75
      %p179 = pneg %p99
      %p180 = pneg %p96
      %p181 = pneg %p125
      %p182 = pneg %p122
      %p183 = scmp.lt.s32.totalorder %s15, 1
      %s184 = scalar_select %p183, %s15, 1
      %s185 = smul.addr %s184, 8
      %s186 = smul.addr %s185, 8
      %s187 = scalar_lea.vmem %s4, %s186
      %p188 = scmp.lt.s32.totalorder %s15, 1
      %s189 = scalar_select %p188, %s15, 1
      %s190 = smul.addr %s189, 8
      %s191 = smul.addr %s190, 8
      %s192 = scalar_lea.vmem %s0, %s191
      %p193 = scmp.lt.s32.totalorder %s15, 1
      %s194 = scalar_select %p193, %s15, 1
      %s195 = smul.addr %s194, 8
      %s196 = smul.addr %s195, 8
      %s197 = scalar_lea.vmem %s4, %s196
      %v198 = vld [vmem:[%s192] sm:$0xff]
      %v199 = vld [vmem:[%s192 + $0x8] sm:$0xff]
      %v200 = vld [vmem:[%s192 + $0x10] sm:$0xff]
      %v201 = vld [vmem:[%s192 + $0x18] sm:$0xff]
      %v202 = vld [vmem:[%s192 + $0x20] sm:$0xff]
      %v203 = vld [vmem:[%s192 + $0x28] sm:$0xff]
      %v204 = vld [vmem:[%s192 + $0x30] sm:$0xff]
      %v205 = vld [vmem:[%s192 + $0x38] sm:$0xff]
      %v206 = vld [vmem:[%s1] sm:$0xff]
      %v207 = vld [vmem:[%s1 + $0x8] sm:$0xff]
      %v208 = vld [vmem:[%s1 + $0x10] sm:$0xff]
      %v209 = vld [vmem:[%s1 + $0x18] sm:$0xff]
      %v210 = vld [vmem:[%s1 + $0x20] sm:$0xff]
      %v211 = vld [vmem:[%s1 + $0x28] sm:$0xff]
      %v212 = vld [vmem:[%s1 + $0x30] sm:$0xff]
      %v213 = vld [vmem:[%s1 + $0x38] sm:$0xff]
      %v214 = vld [vmem:[%s2] sm:$0xff]
      %v215 = vld [vmem:[%s2 + $0x8] sm:$0xff]
      %v216 = vld [vmem:[%s2 + $0x10] sm:$0xff]
      %v217 = vld [vmem:[%s2 + $0x18] sm:$0xff]
      %v218 = vld [vmem:[%s2 + $0x20] sm:$0xff]
      %v219 = vld [vmem:[%s2 + $0x28] sm:$0xff]
      %v220 = vld [vmem:[%s2 + $0x30] sm:$0xff]
      %v221 = vld [vmem:[%s2 + $0x38] sm:$0xff]
      %v222 = vld [vmem:[%s3] sm:$0xff]
      %v223 = vld [vmem:[%s3 + $0x8] sm:$0xff]
      %v224 = vld [vmem:[%s3 + $0x10] sm:$0xff]
      %v225 = vld [vmem:[%s3 + $0x18] sm:$0xff]
      %v226 = vld [vmem:[%s3 + $0x20] sm:$0xff]
      %v227 = vld [vmem:[%s3 + $0x28] sm:$0xff]
      %v228 = vld [vmem:[%s3 + $0x30] sm:$0xff]
      %v229 = vld [vmem:[%s3 + $0x38] sm:$0xff]
      %vm230 = vcmask 523264
      %v232 = vsel %vm230, %v206, 0
      %v235 = vsel %vm230, %v207, 0
      %v238 = vsel %vm230, %v208, 0
      %v241 = vsel %vm230, %v209, 0
      %v244 = vsel %vm230, %v210, 0
      %v247 = vsel %vm230, %v211, 0
      %v250 = vsel %vm230, %v212, 0
      %v253 = vsel %vm230, %v213, 0
      %255 = vmatpush.msra.mxu0 0.0
      %256 = vmatpush.msra.mxu0 0.0
      %257 = vmatpush.msra.mxu0 0.0
      %258 = vmatpush.msra.mxu0 0.0
      %259 = vmatpush.msra.mxu0 0.0
      %260 = vmatpush.msra.mxu0 0.0
      %261 = vmatpush.msra.mxu0 0.0
      %262 = vmatpush.msra.mxu0 0.0
      %263 = vmatpush.msra.mxu0 %v205
      %264 = vmatpush.msra.mxu0 %v204
      %265 = vmatpush.msra.mxu0 %v203
      %266 = vmatpush.msra.mxu0 %v202
      %267 = vmatpush.msra.mxu0 %v201
      %268 = vmatpush.msra.mxu0 %v200
      %269 = vmatpush.msra.mxu0 %v199
      %270 = vmatpush.msra.mxu0 %v198
      %271 = vmatmul.f32.gmra.mxu0 %v232
      %v272 = vpop.f32.mrf.mxu0
      %v273 = vadd.f32 0.0, %v272
      %274 = vmatmul.f32.gmra.mxu0 %v235
      %v275 = vpop.f32.mrf.mxu0
      %v276 = vadd.f32 0.0, %v275
      %277 = vmatmul.f32.gmra.mxu0 %v238
      %v278 = vpop.f32.mrf.mxu0
      %v279 = vadd.f32 0.0, %v278
      %280 = vmatmul.f32.gmra.mxu0 %v241
      %v281 = vpop.f32.mrf.mxu0
      %v282 = vadd.f32 0.0, %v281
      %283 = vmatmul.f32.gmra.mxu0 %v244
      %v284 = vpop.f32.mrf.mxu0
      %v285 = vadd.f32 0.0, %v284
      %286 = vmatmul.f32.gmra.mxu0 %v247
      %v287 = vpop.f32.mrf.mxu0
      %v288 = vadd.f32 0.0, %v287
      %289 = vmatmul.f32.gmra.mxu0 %v250
      %v290 = vpop.f32.mrf.mxu0
      %v291 = vadd.f32 0.0, %v290
      %292 = vmatmul.f32.gmra.mxu0 %v253
      %v293 = vpop.f32.mrf.mxu0
      %v294 = vadd.f32 0.0, %v293
      %295 = vdwg.mxu0
      %vm296 = vcmask 31744
      %v297 = vsel %vm296, %v273, 0.0
      %298 = vadd.xlane.f32.xlu0 %v297
      %v299 = vpop.xlane.xlu0 %298
      %v300 = vsel %vm296, %v276, 0.0
      %301 = vadd.xlane.f32.xlu0 %v300
      %v302 = vpop.xlane.xlu0 %301
      %v303 = vsel %vm296, %v279, 0.0
      %304 = vadd.xlane.f32.xlu0 %v303
      %v305 = vpop.xlane.xlu0 %304
      %v306 = vsel %vm296, %v282, 0.0
      %307 = vadd.xlane.f32.xlu0 %v306
      %v308 = vpop.xlane.xlu0 %307
      %v309 = vsel %vm296, %v285, 0.0
      %310 = vadd.xlane.f32.xlu0 %v309
      %v311 = vpop.xlane.xlu0 %310
      %v312 = vsel %vm296, %v288, 0.0
      %313 = vadd.xlane.f32.xlu0 %v312
      %v314 = vpop.xlane.xlu0 %313
      %v315 = vsel %vm296, %v291, 0.0
      %316 = vadd.xlane.f32.xlu0 %v315
      %v317 = vpop.xlane.xlu0 %316
      %v318 = vsel %vm296, %v294, 0.0
      %319 = vadd.xlane.f32.xlu0 %v318
      %v320 = vpop.xlane.xlu0 %319
      %v321 = vmul.f32 %v198, %v198
      %v322 = vmul.f32 %v199, %v199
      %v323 = vmul.f32 %v200, %v200
      %v324 = vmul.f32 %v201, %v201
      %v325 = vmul.f32 %v202, %v202
      %v326 = vmul.f32 %v203, %v203
      %v327 = vmul.f32 %v204, %v204
      %v328 = vmul.f32 %v205, %v205
      %329 = vmatpush.msra.mxu0 0.0
      %330 = vmatpush.msra.mxu0 0.0
      %331 = vmatpush.msra.mxu0 0.0
      %332 = vmatpush.msra.mxu0 0.0
      %333 = vmatpush.msra.mxu0 0.0
      %334 = vmatpush.msra.mxu0 0.0
      %335 = vmatpush.msra.mxu0 0.0
      %336 = vmatpush.msra.mxu0 0.0
      %337 = vmatpush.msra.mxu0 %v328
      %338 = vmatpush.msra.mxu0 %v327
      %339 = vmatpush.msra.mxu0 %v326
      %340 = vmatpush.msra.mxu0 %v325
      %341 = vmatpush.msra.mxu0 %v324
      %342 = vmatpush.msra.mxu0 %v323
      %343 = vmatpush.msra.mxu0 %v322
      %344 = vmatpush.msra.mxu0 %v321
      %345 = vmatmul.f32.gmra.mxu0 %v232
      %v346 = vpop.f32.mrf.mxu0
      %v347 = vadd.f32 0.0, %v346
      %348 = vmatmul.f32.gmra.mxu0 %v235
      %v349 = vpop.f32.mrf.mxu0
      %v350 = vadd.f32 0.0, %v349
      %351 = vmatmul.f32.gmra.mxu0 %v238
      %v352 = vpop.f32.mrf.mxu0
      %v353 = vadd.f32 0.0, %v352
      %354 = vmatmul.f32.gmra.mxu0 %v241
      %v355 = vpop.f32.mrf.mxu0
      %v356 = vadd.f32 0.0, %v355
      %357 = vmatmul.f32.gmra.mxu0 %v244
      %v358 = vpop.f32.mrf.mxu0
      %v359 = vadd.f32 0.0, %v358
      %360 = vmatmul.f32.gmra.mxu0 %v247
      %v361 = vpop.f32.mrf.mxu0
      %v362 = vadd.f32 0.0, %v361
      %363 = vmatmul.f32.gmra.mxu0 %v250
      %v364 = vpop.f32.mrf.mxu0
      %v365 = vadd.f32 0.0, %v364
      %366 = vmatmul.f32.gmra.mxu0 %v253
      %v367 = vpop.f32.mrf.mxu0
      %v368 = vadd.f32 0.0, %v367
      %369 = vdwg.mxu0
      %v370 = vsel %vm296, %v347, 0.0
      %371 = vadd.xlane.f32.xlu0 %v370
      %v372 = vpop.xlane.xlu0 %371
      %v373 = vsel %vm296, %v350, 0.0
      %374 = vadd.xlane.f32.xlu0 %v373
      %v375 = vpop.xlane.xlu0 %374
      %v376 = vsel %vm296, %v353, 0.0
      %377 = vadd.xlane.f32.xlu0 %v376
      %v378 = vpop.xlane.xlu0 %377
      %v379 = vsel %vm296, %v356, 0.0
      %380 = vadd.xlane.f32.xlu0 %v379
      %v381 = vpop.xlane.xlu0 %380
      %v382 = vsel %vm296, %v359, 0.0
      %383 = vadd.xlane.f32.xlu0 %v382
      %v384 = vpop.xlane.xlu0 %383
      %v385 = vsel %vm296, %v362, 0.0
      %386 = vadd.xlane.f32.xlu0 %v385
      %v387 = vpop.xlane.xlu0 %386
      %v388 = vsel %vm296, %v365, 0.0
      %389 = vadd.xlane.f32.xlu0 %v388
      %v390 = vpop.xlane.xlu0 %389
      %v391 = vsel %vm296, %v368, 0.0
      %392 = vadd.xlane.f32.xlu0 %v391
      %v393 = vpop.xlane.xlu0 %392
      %v394 = vmul.f32 %v299, %v299
      %v395 = vmul.f32 %v302, %v302
      %v396 = vmul.f32 %v305, %v305
      %v397 = vmul.f32 %v308, %v308
      %v398 = vmul.f32 %v311, %v311
      %v399 = vmul.f32 %v314, %v314
      %v400 = vmul.f32 %v317, %v317
      %v401 = vmul.f32 %v320, %v320
      %v402 = vsub.f32 %v372, %v394
      %v403 = vsub.f32 %v375, %v395
      %v404 = vsub.f32 %v378, %v396
      %v405 = vsub.f32 %v381, %v397
      %v406 = vsub.f32 %v384, %v398
      %v407 = vsub.f32 %v387, %v399
      %v408 = vsub.f32 %v390, %v400
      %v409 = vsub.f32 %v393, %v401
      %v410 = vmax.f32 %v402, 0.0
      %v411 = vmax.f32 %v403, 0.0
      %v412 = vmax.f32 %v404, 0.0
      %v413 = vmax.f32 %v405, 0.0
      %v414 = vmax.f32 %v406, 0.0
      %v415 = vmax.f32 %v407, 0.0
      %v416 = vmax.f32 %v408, 0.0
      %v417 = vmax.f32 %v409, 0.0
      %v418 = vsub.f32 %v198, %v299
      %v419 = vsub.f32 %v199, %v302
      %v420 = vsub.f32 %v200, %v305
      %v421 = vsub.f32 %v201, %v308
      %v422 = vsub.f32 %v202, %v311
      %v423 = vsub.f32 %v203, %v314
      %v424 = vsub.f32 %v204, %v317
      %v425 = vsub.f32 %v205, %v320
      %v426 = vadd.f32 %v410, 1e-05
      %v427 = vadd.f32 %v411, 1e-05
      %v428 = vadd.f32 %v412, 1e-05
      %v429 = vadd.f32 %v413, 1e-05
      %v430 = vadd.f32 %v414, 1e-05
      %v431 = vadd.f32 %v415, 1e-05
      %v432 = vadd.f32 %v416, 1e-05
      %v433 = vadd.f32 %v417, 1e-05
      %v434 = vrsqrt.pop %v426
      %v435 = vmul.f32 %v434, %v426
      %v436 = vmul.f32 %v435, %v434
      %v437 = vmul.f32 0.5, %v436
      %v438 = vsub.f32 1.5, %v437
      %v439 = vmul.f32 %v434, %v438
      %vm440 = vweird.f32 %v426
      %vm441 = vweird.f32 %v434
      %vm442 = vmor %vm440, %vm441
      %v443 = vsel %vm442, %v434, %v439
      %v444 = vrsqrt.pop %v427
      %v445 = vmul.f32 %v444, %v427
      %v446 = vmul.f32 %v445, %v444
      %v447 = vmul.f32 0.5, %v446
      %v448 = vsub.f32 1.5, %v447
      %v449 = vmul.f32 %v444, %v448
      %vm450 = vweird.f32 %v427
      %vm451 = vweird.f32 %v444
      %vm452 = vmor %vm450, %vm451
      %v453 = vsel %vm452, %v444, %v449
      %v454 = vrsqrt.pop %v428
      %v455 = vmul.f32 %v454, %v428
      %v456 = vmul.f32 %v455, %v454
      %v457 = vmul.f32 0.5, %v456
      %v458 = vsub.f32 1.5, %v457
      %v459 = vmul.f32 %v454, %v458
      %vm460 = vweird.f32 %v428
      %vm461 = vweird.f32 %v454
      %vm462 = vmor %vm460, %vm461
      %v463 = vsel %vm462, %v454, %v459
      %v464 = vrsqrt.pop %v429
      %v465 = vmul.f32 %v464, %v429
      %v466 = vmul.f32 %v465, %v464
      %v467 = vmul.f32 0.5, %v466
      %v468 = vsub.f32 1.5, %v467
      %v469 = vmul.f32 %v464, %v468
      %vm470 = vweird.f32 %v429
      %vm471 = vweird.f32 %v464
      %vm472 = vmor %vm470, %vm471
      %v473 = vsel %vm472, %v464, %v469
      %v474 = vrsqrt.pop %v430
      %v475 = vmul.f32 %v474, %v430
      %v476 = vmul.f32 %v475, %v474
      %v477 = vmul.f32 0.5, %v476
      %v478 = vsub.f32 1.5, %v477
      %v479 = vmul.f32 %v474, %v478
      %vm480 = vweird.f32 %v430
      %vm481 = vweird.f32 %v474
      %vm482 = vmor %vm480, %vm481
      %v483 = vsel %vm482, %v474, %v479
      %v484 = vrsqrt.pop %v431
      %v485 = vmul.f32 %v484, %v431
      %v486 = vmul.f32 %v485, %v484
      %v487 = vmul.f32 0.5, %v486
      %v488 = vsub.f32 1.5, %v487
      %v489 = vmul.f32 %v484, %v488
      %vm490 = vweird.f32 %v431
      %vm491 = vweird.f32 %v484
      %vm492 = vmor %vm490, %vm491
      %v493 = vsel %vm492, %v484, %v489
      %v494 = vrsqrt.pop %v432
      %v495 = vmul.f32 %v494, %v432
      %v496 = vmul.f32 %v495, %v494
      %v497 = vmul.f32 0.5, %v496
      %v498 = vsub.f32 1.5, %v497
      %v499 = vmul.f32 %v494, %v498
      %vm500 = vweird.f32 %v432
      %vm501 = vweird.f32 %v494
      %vm502 = vmor %vm500, %vm501
      %v503 = vsel %vm502, %v494, %v499
      %v504 = vrsqrt.pop %v433
      %v505 = vmul.f32 %v504, %v433
      %v506 = vmul.f32 %v505, %v504
      %v507 = vmul.f32 0.5, %v506
      %v508 = vsub.f32 1.5, %v507
      %v509 = vmul.f32 %v504, %v508
      %vm510 = vweird.f32 %v433
      %vm511 = vweird.f32 %v504
      %vm512 = vmor %vm510, %vm511
      %v513 = vsel %vm512, %v504, %v509
      %v514 = vmul.f32 %v418, %v443
      %v515 = vmul.f32 %v419, %v453
      %v516 = vmul.f32 %v420, %v463
      %v517 = vmul.f32 %v421, %v473
      %v518 = vmul.f32 %v422, %v483
      %v519 = vmul.f32 %v423, %v493
      %v520 = vmul.f32 %v424, %v503
      %v521 = vmul.f32 %v425, %v513
      %523 = vset.pattern.permute.xlu0 0
      %524 = vperm.xlu0 %523, %v214
      %v525 = vpop.permute.xlu0 %524
      %528 = vset.pattern.permute.xlu0 0
      %529 = vperm.xlu0 %528, %v215
      %v530 = vpop.permute.xlu0 %529
      %533 = vset.pattern.permute.xlu0 0
      %534 = vperm.xlu0 %533, %v216
      %v535 = vpop.permute.xlu0 %534
      %538 = vset.pattern.permute.xlu0 0
      %539 = vperm.xlu0 %538, %v217
      %v540 = vpop.permute.xlu0 %539
      %543 = vset.pattern.permute.xlu0 0
      %544 = vperm.xlu0 %543, %v218
      %v545 = vpop.permute.xlu0 %544
      %548 = vset.pattern.permute.xlu0 0
      %549 = vperm.xlu0 %548, %v219
      %v550 = vpop.permute.xlu0 %549
      %553 = vset.pattern.permute.xlu0 0
      %554 = vperm.xlu0 %553, %v220
      %v555 = vpop.permute.xlu0 %554
      %558 = vset.pattern.permute.xlu0 0
      %559 = vperm.xlu0 %558, %v221
      %v560 = vpop.permute.xlu0 %559
      %v562 = vmul.f32 %v514, %v525
      %v563 = vmul.f32 %v515, %v530
      %v564 = vmul.f32 %v516, %v535
      %v565 = vmul.f32 %v517, %v540
      %v566 = vmul.f32 %v518, %v545
      %v567 = vmul.f32 %v519, %v550
      %v568 = vmul.f32 %v520, %v555
      %v569 = vmul.f32 %v521, %v560
      %571 = vset.pattern.permute.xlu0 0
      %572 = vperm.xlu0 %571, %v222
      %v573 = vpop.permute.xlu0 %572
      %576 = vset.pattern.permute.xlu0 0
      %577 = vperm.xlu0 %576, %v223
      %v578 = vpop.permute.xlu0 %577
      %581 = vset.pattern.permute.xlu0 0
      %582 = vperm.xlu0 %581, %v224
      %v583 = vpop.permute.xlu0 %582
      %586 = vset.pattern.permute.xlu0 0
      %587 = vperm.xlu0 %586, %v225
      %v588 = vpop.permute.xlu0 %587
      %591 = vset.pattern.permute.xlu0 0
      %592 = vperm.xlu0 %591, %v226
      %v593 = vpop.permute.xlu0 %592
      %596 = vset.pattern.permute.xlu0 0
      %597 = vperm.xlu0 %596, %v227
      %v598 = vpop.permute.xlu0 %597
      %601 = vset.pattern.permute.xlu0 0
      %602 = vperm.xlu0 %601, %v228
      %v603 = vpop.permute.xlu0 %602
      %606 = vset.pattern.permute.xlu0 0
      %607 = vperm.xlu0 %606, %v229
      %v608 = vpop.permute.xlu0 %607
      %v610 = vadd.f32 %v562, %v573
      %v611 = vadd.f32 %v563, %v578
      %v612 = vadd.f32 %v564, %v583
      %v613 = vadd.f32 %v565, %v588
      %v614 = vadd.f32 %v566, %v593
      %v615 = vadd.f32 %v567, %v598
      %v616 = vadd.f32 %v568, %v603
      %v617 = vadd.f32 %v569, %v608
      %v618 = vxor.u32 %v610, 2147483648
      %v619 = vxor.u32 %v611, 2147483648
      %v620 = vxor.u32 %v612, 2147483648
      %v621 = vxor.u32 %v613, 2147483648
      %v622 = vxor.u32 %v614, 2147483648
      %v623 = vxor.u32 %v615, 2147483648
      %v624 = vxor.u32 %v616, 2147483648
      %v625 = vxor.u32 %v617, 2147483648
      %v626 = vmul.f32 %v618, 1.442695
      %v627 = vpow.pop %v626
      %v628 = vmul.f32 %v619, 1.442695
      %v629 = vpow.pop %v628
      %v630 = vmul.f32 %v620, 1.442695
      %v631 = vpow.pop %v630
      %v632 = vmul.f32 %v621, 1.442695
      %v633 = vpow.pop %v632
      %v634 = vmul.f32 %v622, 1.442695
      %v635 = vpow.pop %v634
      %v636 = vmul.f32 %v623, 1.442695
      %v637 = vpow.pop %v636
      %v638 = vmul.f32 %v624, 1.442695
      %v639 = vpow.pop %v638
      %v640 = vmul.f32 %v625, 1.442695
      %v641 = vpow.pop %v640
      %v642 = vadd.f32 %v627, 1.0
      %v643 = vadd.f32 %v629, 1.0
      %v644 = vadd.f32 %v631, 1.0
      %v645 = vadd.f32 %v633, 1.0
      %v646 = vadd.f32 %v635, 1.0
      %v647 = vadd.f32 %v637, 1.0
      %v648 = vadd.f32 %v639, 1.0
      %v649 = vadd.f32 %v641, 1.0
      %v650 = vrcp.pop %v642
      %v651 = vmul.f32 %v642, %v650
      %v652 = vsub.f32 1.0, %v651
      %v653 = vmul.f32 %v650, %v652
      %v654 = vadd.f32 %v650, %v653
      %vm655 = vweird.f32 %v642
      %vm656 = vweird.f32 %v650
      %vm657 = vmor %vm655, %vm656
      %v658 = vsel %vm657, %v650, %v654
      %v659 = vand.u32 2147483647, %v642
      %vm660 = vcmp.eq.f32.partialorder %v659, 8.507059e+37
      %v661 = vand.u32 %v642, 2147483648
      %v662 = vor.u32 1.1754944e-38, %v661
      %v663 = vsel %vm660, %v662, %v658
      %v664 = vmul.f32 1.0, %v663
      %v665 = vrcp.pop %v643
      %v666 = vmul.f32 %v643, %v665
      %v667 = vsub.f32 1.0, %v666
      %v668 = vmul.f32 %v665, %v667
      %v669 = vadd.f32 %v665, %v668
      %vm670 = vweird.f32 %v643
      %vm671 = vweird.f32 %v665
      %vm672 = vmor %vm670, %vm671
      %v673 = vsel %vm672, %v665, %v669
      %v674 = vand.u32 2147483647, %v643
      %vm675 = vcmp.eq.f32.partialorder %v674, 8.507059e+37
      %v676 = vand.u32 %v643, 2147483648
      %v677 = vor.u32 1.1754944e-38, %v676
      %v678 = vsel %vm675, %v677, %v673
      %v679 = vmul.f32 1.0, %v678
      %v680 = vrcp.pop %v644
      %v681 = vmul.f32 %v644, %v680
      %v682 = vsub.f32 1.0, %v681
      %v683 = vmul.f32 %v680, %v682
      %v684 = vadd.f32 %v680, %v683
      %vm685 = vweird.f32 %v644
      %vm686 = vweird.f32 %v680
      %vm687 = vmor %vm685, %vm686
      %v688 = vsel %vm687, %v680, %v684
      %v689 = vand.u32 2147483647, %v644
      %vm690 = vcmp.eq.f32.partialorder %v689, 8.507059e+37
      %v691 = vand.u32 %v644, 2147483648
      %v692 = vor.u32 1.1754944e-38, %v691
      %v693 = vsel %vm690, %v692, %v688
      %v694 = vmul.f32 1.0, %v693
      %v695 = vrcp.pop %v645
      %v696 = vmul.f32 %v645, %v695
      %v697 = vsub.f32 1.0, %v696
      %v698 = vmul.f32 %v695, %v697
      %v699 = vadd.f32 %v695, %v698
      %vm700 = vweird.f32 %v645
      %vm701 = vweird.f32 %v695
      %vm702 = vmor %vm700, %vm701
      %v703 = vsel %vm702, %v695, %v699
      %v704 = vand.u32 2147483647, %v645
      %vm705 = vcmp.eq.f32.partialorder %v704, 8.507059e+37
      %v706 = vand.u32 %v645, 2147483648
      %v707 = vor.u32 1.1754944e-38, %v706
      %v708 = vsel %vm705, %v707, %v703
      %v709 = vmul.f32 1.0, %v708
      %v710 = vrcp.pop %v646
      %v711 = vmul.f32 %v646, %v710
      %v712 = vsub.f32 1.0, %v711
      %v713 = vmul.f32 %v710, %v712
      %v714 = vadd.f32 %v710, %v713
      %vm715 = vweird.f32 %v646
      %vm716 = vweird.f32 %v710
      %vm717 = vmor %vm715, %vm716
      %v718 = vsel %vm717, %v710, %v714
      %v719 = vand.u32 2147483647, %v646
      %vm720 = vcmp.eq.f32.partialorder %v719, 8.507059e+37
      %v721 = vand.u32 %v646, 2147483648
      %v722 = vor.u32 1.1754944e-38, %v721
      %v723 = vsel %vm720, %v722, %v718
      %v724 = vmul.f32 1.0, %v723
      %v725 = vrcp.pop %v647
      %v726 = vmul.f32 %v647, %v725
      %v727 = vsub.f32 1.0, %v726
      %v728 = vmul.f32 %v725, %v727
      %v729 = vadd.f32 %v725, %v728
      %vm730 = vweird.f32 %v647
      %vm731 = vweird.f32 %v725
      %vm732 = vmor %vm730, %vm731
      %v733 = vsel %vm732, %v725, %v729
      %v734 = vand.u32 2147483647, %v647
      %vm735 = vcmp.eq.f32.partialorder %v734, 8.507059e+37
      %v736 = vand.u32 %v647, 2147483648
      %v737 = vor.u32 1.1754944e-38, %v736
      %v738 = vsel %vm735, %v737, %v733
      %v739 = vmul.f32 1.0, %v738
      %v740 = vrcp.pop %v648
      %v741 = vmul.f32 %v648, %v740
      %v742 = vsub.f32 1.0, %v741
      %v743 = vmul.f32 %v740, %v742
      %v744 = vadd.f32 %v740, %v743
      %vm745 = vweird.f32 %v648
      %vm746 = vweird.f32 %v740
      %vm747 = vmor %vm745, %vm746
      %v748 = vsel %vm747, %v740, %v744
      %v749 = vand.u32 2147483647, %v648
      %vm750 = vcmp.eq.f32.partialorder %v749, 8.507059e+37
      %v751 = vand.u32 %v648, 2147483648
      %v752 = vor.u32 1.1754944e-38, %v751
      %v753 = vsel %vm750, %v752, %v748
      %v754 = vmul.f32 1.0, %v753
      %v755 = vrcp.pop %v649
      %v756 = vmul.f32 %v649, %v755
      %v757 = vsub.f32 1.0, %v756
      %v758 = vmul.f32 %v755, %v757
      %v759 = vadd.f32 %v755, %v758
      %vm760 = vweird.f32 %v649
      %vm761 = vweird.f32 %v755
      %vm762 = vmor %vm760, %vm761
      %v763 = vsel %vm762, %v755, %v759
      %v764 = vand.u32 2147483647, %v649
      %vm765 = vcmp.eq.f32.partialorder %v764, 8.507059e+37
      %v766 = vand.u32 %v649, 2147483648
      %v767 = vor.u32 1.1754944e-38, %v766
      %v768 = vsel %vm765, %v767, %v763
      %v769 = vmul.f32 1.0, %v768
      %v770 = vmul.f32 %v610, %v664
      %v771 = vmul.f32 %v611, %v679
      %v772 = vmul.f32 %v612, %v694
      %v773 = vmul.f32 %v613, %v709
      %v774 = vmul.f32 %v614, %v724
      %v775 = vmul.f32 %v615, %v739
      %v776 = vmul.f32 %v616, %v754
      %v777 = vmul.f32 %v617, %v769
      %778 = vst.msk [vmem:[%s197] sm:$0xff] %vm296, %v770
      %779 = vst.msk [vmem:[%s197 + $0x8] sm:$0xff] %vm296, %v771
      %780 = vst.msk [vmem:[%s197 + $0x10] sm:$0xff] %vm296, %v772
      %781 = vst.msk [vmem:[%s197 + $0x18] sm:$0xff] %vm296, %v773
      %782 = vst.msk [vmem:[%s197 + $0x20] sm:$0xff] %vm296, %v774
      %783 = vst.msk [vmem:[%s197 + $0x28] sm:$0xff] %vm296, %v775
      %784 = vst.msk [vmem:[%s197 + $0x30] sm:$0xff] %vm296, %v776
      %785 = vst.msk [vmem:[%s197 + $0x38] sm:$0xff] %vm296, %v777
      %p786 = scmp.lt.s32.totalorder %s15, 1
      %s787 = scalar_select %p786, %s15, 1
      %s788 = smul.addr %s787, 8
      %s789 = smul.addr %s788, 8
      %s790 = scalar_lea.vmem %s4, %s789
      // Predicated region
      $region37: #{_lambda_.20} parent=35 // pred_check
        %p791 = pneg %p122
      $region38: #{_lambda_.20} parent=35 // pred_check_branch
        %793 = sbr.rel (%p791) target = $region40
      $region39: #{_lambda_.20} parent=35 // pred_region
        _
      $region40: #{_lambda_.20} parent=35 // pred_fallthru
        _
    $region36: #{_lambda_.20} parent=5 // pred_fallthru
      _
    %p794 = scmp.le.s32.totalorder 2, %s10
    // Predicated region
    $region41: #{_lambda_.20} parent=5 // pred_check
      %p795 = pneg %p794
    $region42: #{_lambda_.20} parent=5 // pred_check_branch
      %797 = sbr.rel (%p795) target = $region44
    $region43: #{_lambda_.20} parent=5 // pred_region
      %s798 = ssub.s32 %s10, 2
      // Predicated region
      $region45: #{_lambda_.20} parent=43 // pred_check
        %p799 = pneg %p128
      $region46: #{_lambda_.20} parent=43 // pred_check_branch
        %801 = sbr.rel (%p799) target = $region48
      $region47: #{_lambda_.20} parent=43 // pred_region
        %p802 = scmp.lt.s32.totalorder %s16, 1
        %s803 = scalar_select %p802, %s16, 1
        %s804 = smul.addr %s803, 8
        %s805 = smul.addr %s804, 8
        %s806 = scalar_lea.vmem %s4, %s805
      $region48: #{_lambda_.20} parent=43 // pred_fallthru
        _
    $region44: #{_lambda_.20} parent=5 // pred_fallthru
      _
  $region6: #{_lambda_.20} parent=0 // loop_footer
    %s14 = sadd.s32 1, %s10
  $region7: #{_lambda_.20} parent=0 // loop_footer_branch
    %9 = sbr.rel target = $region3
  $region8: #{_lambda_.20} parent=0 // loop_exit
    _

// kernel: _lambda_.22
$region0: #{_lambda_.22}
  #allocation0 [shape = 'u32[]', space=smem, size = 0x4, offset = 0x4, fixed_abs, tag = 'smem constant byte address 0x4 - core index']
  #allocation1 [shape = 'u32[72,128]{1,0:T(1,128)}', space=vmem, size = 0x9000, scoped, tag = 'internal scratch']
  #allocation2 [shape = 'f32[32,4]{1,0:T(8,128)}', space=vmem, size = 0x4000, scoped, tag = 'scratch operand']
  %s0 = inlined_call_operand.vmem [shape: f32[2,32,4], index: 0, kind: input, shape index: {}]
  %s1 = inlined_call_operand.vmem [shape: f32[32,32], index: 1, kind: input, shape index: {}]
  %s2 = inlined_call_operand.vmem [shape: f32[32,1], index: 2, kind: input, shape index: {}]
  %s3 = inlined_call_operand.vmem [shape: f32[32,1], index: 3, kind: input, shape index: {}]
  %s4 = inlined_call_operand.vmem [shape: bf16[96,32], index: 4, kind: input, shape index: {}]
  %s5 = inlined_call_operand.vmem [shape: f32[96,1], index: 5, kind: input, shape index: {}]
  %s6 = inlined_call_operand.vmem [shape: bf16[32,32], index: 6, kind: input, shape index: {}]
  %s7 = inlined_call_operand.vmem [shape: f32[32,1], index: 7, kind: input, shape index: {}]
  %s8 = inlined_call_operand.vmem [shape: f32[2,32,4], index: 8, kind: output, shape index: {}]
  %s9 = sld [smem:[#allocation0]]
  $region65: #{_lambda_.22} parent=0
    _
  %s11 = ssub.s32 1, %s9
  %s12 = scalar_select 0, %s11, %s9
  loop: start=0, step=1, limit=4
  $region2: #{_lambda_.22} parent=0 // loop_pre_header
    _
  $region3: #{_lambda_.22} parent=0 // loop_header
    %s14 = sphi 0, %s18
    %p15 = scmp.ge.s32.totalorder %s14, 4
    %s24 = sphi 0, %s26
    %s27 = sphi 0, %s24
    %s28 = sphi 0, %s27
    %s44 = sphi 0, %s28
    %s48 = sphi 0, %s48
    %s50 = sphi 0, %s48
    %s51 = sphi 0, %s50
    %s65 = sphi 0, %s51
    %s69 = sphi 0, %s69
    %s71 = sphi 0, %s69
    %s72 = sphi 0, %s71
    %s86 = sphi 0, %s72
    %s90 = sphi 0, %s90
    %s92 = sphi 0, %s90
    %s93 = sphi 0, %s92
    %s107 = sphi 0, %s93
    %s111 = sphi 0, %s111
    %s113 = sphi 0, %s111
    %s114 = sphi 0, %s113
    %s128 = sphi 0, %s114
    %s132 = sphi 0, %s132
    %s134 = sphi 0, %s132
    %s135 = sphi 0, %s134
    %s149 = sphi 0, %s135
    %s153 = sphi 0, %s153
    %s155 = sphi 0, %s153
    %s156 = sphi 0, %s155
    %s170 = sphi 0, %s156
    %s174 = sphi 0, %s174
    %s176 = sphi 0, %s174
    %s177 = sphi 0, %s176
    %s191 = sphi 0, %s177
    %s197 = sphi 0, %s199
    %s200 = sphi 0, %s197
    %s201 = sphi 0, %s200
    %s217 = sphi 0, %s201
  $region4: #{_lambda_.22} parent=0 // loop_header_branch
    %17 = sbr.rel (%p15) target = $region8
  $region5: #{_lambda_.22} parent=0 // loop_body
    %s19 = ssub.s32 %s14, 1
    %s20 = ssub.s32 %s14, 2
    %s21 = sadd.s32 %s14, 1
    %s22 = ssub.s32 %s14, %s21
    %p23 = scmp.eq.s32.totalorder %s22, 0
    %s25 = sadd.s32 %s24, 1
    %s26 = scalar_select %p23, %s24, %s25
    %p29 = pneg %p23
    %p30 = scmp.eq.s32.totalorder %s14, 1
    %p31 = por %p29, %p30
    %p32 = scmp.ne.s32.totalorder %s24, %s27
    %p33 = scmp.eq.s32.totalorder %s14, 0
    %p34 = por %p32, %p33
    %p35 = scmp.ne.s32.totalorder %s24, %s27
    %p36 = scmp.eq.s32.totalorder %s19, 1
    %p37 = por %p35, %p36
    %p38 = scmp.ne.s32.totalorder %s27, %s28
    %p39 = scmp.eq.s32.totalorder %s19, 0
    %p40 = por %p38, %p39
    %p41 = scmp.ne.s32.totalorder %s27, %s28
    %p42 = scmp.eq.s32.totalorder %s20, 1
    %p43 = por %p41, %p42
    %p45 = scmp.ne.s32.totalorder %s28, %s44
    %p46 = scmp.eq.s32.totalorder %s20, 0
    %p47 = por %p45, %p46
    %s49 = sadd.s32 %s48, 1
    %p52 = scmp.eq.s32.totalorder %s14, 1
    %p53 = scmp.ne.s32.totalorder %s48, %s50
    %p54 = scmp.eq.s32.totalorder %s14, 0
    %p55 = por %p53, %p54
    %p56 = scmp.ne.s32.totalorder %s48, %s50
    %p57 = scmp.eq.s32.totalorder %s19, 1
    %p58 = por %p56, %p57
    %p59 = scmp.ne.s32.totalorder %s50, %s51
    %p60 = scmp.eq.s32.totalorder %s19, 0
    %p61 = por %p59, %p60
    %p62 = scmp.ne.s32.totalorder %s50, %s51
    %p63 = scmp.eq.s32.totalorder %s20, 1
    %p64 = por %p62, %p63
    %p66 = scmp.ne.s32.totalorder %s51, %s65
    %p67 = scmp.eq.s32.totalorder %s20, 0
    %p68 = por %p66, %p67
    %s70 = sadd.s32 %s69, 1
    %p73 = scmp.eq.s32.totalorder %s14, 1
    %p74 = scmp.ne.s32.totalorder %s69, %s71
    %p75 = scmp.eq.s32.totalorder %s14, 0
    %p76 = por %p74, %p75
    %p77 = scmp.ne.s32.totalorder %s69, %s71
    %p78 = scmp.eq.s32.totalorder %s19, 1
    %p79 = por %p77, %p78
    %p80 = scmp.ne.s32.totalorder %s71, %s72
    %p81 = scmp.eq.s32.totalorder %s19, 0
    %p82 = por %p80, %p81
    %p83 = scmp.ne.s32.totalorder %s71, %s72
    %p84 = scmp.eq.s32.totalorder %s20, 1
    %p85 = por %p83, %p84
    %p87 = scmp.ne.s32.totalorder %s72, %s86
    %p88 = scmp.eq.s32.totalorder %s20, 0
    %p89 = por %p87, %p88
    %s91 = sadd.s32 %s90, 1
    %p94 = scmp.eq.s32.totalorder %s14, 1
    %p95 = scmp.ne.s32.totalorder %s90, %s92
    %p96 = scmp.eq.s32.totalorder %s14, 0
    %p97 = por %p95, %p96
    %p98 = scmp.ne.s32.totalorder %s90, %s92
    %p99 = scmp.eq.s32.totalorder %s19, 1
    %p100 = por %p98, %p99
    %p101 = scmp.ne.s32.totalorder %s92, %s93
    %p102 = scmp.eq.s32.totalorder %s19, 0
    %p103 = por %p101, %p102
    %p104 = scmp.ne.s32.totalorder %s92, %s93
    %p105 = scmp.eq.s32.totalorder %s20, 1
    %p106 = por %p104, %p105
    %p108 = scmp.ne.s32.totalorder %s93, %s107
    %p109 = scmp.eq.s32.totalorder %s20, 0
    %p110 = por %p108, %p109
    %s112 = sadd.s32 %s111, 1
    %p115 = scmp.eq.s32.totalorder %s14, 1
    %p116 = scmp.ne.s32.totalorder %s111, %s113
    %p117 = scmp.eq.s32.totalorder %s14, 0
    %p118 = por %p116, %p117
    %p119 = scmp.ne.s32.totalorder %s111, %s113
    %p120 = scmp.eq.s32.totalorder %s19, 1
    %p121 = por %p119, %p120
    %p122 = scmp.ne.s32.totalorder %s113, %s114
    %p123 = scmp.eq.s32.totalorder %s19, 0
    %p124 = por %p122, %p123
    %p125 = scmp.ne.s32.totalorder %s113, %s114
    %p126 = scmp.eq.s32.totalorder %s20, 1
    %p127 = por %p125, %p126
    %p129 = scmp.ne.s32.totalorder %s114, %s128
    %p130 = scmp.eq.s32.totalorder %s20, 0
    %p131 = por %p129, %p130
    %s133 = sadd.s32 %s132, 1
    %p136 = scmp.eq.s32.totalorder %s14, 1
    %p137 = scmp.ne.s32.totalorder %s132, %s134
    %p138 = scmp.eq.s32.totalorder %s14, 0
    %p139 = por %p137, %p138
    %p140 = scmp.ne.s32.totalorder %s132, %s134
    %p141 = scmp.eq.s32.totalorder %s19, 1
    %p142 = por %p140, %p141
    %p143 = scmp.ne.s32.totalorder %s134, %s135
    %p144 = scmp.eq.s32.totalorder %s19, 0
    %p145 = por %p143, %p144
    %p146 = scmp.ne.s32.totalorder %s134, %s135
    %p147 = scmp.eq.s32.totalorder %s20, 1
    %p148 = por %p146, %p147
    %p150 = scmp.ne.s32.totalorder %s135, %s149
    %p151 = scmp.eq.s32.totalorder %s20, 0
    %p152 = por %p150, %p151
    %s154 = sadd.s32 %s153, 1
    %p157 = scmp.eq.s32.totalorder %s14, 1
    %p158 = scmp.ne.s32.totalorder %s153, %s155
    %p159 = scmp.eq.s32.totalorder %s14, 0
    %p160 = por %p158, %p159
    %p161 = scmp.ne.s32.totalorder %s153, %s155
    %p162 = scmp.eq.s32.totalorder %s19, 1
    %p163 = por %p161, %p162
    %p164 = scmp.ne.s32.totalorder %s155, %s156
    %p165 = scmp.eq.s32.totalorder %s19, 0
    %p166 = por %p164, %p165
    %p167 = scmp.ne.s32.totalorder %s155, %s156
    %p168 = scmp.eq.s32.totalorder %s20, 1
    %p169 = por %p167, %p168
    %p171 = scmp.ne.s32.totalorder %s156, %s170
    %p172 = scmp.eq.s32.totalorder %s20, 0
    %p173 = por %p171, %p172
    %s175 = sadd.s32 %s174, 1
    %p178 = scmp.eq.s32.totalorder %s14, 1
    %p179 = scmp.ne.s32.totalorder %s174, %s176
    %p180 = scmp.eq.s32.totalorder %s14, 0
    %p181 = por %p179, %p180
    %p182 = scmp.ne.s32.totalorder %s174, %s176
    %p183 = scmp.eq.s32.totalorder %s19, 1
    %p184 = por %p182, %p183
    %p185 = scmp.ne.s32.totalorder %s176, %s177
    %p186 = scmp.eq.s32.totalorder %s19, 0
    %p187 = por %p185, %p186
    %p188 = scmp.ne.s32.totalorder %s176, %s177
    %p189 = scmp.eq.s32.totalorder %s20, 1
    %p190 = por %p188, %p189
    %p192 = scmp.ne.s32.totalorder %s177, %s191
    %p193 = scmp.eq.s32.totalorder %s20, 0
    %p194 = por %p192, %p193
    %s195 = ssub.s32 %s14, %s21
    %p196 = scmp.eq.s32.totalorder %s195, 0
    %s198 = sadd.s32 %s197, 1
    %s199 = scalar_select %p196, %s197, %s198
    %p202 = pneg %p196
    %p203 = scmp.eq.s32.totalorder %s14, 1
    %p204 = por %p202, %p203
    %p205 = scmp.ne.s32.totalorder %s197, %s200
    %p206 = scmp.eq.s32.totalorder %s14, 0
    %p207 = por %p205, %p206
    %p208 = scmp.ne.s32.totalorder %s197, %s200
    %p209 = scmp.eq.s32.totalorder %s19, 1
    %p210 = por %p208, %p209
    %p211 = scmp.ne.s32.totalorder %s200, %s201
    %p212 = scmp.eq.s32.totalorder %s19, 0
    %p213 = por %p211, %p212
    %p214 = scmp.ne.s32.totalorder %s200, %s201
    %p215 = scmp.eq.s32.totalorder %s20, 1
    %p216 = por %p214, %p215
    %p218 = scmp.ne.s32.totalorder %s201, %s217
    %p219 = scmp.eq.s32.totalorder %s20, 0
    %p220 = por %p218, %p219
    %p221 = scmp.le.s32.totalorder 1, %s14
    %p222 = scmp.lt.s32.totalorder %s14, 3
    %p223 = pnand %p221, %p222
    %p224 = pneg %p223
    // Predicated region
    $region9: #{_lambda_.22} parent=5 // pred_check
      _
    $region10: #{_lambda_.22} parent=5 // pred_check_branch
      %226 = sbr.rel (%p223) target = $region12
    $region11: #{_lambda_.22} parent=5 // pred_region
      %s227 = ssub.s32 %s14, 1
      // Predicated region
      $region13: #{_lambda_.22} parent=11 // pred_check
        %p228 = pneg %p61
      $region14: #{_lambda_.22} parent=11 // pred_check_branch
        %230 = sbr.rel (%p228) target = $region16
      $region15: #{_lambda_.22} parent=11 // pred_region
        _
      $region16: #{_lambda_.22} parent=11 // pred_fallthru
        _
      // Predicated region
      $region17: #{_lambda_.22} parent=11 // pred_check
        %p231 = pneg %p82
      $region18: #{_lambda_.22} parent=11 // pred_check_branch
        %233 = sbr.rel (%p231) target = $region20
      $region19: #{_lambda_.22} parent=11 // pred_region
        _
      $region20: #{_lambda_.22} parent=11 // pred_fallthru
        _
      // Predicated region
      $region21: #{_lambda_.22} parent=11 // pred_check
        %p234 = pneg %p103
      $region22: #{_lambda_.22} parent=11 // pred_check_branch
        %236 = sbr.rel (%p234) target = $region24
      $region23: #{_lambda_.22} parent=11 // pred_region
        _
      $region24: #{_lambda_.22} parent=11 // pred_fallthru
        _
      // Predicated region
      $region25: #{_lambda_.22} parent=11 // pred_check
        %p237 = pneg %p124
      $region26: #{_lambda_.22} parent=11 // pred_check_branch
        %239 = sbr.rel (%p237) target = $region28
      $region27: #{_lambda_.22} parent=11 // pred_region
        _
      $region28: #{_lambda_.22} parent=11 // pred_fallthru
        _
      // Predicated region
      $region29: #{_lambda_.22} parent=11 // pred_check
        %p240 = pneg %p145
      $region30: #{_lambda_.22} parent=11 // pred_check_branch
        %242 = sbr.rel (%p240) target = $region32
      $region31: #{_lambda_.22} parent=11 // pred_region
        _
      $region32: #{_lambda_.22} parent=11 // pred_fallthru
        _
      // Predicated region
      $region33: #{_lambda_.22} parent=11 // pred_check
        %p243 = pneg %p166
      $region34: #{_lambda_.22} parent=11 // pred_check_branch
        %245 = sbr.rel (%p243) target = $region36
      $region35: #{_lambda_.22} parent=11 // pred_region
        _
      $region36: #{_lambda_.22} parent=11 // pred_fallthru
        _
      // Predicated region
      $region37: #{_lambda_.22} parent=11 // pred_check
        %p246 = pneg %p187
      $region38: #{_lambda_.22} parent=11 // pred_check_branch
        %248 = sbr.rel (%p246) target = $region40
      $region39: #{_lambda_.22} parent=11 // pred_region
        _
      $region40: #{_lambda_.22} parent=11 // pred_fallthru
        _
    $region12: #{_lambda_.22} parent=5 // pred_fallthru
      _
    %p249 = scmp.lt.s32.totalorder %s14, 2
    // Predicated region
    $region41: #{_lambda_.22} parent=5 // pred_check
      %p250 = pneg %p249
    $region42: #{_lambda_.22} parent=5 // pred_check_branch
      %252 = sbr.rel (%p250) target = $region44
    $region43: #{_lambda_.22} parent=5 // pred_region
      // Predicated region
      $region45: #{_lambda_.22} parent=43 // pred_check
        %p253 = pneg %p34
      $region46: #{_lambda_.22} parent=43 // pred_check_branch
        %255 = sbr.rel (%p253) target = $region48
      $region47: #{_lambda_.22} parent=43 // pred_region
        %p256 = scmp.lt.s32.totalorder %s14, 1
        %s257 = scalar_select %p256, %s14, 1
        %s258 = smul.addr %s257, 4
        %s259 = smul.addr %s258, 8
        %s260 = scalar_lea.vmem %s0, %s259
      $region48: #{_lambda_.22} parent=43 // pred_fallthru
        _
    $region44: #{_lambda_.22} parent=5 // pred_fallthru
      _
    %p261 = scmp.le.s32.totalorder 1, %s14
    %p262 = scmp.lt.s32.totalorder %s14, 3
    %p263 = pnand %p261, %p262
    %p264 = pneg %p263
    // Predicated region
    $region49: #{_lambda_.22} parent=5 // pred_check
      _
    $region50: #{_lambda_.22} parent=5 // pred_check_branch
      %266 = sbr.rel (%p263) target = $region52
    $region51: #{_lambda_.22} parent=5 // pred_region
      %s267 = ssub.s32 %s14, 1
      %p268 = scmp.lt.s32.totalorder %s19, 1
      %s269 = scalar_select %p268, %s19, 1
      %s270 = smul.addr %s269, 4
      %s271 = smul.addr %s270, 8
      %s272 = scalar_lea.vmem %s0, %s271
      %p273 = pneg %p40
      %p274 = pneg %p37
      %p275 = pneg %p61
      %p276 = pneg %p58
      %p277 = pneg %p82
      %p278 = pneg %p79
      %p279 = pneg %p103
      %p280 = pneg %p100
      %p281 = pneg %p124
      %p282 = pneg %p121
      %p283 = pneg %p145
      %p284 = pneg %p142
      %p285 = pneg %p166
      %p286 = pneg %p163
      %p287 = pneg %p187
      %p288 = pneg %p184
      %p289 = pneg %p213
      %p290 = pneg %p210
      %p291 = scmp.lt.s32.totalorder %s19, 1
      %s292 = scalar_select %p291, %s19, 1
      %s293 = smul.addr %s292, 4
      %s294 = smul.addr %s293, 8
      %s295 = scalar_lea.vmem %s8, %s294
      %p296 = scmp.lt.s32.totalorder %s19, 1
      %s297 = scalar_select %p296, %s19, 1
      %s298 = smul.addr %s297, 4
      %s299 = smul.addr %s298, 8
      %s300 = scalar_lea.vmem %s0, %s299
      %p301 = scmp.lt.s32.totalorder %s19, 1
      %s302 = scalar_select %p301, %s19, 1
      %s303 = smul.addr %s302, 4
      %s304 = smul.addr %s303, 8
      %s305 = scalar_lea.vmem %s8, %s304
      %v307 = vld [vmem:[%s300] sm:$0xff]
      %v308 = vld [vmem:[%s300 + $0x8] sm:$0xff]
      %v309 = vld [vmem:[%s300 + $0x10] sm:$0xff]
      %v310 = vld [vmem:[%s300 + $0x18] sm:$0xff]
      %v311 = vld [vmem:[%s1] sm:$0xff]
      %v312 = vld [vmem:[%s1 + $0x8] sm:$0xff]
      %v313 = vld [vmem:[%s1 + $0x10] sm:$0xff]
      %v314 = vld [vmem:[%s1 + $0x18] sm:$0xff]
      %v315 = vld [vmem:[%s2] sm:$0xff]
      %v316 = vld [vmem:[%s2 + $0x8] sm:$0xff]
      %v317 = vld [vmem:[%s2 + $0x10] sm:$0xff]
      %v318 = vld [vmem:[%s2 + $0x18] sm:$0xff]
      %v319 = vld [vmem:[%s3] sm:$0xff]
      %v320 = vld [vmem:[%s3 + $0x8] sm:$0xff]
      %v321 = vld [vmem:[%s3 + $0x10] sm:$0xff]
      %v322 = vld [vmem:[%s3 + $0x18] sm:$0xff]
      %vm323 = vcmask 261120
      %v325 = vsel %vm323, %v311, 0
      %v328 = vsel %vm323, %v312, 0
      %v331 = vsel %vm323, %v313, 0
      %v334 = vsel %vm323, %v314, 0
      %336 = vmatpush.msra.mxu0 0.0
      %337 = vmatpush.msra.mxu0 0.0
      %338 = vmatpush.msra.mxu0 0.0
      %339 = vmatpush.msra.mxu0 0.0
      %340 = vmatpush.msra.mxu0 0.0
      %341 = vmatpush.msra.mxu0 0.0
      %342 = vmatpush.msra.mxu0 0.0
      %343 = vmatpush.msra.mxu0 0.0
      %344 = vmatpush.msra.mxu0 0.0
      %345 = vmatpush.msra.mxu0 0.0
      %346 = vmatpush.msra.mxu0 0.0
      %347 = vmatpush.msra.mxu0 0.0
      %348 = vmatpush.msra.mxu0 %v310
      %349 = vmatpush.msra.mxu0 %v309
      %350 = vmatpush.msra.mxu0 %v308
      %351 = vmatpush.msra.mxu0 %v307
      %352 = vmatmul.f32.gmra.mxu0 %v325
      %v353 = vpop.f32.mrf.mxu0
      %v354 = vadd.f32 0.0, %v353
      %355 = vmatmul.f32.gmra.mxu0 %v328
      %v356 = vpop.f32.mrf.mxu0
      %v357 = vadd.f32 0.0, %v356
      %358 = vmatmul.f32.gmra.mxu0 %v331
      %v359 = vpop.f32.mrf.mxu0
      %v360 = vadd.f32 0.0, %v359
      %361 = vmatmul.f32.gmra.mxu0 %v334
      %v362 = vpop.f32.mrf.mxu0
      %v363 = vadd.f32 0.0, %v362
      %364 = vdwg.mxu0
      %vm365 = vcmask 31744
      %v366 = vsel %vm365, %v354, 0.0
      %367 = vadd.xlane.f32.xlu0 %v366
      %v368 = vpop.xlane.xlu0 %367
      %v369 = vsel %vm365, %v357, 0.0
      %370 = vadd.xlane.f32.xlu0 %v369
      %v371 = vpop.xlane.xlu0 %370
      %v372 = vsel %vm365, %v360, 0.0
      %373 = vadd.xlane.f32.xlu0 %v372
      %v374 = vpop.xlane.xlu0 %373
      %v375 = vsel %vm365, %v363, 0.0
      %376 = vadd.xlane.f32.xlu0 %v375
      %v377 = vpop.xlane.xlu0 %376
      %v378 = vmul.f32 %v307, %v307
      %v379 = vmul.f32 %v308, %v308
      %v380 = vmul.f32 %v309, %v309
      %v381 = vmul.f32 %v310, %v310
      %382 = vmatpush.msra.mxu0 0.0
      %383 = vmatpush.msra.mxu0 0.0
      %384 = vmatpush.msra.mxu0 0.0
      %385 = vmatpush.msra.mxu0 0.0
      %386 = vmatpush.msra.mxu0 0.0
      %387 = vmatpush.msra.mxu0 0.0
      %388 = vmatpush.msra.mxu0 0.0
      %389 = vmatpush.msra.mxu0 0.0
      %390 = vmatpush.msra.mxu0 0.0
      %391 = vmatpush.msra.mxu0 0.0
      %392 = vmatpush.msra.mxu0 0.0
      %393 = vmatpush.msra.mxu0 0.0
      %394 = vmatpush.msra.mxu0 %v381
      %395 = vmatpush.msra.mxu0 %v380
      %396 = vmatpush.msra.mxu0 %v379
      %397 = vmatpush.msra.mxu0 %v378
      %398 = vmatmul.f32.gmra.mxu0 %v325
      %v399 = vpop.f32.mrf.mxu0
      %v400 = vadd.f32 0.0, %v399
      %401 = vmatmul.f32.gmra.mxu0 %v328
      %v402 = vpop.f32.mrf.mxu0
      %v403 = vadd.f32 0.0, %v402
      %404 = vmatmul.f32.gmra.mxu0 %v331
      %v405 = vpop.f32.mrf.mxu0
      %v406 = vadd.f32 0.0, %v405
      %407 = vmatmul.f32.gmra.mxu0 %v334
      %v408 = vpop.f32.mrf.mxu0
      %v409 = vadd.f32 0.0, %v408
      %410 = vdwg.mxu0
      %v411 = vsel %vm365, %v400, 0.0
      %412 = vadd.xlane.f32.xlu0 %v411
      %v413 = vpop.xlane.xlu0 %412
      %v414 = vsel %vm365, %v403, 0.0
      %415 = vadd.xlane.f32.xlu0 %v414
      %v416 = vpop.xlane.xlu0 %415
      %v417 = vsel %vm365, %v406, 0.0
      %418 = vadd.xlane.f32.xlu0 %v417
      %v419 = vpop.xlane.xlu0 %418
      %v420 = vsel %vm365, %v409, 0.0
      %421 = vadd.xlane.f32.xlu0 %v420
      %v422 = vpop.xlane.xlu0 %421
      %v423 = vmul.f32 %v368, %v368
      %v424 = vmul.f32 %v371, %v371
      %v425 = vmul.f32 %v374, %v374
      %v426 = vmul.f32 %v377, %v377
      %v427 = vsub.f32 %v413, %v423
      %v428 = vsub.f32 %v416, %v424
      %v429 = vsub.f32 %v419, %v425
      %v430 = vsub.f32 %v422, %v426
      %v431 = vmax.f32 %v427, 0.0
      %v432 = vmax.f32 %v428, 0.0
      %v433 = vmax.f32 %v429, 0.0
      %v434 = vmax.f32 %v430, 0.0
      %v435 = vsub.f32 %v307, %v368
      %v436 = vsub.f32 %v308, %v371
      %v437 = vsub.f32 %v309, %v374
      %v438 = vsub.f32 %v310, %v377
      %v439 = vadd.f32 %v431, 1e-05
      %v440 = vadd.f32 %v432, 1e-05
      %v441 = vadd.f32 %v433, 1e-05
      %v442 = vadd.f32 %v434, 1e-05
      %v443 = vrsqrt.pop %v439
      %v444 = vmul.f32 %v443, %v439
      %v445 = vmul.f32 %v444, %v443
      %v446 = vmul.f32 0.5, %v445
      %v447 = vsub.f32 1.5, %v446
      %v448 = vmul.f32 %v443, %v447
      %vm449 = vweird.f32 %v439
      %vm450 = vweird.f32 %v443
      %vm451 = vmor %vm449, %vm450
      %v452 = vsel %vm451, %v443, %v448
      %v453 = vrsqrt.pop %v440
      %v454 = vmul.f32 %v453, %v440
      %v455 = vmul.f32 %v454, %v453
      %v456 = vmul.f32 0.5, %v455
      %v457 = vsub.f32 1.5, %v456
      %v458 = vmul.f32 %v453, %v457
      %vm459 = vweird.f32 %v440
      %vm460 = vweird.f32 %v453
      %vm461 = vmor %vm459, %vm460
      %v462 = vsel %vm461, %v453, %v458
      %v463 = vrsqrt.pop %v441
      %v464 = vmul.f32 %v463, %v441
      %v465 = vmul.f32 %v464, %v463
      %v466 = vmul.f32 0.5, %v465
      %v467 = vsub.f32 1.5, %v466
      %v468 = vmul.f32 %v463, %v467
      %vm469 = vweird.f32 %v441
      %vm470 = vweird.f32 %v463
      %vm471 = vmor %vm469, %vm470
      %v472 = vsel %vm471, %v463, %v468
      %v473 = vrsqrt.pop %v442
      %v474 = vmul.f32 %v473, %v442
      %v475 = vmul.f32 %v474, %v473
      %v476 = vmul.f32 0.5, %v475
      %v477 = vsub.f32 1.5, %v476
      %v478 = vmul.f32 %v473, %v477
      %vm479 = vweird.f32 %v442
      %vm480 = vweird.f32 %v473
      %vm481 = vmor %vm479, %vm480
      %v482 = vsel %vm481, %v473, %v478
      %v483 = vmul.f32 %v435, %v452
      %v484 = vmul.f32 %v436, %v462
      %v485 = vmul.f32 %v437, %v472
      %v486 = vmul.f32 %v438, %v482
      %488 = vset.pattern.permute.xlu0 0
      %489 = vperm.xlu0 %488, %v315
      %v490 = vpop.permute.xlu0 %489
      %493 = vset.pattern.permute.xlu0 0
      %494 = vperm.xlu0 %493, %v316
      %v495 = vpop.permute.xlu0 %494
      %498 = vset.pattern.permute.xlu0 0
      %499 = vperm.xlu0 %498, %v317
      %v500 = vpop.permute.xlu0 %499
      %503 = vset.pattern.permute.xlu0 0
      %504 = vperm.xlu0 %503, %v318
      %v505 = vpop.permute.xlu0 %504
      %v507 = vmul.f32 %v483, %v490
      %v508 = vmul.f32 %v484, %v495
      %v509 = vmul.f32 %v485, %v500
      %v510 = vmul.f32 %v486, %v505
      %512 = vset.pattern.permute.xlu0 0
      %513 = vperm.xlu0 %512, %v319
      %v514 = vpop.permute.xlu0 %513
      %517 = vset.pattern.permute.xlu0 0
      %518 = vperm.xlu0 %517, %v320
      %v519 = vpop.permute.xlu0 %518
      %522 = vset.pattern.permute.xlu0 0
      %523 = vperm.xlu0 %522, %v321
      %v524 = vpop.permute.xlu0 %523
      %527 = vset.pattern.permute.xlu0 0
      %528 = vperm.xlu0 %527, %v322
      %v529 = vpop.permute.xlu0 %528
      %v531 = vadd.f32 %v507, %v514
      %v532 = vadd.f32 %v508, %v519
      %v533 = vadd.f32 %v509, %v524
      %v534 = vadd.f32 %v510, %v529
      %v535 = vld [vmem:[%s4] sm:$0xf]
      %v536 = vld [vmem:[%s4 + $0x4] sm:$0xf]
      %v537 = vld [vmem:[%s4 + $0x8] sm:$0xf]
      %v538 = vld [vmem:[%s4 + $0xc] sm:$0xf]
      %v539 = vld [vmem:[%s4 + $0x10] sm:$0xf]
      %v540 = vld [vmem:[%s4 + $0x14] sm:$0xf]
      %v541 = vld [vmem:[%s4 + $0x18] sm:$0xf]
      %v542 = vld [vmem:[%s4 + $0x1c] sm:$0xf]
      %v543 = vld [vmem:[%s4 + $0x20] sm:$0xf]
      %v544 = vld [vmem:[%s4 + $0x24] sm:$0xf]
      %v545 = vld [vmem:[%s4 + $0x28] sm:$0xf]
      %v546 = vld [vmem:[%s4 + $0x2c] sm:$0xf]
      %v547 = vpack.c.bf16 %v532, %v531
      %v548 = vpack.c.bf16 %v534, %v533
      %v549 = vld [vmem:[%s5] sm:$0xff]
      %v550 = vld [vmem:[%s5 + $0x8] sm:$0xff]
      %v551 = vld [vmem:[%s5 + $0x10] sm:$0xff]
      %v552 = vld [vmem:[%s5 + $0x18] sm:$0xff]
      %v553 = vld [vmem:[%s5 + $0x20] sm:$0xff]
      %v554 = vld [vmem:[%s5 + $0x28] sm:$0xff]
      %v555 = vld [vmem:[%s5 + $0x30] sm:$0xff]
      %v556 = vld [vmem:[%s5 + $0x38] sm:$0xff]
      %v557 = vld [vmem:[%s5 + $0x40] sm:$0xff]
      %v558 = vld [vmem:[%s5 + $0x48] sm:$0xff]
      %v559 = vld [vmem:[%s5 + $0x50] sm:$0xff]
      %v560 = vld [vmem:[%s5 + $0x58] sm:$0xff]
      %562 = vset.pattern.permute.xlu0 0
      %563 = vperm.xlu0 %562, %v549
      %v564 = vpop.permute.xlu0 %563
      %567 = vset.pattern.permute.xlu0 0
      %568 = vperm.xlu0 %567, %v550
      %v569 = vpop.permute.xlu0 %568
      %572 = vset.pattern.permute.xlu0 0
      %573 = vperm.xlu0 %572, %v551
      %v574 = vpop.permute.xlu0 %573
      %577 = vset.pattern.permute.xlu0 0
      %578 = vperm.xlu0 %577, %v552
      %v579 = vpop.permute.xlu0 %578
      %582 = vset.pattern.permute.xlu0 0
      %583 = vperm.xlu0 %582, %v553
      %v584 = vpop.permute.xlu0 %583
      %587 = vset.pattern.permute.xlu0 0
      %588 = vperm.xlu0 %587, %v554
      %v589 = vpop.permute.xlu0 %588
      %592 = vset.pattern.permute.xlu0 0
      %593 = vperm.xlu0 %592, %v555
      %v594 = vpop.permute.xlu0 %593
      %597 = vset.pattern.permute.xlu0 0
      %598 = vperm.xlu0 %597, %v556
      %v599 = vpop.permute.xlu0 %598
      %602 = vset.pattern.permute.xlu0 0
      %603 = vperm.xlu0 %602, %v557
      %v604 = vpop.permute.xlu0 %603
      %607 = vset.pattern.permute.xlu0 0
      %608 = vperm.xlu0 %607, %v558
      %v609 = vpop.permute.xlu0 %608
      %612 = vset.pattern.permute.xlu0 0
      %613 = vperm.xlu0 %612, %v559
      %v614 = vpop.permute.xlu0 %613
      %617 = vset.pattern.permute.xlu0 0
      %618 = vperm.xlu0 %617, %v560
      %v619 = vpop.permute.xlu0 %618
      %v633 = vunpack.c.l.b16 %v535
      %v634 = vunpack.c.l.b16 %v536
      %v635 = vunpack.c.l.b16 %v537
      %v636 = vunpack.c.l.b16 %v538
      %v637 = vunpack.c.l.b16 %v539
      %v638 = vunpack.c.l.b16 %v540
      %v639 = vunpack.c.l.b16 %v541
      %v640 = vunpack.c.l.b16 %v542
      %v641 = vunpack.c.l.b16 %v543
      %v642 = vunpack.c.l.b16 %v544
      %v643 = vunpack.c.l.b16 %v545
      %v644 = vunpack.c.l.b16 %v546
      %v645 = vpack.c.b16 %v634, %v633
      %v646 = vpack.c.b16 %v636, %v635
      %v647 = vpack.c.b16 %v638, %v637
      %v648 = vpack.c.b16 %v640, %v639
      %v649 = vpack.c.b16 %v642, %v641
      %v650 = vpack.c.b16 %v644, %v643
      %v652 = vsel %vm323, %v645, 0
      %v655 = vsel %vm323, %v646, 0
      %v658 = vsel %vm323, %v647, 0
      %v661 = vsel %vm323, %v648, 0
      %v664 = vsel %vm323, %v649, 0
      %v667 = vsel %vm323, %v650, 0
      %669 = vmatpush.bf16.msra.mxu0 0
      %670 = vmatpush.bf16.msra.mxu0 0
      %671 = vmatpush.bf16.msra.mxu0 0
      %672 = vmatpush.bf16.msra.mxu0 0
      %673 = vmatpush.bf16.msra.mxu0 0
      %674 = vmatpush.bf16.msra.mxu0 0
      %675 = vmatpush.bf16.msra.mxu0 %v548
      %676 = vmatpush.bf16.msra.mxu0 %v547
      %677 = vmatmul.bf16.gmra.mxu0 %v652
      %v678 = vpop.f32.mrf.mxu0
      %v679 = vadd.f32 %v564, %v678
      %v680 = vpop.f32.mrf.mxu0
      %v681 = vadd.f32 %v569, %v680
      %682 = vmatmul.bf16.gmra.mxu0 %v655
      %v683 = vpop.f32.mrf.mxu0
      %v684 = vadd.f32 %v574, %v683
      %v685 = vpop.f32.mrf.mxu0
      %v686 = vadd.f32 %v579, %v685
      %687 = vmatmul.bf16.gmra.mxu0 %v658
      %v688 = vpop.f32.mrf.mxu0
      %v689 = vadd.f32 %v584, %v688
      %v690 = vpop.f32.mrf.mxu0
      %v691 = vadd.f32 %v589, %v690
      %692 = vmatmul.bf16.gmra.mxu0 %v661
      %v693 = vpop.f32.mrf.mxu0
      %v694 = vadd.f32 %v594, %v693
      %v695 = vpop.f32.mrf.mxu0
      %v696 = vadd.f32 %v599, %v695
      %697 = vmatmul.bf16.gmra.mxu0 %v664
      %v698 = vpop.f32.mrf.mxu0
      %v699 = vadd.f32 %v604, %v698
      %v700 = vpop.f32.mrf.mxu0
      %v701 = vadd.f32 %v609, %v700
      %702 = vmatmul.bf16.gmra.mxu0 %v667
      %v703 = vpop.f32.mrf.mxu0
      %v704 = vadd.f32 %v614, %v703
      %v705 = vpop.f32.mrf.mxu0
      %v706 = vadd.f32 %v619, %v705
      %707 = vdwg.mxu0
      %v708 = vmul.f32 %v679, 0.59460354
      %v709 = vmul.f32 %v681, 0.59460354
      %v710 = vpack.c.bf16 %v708, %v708
      %v711 = vpack.c.bf16 %v709, %v709
      %712 = vxpose.xlu0.c.b16.start [1/8] %v710, 128
      %713 = vxpose.xlu0.c.b16.cont [2/8] 0, 128
      %714 = vxpose.xlu0.c.b16.cont [3/8] 0, 128
      %715 = vxpose.xlu0.c.b16.cont [4/8] 0, 128
      %716 = vxpose.xlu0.c.b16.cont [5/8] 0, 128
      %717 = vxpose.xlu0.c.b16.cont [6/8] 0, 128
      %718 = vxpose.xlu0.c.b16.cont [7/8] 0, 128
      %719 = vxpose.xlu0.c.b16.end [8/8] 0, 128
      %v720 = vpop.trf.xlu0
      %v721 = vpop.trf.xlu0
      %v722 = vpop.trf.xlu0
      %v723 = vpop.trf.xlu0
      %v724 = vpop.trf.xlu0
      %v725 = vpop.trf.xlu0
      %v726 = vpop.trf.xlu0
      %v727 = vpop.trf.xlu0
      %vm728 = vcmask 64512
      %v730 = vsel %vm728, %v720, 0
      %vm732 = vcmask 1043456
      %v734 = vsel %vm732, %v711, 0
      %736 = vmatpush.bf16.msra.mxu0 0
      %737 = vmatpush.bf16.msra.mxu0 0
      %738 = vmatpush.bf16.msra.mxu0 0
      %739 = vmatpush.bf16.msra.mxu0 0
      %740 = vmatpush.bf16.msra.mxu0 0
      %741 = vmatpush.bf16.msra.mxu0 0
      %742 = vmatpush.bf16.msra.mxu0 0
      %743 = vmatpush.bf16.msra.mxu0 %v734
      %744 = vmatmul.bf16.gmra.mxu0 %v730
      %v745 = vpop.f32.mrf.mxu0
      %v746 = vadd.f32 0.0, %v745
      %v747 = vpop.f32.mrf.mxu0
      %748 = vdwg.mxu0
      %vm749 = vcmask 27648
      %v750 = vsel %vm749, %v746, -inf
      %751 = vmax.xlane.f32.xlu0 %v750
      %v752 = vpop.xlane.xlu0 %751
      %v753 = vsub.f32 %v746, %v752
      %v754 = vmul.f32 %v753, 1.442695
      %v755 = vpow.pop %v754
      %v756 = vsel %vm749, %v755, 0.0
      %757 = vadd.xlane.f32.xlu0 %v756
      %v758 = vpop.xlane.xlu0 %757
      %v759 = vrcp.pop %v758
      %v760 = vmul.f32 %v755, %v759
      %v761 = vpack.c.bf16 %v684, %v684
      %v762 = vpack.c.bf16 %v760, %v760
      %v764 = vsel %vm365, %v761, 0
      %v767 = vsel %vm365, %v762, 0
      %769 = vmatpush.bf16.xpose.msra.mxu0 0
      %770 = vmatpush.bf16.xpose.msra.mxu0 0
      %771 = vmatpush.bf16.xpose.msra.mxu0 0
      %772 = vmatpush.bf16.xpose.msra.mxu0 0
      %773 = vmatpush.bf16.xpose.msra.mxu0 0
      %774 = vmatpush.bf16.xpose.msra.mxu0 0
      %775 = vmatpush.bf16.xpose.msra.mxu0 0
      %776 = vmatpush.bf16.xpose.msra.mxu0 %v767
      %777 = vmatmul.bf16.gmra.mxu0 %v764
      %v778 = vpop.f32.mrf.mxu0
      %v779 = vadd.f32 0.0, %v778
      %v780 = vpop.f32.mrf.mxu0
      %781 = vdwg.mxu0
      %782 = vst.msk [vmem:[#allocation2] sm:$0xff] %vm365, %v779
      %v783 = vmul.f32 %v686, 0.59460354
      %v784 = vmul.f32 %v689, 0.59460354
      %v785 = vpack.c.bf16 %v783, %v783
      %v786 = vpack.c.bf16 %v784, %v784
      %787 = vxpose.xlu0.c.b16.start [1/8] %v785, 128
      %788 = vxpose.xlu0.c.b16.cont [2/8] 0, 128
      %789 = vxpose.xlu0.c.b16.cont [3/8] 0, 128
      %790 = vxpose.xlu0.c.b16.cont [4/8] 0, 128
      %791 = vxpose.xlu0.c.b16.cont [5/8] 0, 128
      %792 = vxpose.xlu0.c.b16.cont [6/8] 0, 128
      %793 = vxpose.xlu0.c.b16.cont [7/8] 0, 128
      %794 = vxpose.xlu0.c.b16.end [8/8] 0, 128
      %v795 = vpop.trf.xlu0
      %v796 = vpop.trf.xlu0
      %v797 = vpop.trf.xlu0
      %v798 = vpop.trf.xlu0
      %v799 = vpop.trf.xlu0
      %v800 = vpop.trf.xlu0
      %v801 = vpop.trf.xlu0
      %v802 = vpop.trf.xlu0
      %v804 = vsel %vm728, %v795, 0
      %v807 = vsel %vm732, %v786, 0
      %809 = vmatpush.bf16.msra.mxu0 0
      %810 = vmatpush.bf16.msra.mxu0 0
      %811 = vmatpush.bf16.msra.mxu0 0
      %812 = vmatpush.bf16.msra.mxu0 0
      %813 = vmatpush.bf16.msra.mxu0 0
      %814 = vmatpush.bf16.msra.mxu0 0
      %815 = vmatpush.bf16.msra.mxu0 0
      %816 = vmatpush.bf16.msra.mxu0 %v807
      %817 = vmatmul.bf16.gmra.mxu0 %v804
      %v818 = vpop.f32.mrf.mxu0
      %v819 = vadd.f32 0.0, %v818
      %v820 = vpop.f32.mrf.mxu0
      %821 = vdwg.mxu0
      %v822 = vsel %vm749, %v819, -inf
      %823 = vmax.xlane.f32.xlu0 %v822
      %v824 = vpop.xlane.xlu0 %823
      %v825 = vsub.f32 %v819, %v824
      %v826 = vmul.f32 %v825, 1.442695
      %v827 = vpow.pop %v826
      %v828 = vsel %vm749, %v827, 0.0
      %829 = vadd.xlane.f32.xlu0 %v828
      %v830 = vpop.xlane.xlu0 %829
      %v831 = vrcp.pop %v830
      %v832 = vmul.f32 %v827, %v831
      %v833 = vpack.c.bf16 %v691, %v691
      %v834 = vpack.c.bf16 %v832, %v832
      %v836 = vsel %vm365, %v833, 0
      %v839 = vsel %vm365, %v834, 0
      %841 = vmatpush.bf16.xpose.msra.mxu0 0
      %842 = vmatpush.bf16.xpose.msra.mxu0 0
      %843 = vmatpush.bf16.xpose.msra.mxu0 0
      %844 = vmatpush.bf16.xpose.msra.mxu0 0
      %845 = vmatpush.bf16.xpose.msra.mxu0 0
      %846 = vmatpush.bf16.xpose.msra.mxu0 0
      %847 = vmatpush.bf16.xpose.msra.mxu0 0
      %848 = vmatpush.bf16.xpose.msra.mxu0 %v839
      %849 = vmatmul.bf16.gmra.mxu0 %v836
      %v850 = vpop.f32.mrf.mxu0
      %v851 = vadd.f32 0.0, %v850
      %v852 = vpop.f32.mrf.mxu0
      %853 = vdwg.mxu0
      %854 = vst.msk [vmem:[#allocation2 + $0x8] sm:$0xff] %vm365, %v851
      %v855 = vmul.f32 %v694, 0.59460354
      %v856 = vmul.f32 %v696, 0.59460354
      %v857 = vpack.c.bf16 %v855, %v855
      %v858 = vpack.c.bf16 %v856, %v856
      %859 = vxpose.xlu0.c.b16.start [1/8] %v857, 128
      %860 = vxpose.xlu0.c.b16.cont [2/8] 0, 128
      %861 = vxpose.xlu0.c.b16.cont [3/8] 0, 128
      %862 = vxpose.xlu0.c.b16.cont [4/8] 0, 128
      %863 = vxpose.xlu0.c.b16.cont [5/8] 0, 128
      %864 = vxpose.xlu0.c.b16.cont [6/8] 0, 128
      %865 = vxpose.xlu0.c.b16.cont [7/8] 0, 128
      %866 = vxpose.xlu0.c.b16.end [8/8] 0, 128
      %v867 = vpop.trf.xlu0
      %v868 = vpop.trf.xlu0
      %v869 = vpop.trf.xlu0
      %v870 = vpop.trf.xlu0
      %v871 = vpop.trf.xlu0
      %v872 = vpop.trf.xlu0
      %v873 = vpop.trf.xlu0
      %v874 = vpop.trf.xlu0
      %v876 = vsel %vm728, %v867, 0
      %v879 = vsel %vm732, %v858, 0
      %881 = vmatpush.bf16.msra.mxu0 0
      %882 = vmatpush.bf16.msra.mxu0 0
      %883 = vmatpush.bf16.msra.mxu0 0
      %884 = vmatpush.bf16.msra.mxu0 0
      %885 = vmatpush.bf16.msra.mxu0 0
      %886 = vmatpush.bf16.msra.mxu0 0
      %887 = vmatpush.bf16.msra.mxu0 0
      %888 = vmatpush.bf16.msra.mxu0 %v879
      %889 = vmatmul.bf16.gmra.mxu0 %v876
      %v890 = vpop.f32.mrf.mxu0
      %v891 = vadd.f32 0.0, %v890
      %v892 = vpop.f32.mrf.mxu0
      %893 = vdwg.mxu0
      %v894 = vsel %vm749, %v891, -inf
      %895 = vmax.xlane.f32.xlu0 %v894
      %v896 = vpop.xlane.xlu0 %895
      %v897 = vsub.f32 %v891, %v896
      %v898 = vmul.f32 %v897, 1.442695
      %v899 = vpow.pop %v898
      %v900 = vsel %vm749, %v899, 0.0
      %901 = vadd.xlane.f32.xlu0 %v900
      %v902 = vpop.xlane.xlu0 %901
      %v903 = vrcp.pop %v902
      %v904 = vmul.f32 %v899, %v903
      %v905 = vpack.c.bf16 %v699, %v699
      %v906 = vpack.c.bf16 %v904, %v904
      %v908 = vsel %vm365, %v905, 0
      %v911 = vsel %vm365, %v906, 0
      %913 = vmatpush.bf16.xpose.msra.mxu0 0
      %914 = vmatpush.bf16.xpose.msra.mxu0 0
      %915 = vmatpush.bf16.xpose.msra.mxu0 0
      %916 = vmatpush.bf16.xpose.msra.mxu0 0
      %917 = vmatpush.bf16.xpose.msra.mxu0 0
      %918 = vmatpush.bf16.xpose.msra.mxu0 0
      %919 = vmatpush.bf16.xpose.msra.mxu0 0
      %920 = vmatpush.bf16.xpose.msra.mxu0 %v911
      %921 = vmatmul.bf16.gmra.mxu0 %v908
      %v922 = vpop.f32.mrf.mxu0
      %v923 = vadd.f32 0.0, %v922
      %v924 = vpop.f32.mrf.mxu0
      %925 = vdwg.mxu0
      %926 = vst.msk [vmem:[#allocation2 + $0x10] sm:$0xff] %vm365, %v923
      %v927 = vmul.f32 %v701, 0.59460354
      %v928 = vmul.f32 %v704, 0.59460354
      %v929 = vpack.c.bf16 %v927, %v927
      %v930 = vpack.c.bf16 %v928, %v928
      %931 = vxpose.xlu0.c.b16.start [1/8] %v929, 128
      %932 = vxpose.xlu0.c.b16.cont [2/8] 0, 128
      %933 = vxpose.xlu0.c.b16.cont [3/8] 0, 128
      %934 = vxpose.xlu0.c.b16.cont [4/8] 0, 128
      %935 = vxpose.xlu0.c.b16.cont [5/8] 0, 128
      %936 = vxpose.xlu0.c.b16.cont [6/8] 0, 128
      %937 = vxpose.xlu0.c.b16.cont [7/8] 0, 128
      %938 = vxpose.xlu0.c.b16.end [8/8] 0, 128
      %v939 = vpop.trf.xlu0
      %v940 = vpop.trf.xlu0
      %v941 = vpop.trf.xlu0
      %v942 = vpop.trf.xlu0
      %v943 = vpop.trf.xlu0
      %v944 = vpop.trf.xlu0
      %v945 = vpop.trf.xlu0
      %v946 = vpop.trf.xlu0
      %v948 = vsel %vm728, %v939, 0
      %v951 = vsel %vm732, %v930, 0
      %953 = vmatpush.bf16.msra.mxu0 0
      %954 = vmatpush.bf16.msra.mxu0 0
      %955 = vmatpush.bf16.msra.mxu0 0
      %956 = vmatpush.bf16.msra.mxu0 0
      %957 = vmatpush.bf16.msra.mxu0 0
      %958 = vmatpush.bf16.msra.mxu0 0
      %959 = vmatpush.bf16.msra.mxu0 0
      %960 = vmatpush.bf16.msra.mxu0 %v951
      %961 = vmatmul.bf16.gmra.mxu0 %v948
      %v962 = vpop.f32.mrf.mxu0
      %v963 = vadd.f32 0.0, %v962
      %v964 = vpop.f32.mrf.mxu0
      %965 = vdwg.mxu0
      %v966 = vsel %vm749, %v963, -inf
      %967 = vmax.xlane.f32.xlu0 %v966
      %v968 = vpop.xlane.xlu0 %967
      %v969 = vsub.f32 %v963, %v968
      %v970 = vmul.f32 %v969, 1.442695
      %v971 = vpow.pop %v970
      %v972 = vsel %vm749, %v971, 0.0
      %973 = vadd.xlane.f32.xlu0 %v972
      %v974 = vpop.xlane.xlu0 %973
      %v975 = vrcp.pop %v974
      %v976 = vmul.f32 %v971, %v975
      %v977 = vpack.c.bf16 %v706, %v706
      %v978 = vpack.c.bf16 %v976, %v976
      %v980 = vsel %vm365, %v977, 0
      %v983 = vsel %vm365, %v978, 0
      %985 = vmatpush.bf16.xpose.msra.mxu0 0
      %986 = vmatpush.bf16.xpose.msra.mxu0 0
      %987 = vmatpush.bf16.xpose.msra.mxu0 0
      %988 = vmatpush.bf16.xpose.msra.mxu0 0
      %989 = vmatpush.bf16.xpose.msra.mxu0 0
      %990 = vmatpush.bf16.xpose.msra.mxu0 0
      %991 = vmatpush.bf16.xpose.msra.mxu0 0
      %992 = vmatpush.bf16.xpose.msra.mxu0 %v983
      %993 = vmatmul.bf16.gmra.mxu0 %v980
      %v994 = vpop.f32.mrf.mxu0
      %v995 = vadd.f32 0.0, %v994
      %v996 = vpop.f32.mrf.mxu0
      %997 = vdwg.mxu0
      %998 = vst.msk [vmem:[#allocation2 + $0x18] sm:$0xff] %vm365, %v995
      %v999 = vld [vmem:[%s6] sm:$0xf]
      %v1000 = vld [vmem:[%s6 + $0x4] sm:$0xf]
      %v1001 = vld [vmem:[%s6 + $0x8] sm:$0xf]
      %v1002 = vld [vmem:[%s6 + $0xc] sm:$0xf]
      %v1003 = vld [vmem:[#allocation2] sm:$0xff]
      %v1004 = vld [vmem:[#allocation2 + $0x8] sm:$0xff]
      %v1005 = vld [vmem:[#allocation2 + $0x10] sm:$0xff]
      %v1006 = vld [vmem:[#allocation2 + $0x18] sm:$0xff]
      %v1007 = vpack.c.bf16 %v1004, %v1003
      %v1008 = vpack.c.bf16 %v1006, %v1005
      %v1009 = vld [vmem:[%s7] sm:$0xff]
      %v1010 = vld [vmem:[%s7 + $0x8] sm:$0xff]
      %v1011 = vld [vmem:[%s7 + $0x10] sm:$0xff]
      %v1012 = vld [vmem:[%s7 + $0x18] sm:$0xff]
      %1014 = vset.pattern.permute.xlu0 0
      %1015 = vperm.xlu0 %1014, %v1009
      %v1016 = vpop.permute.xlu0 %1015
      %1019 = vset.pattern.permute.xlu0 0
      %1020 = vperm.xlu0 %1019, %v1010
      %v1021 = vpop.permute.xlu0 %1020
      %1024 = vset.pattern.permute.xlu0 0
      %1025 = vperm.xlu0 %1024, %v1011
      %v1026 = vpop.permute.xlu0 %1025
      %1029 = vset.pattern.permute.xlu0 0
      %1030 = vperm.xlu0 %1029, %v1012
      %v1031 = vpop.permute.xlu0 %1030
      %v1037 = vunpack.c.l.b16 %v999
      %v1038 = vunpack.c.l.b16 %v1000
      %v1039 = vunpack.c.l.b16 %v1001
      %v1040 = vunpack.c.l.b16 %v1002
      %v1041 = vpack.c.b16 %v1038, %v1037
      %v1042 = vpack.c.b16 %v1040, %v1039
      %v1044 = vsel %vm323, %v1041, 0
      %v1047 = vsel %vm323, %v1042, 0
      %1049 = vmatpush.bf16.msra.mxu0 0
      %1050 = vmatpush.bf16.msra.mxu0 0
      %1051 = vmatpush.bf16.msra.mxu0 0
      %1052 = vmatpush.bf16.msra.mxu0 0
      %1053 = vmatpush.bf16.msra.mxu0 0
      %1054 = vmatpush.bf16.msra.mxu0 0
      %1055 = vmatpush.bf16.msra.mxu0 %v1008
      %1056 = vmatpush.bf16.msra.mxu0 %v1007
      %1057 = vmatmul.bf16.gmra.mxu0 %v1044
      %v1058 = vpop.f32.mrf.mxu0
      %v1059 = vadd.f32 %v1016, %v1058
      %v1060 = vpop.f32.mrf.mxu0
      %v1061 = vadd.f32 %v1021, %v1060
      %1062 = vmatmul.bf16.gmra.mxu0 %v1047
      %v1063 = vpop.f32.mrf.mxu0
      %v1064 = vadd.f32 %v1026, %v1063
      %v1065 = vpop.f32.mrf.mxu0
      %v1066 = vadd.f32 %v1031, %v1065
      %1067 = vdwg.mxu0
      %v1068 = vadd.f32 %v307, %v1059
      %v1069 = vadd.f32 %v308, %v1061
      %v1070 = vadd.f32 %v309, %v1064
      %v1071 = vadd.f32 %v310, %v1066
      %1072 = vst.msk [vmem:[%s305] sm:$0xff] %vm365, %v1068
      %1073 = vst.msk [vmem:[%s305 + $0x8] sm:$0xff] %vm365, %v1069
      %1074 = vst.msk [vmem:[%s305 + $0x10] sm:$0xff] %vm365, %v1070
      %1075 = vst.msk [vmem:[%s305 + $0x18] sm:$0xff] %vm365, %v1071
      %p1076 = scmp.lt.s32.totalorder %s19, 1
      %s1077 = scalar_select %p1076, %s19, 1
      %s1078 = smul.addr %s1077, 4
      %s1079 = smul.addr %s1078, 8
      %s1080 = scalar_lea.vmem %s8, %s1079
      // Predicated region
      $region53: #{_lambda_.22} parent=51 // pred_check
        %p1081 = pneg %p210
      $region54: #{_lambda_.22} parent=51 // pred_check_branch
        %1083 = sbr.rel (%p1081) target = $region56
      $region55: #{_lambda_.22} parent=51 // pred_region
        _
      $region56: #{_lambda_.22} parent=51 // pred_fallthru
        _
    $region52: #{_lambda_.22} parent=5 // pred_fallthru
      _
    %p1084 = scmp.le.s32.totalorder 2, %s14
    // Predicated region
    $region57: #{_lambda_.22} parent=5 // pred_check
      %p1085 = pneg %p1084
    $region58: #{_lambda_.22} parent=5 // pred_check_branch
      %1087 = sbr.rel (%p1085) target = $region60
    $region59: #{_lambda_.22} parent=5 // pred_region
      %s1088 = ssub.s32 %s14, 2
      // Predicated region
      $region61: #{_lambda_.22} parent=59 // pred_check
        %p1089 = pneg %p216
      $region62: #{_lambda_.22} parent=59 // pred_check_branch
        %1091 = sbr.rel (%p1089) target = $region64
      $region63: #{_lambda_.22} parent=59 // pred_region
        %p1092 = scmp.lt.s32.totalorder %s20, 1
        %s1093 = scalar_select %p1092, %s20, 1
        %s1094 = smul.addr %s1093, 4
        %s1095 = smul.addr %s1094, 8
        %s1096 = scalar_lea.vmem %s8, %s1095
      $region64: #{_lambda_.22} parent=59 // pred_fallthru
        _
    $region60: #{_lambda_.22} parent=5 // pred_fallthru
      _
  $region6: #{_lambda_.22} parent=0 // loop_footer
    %s18 = sadd.s32 1, %s14
  $region7: #{_lambda_.22} parent=0 // loop_footer_branch
    %13 = sbr.rel target = $region3
  $region8: #{_lambda_.22} parent=0 // loop_exit
    _

</llo_original>
